<compile_context>
chip_gen: v7x
topology: tpu7x:2x2x1
jax: 0.10.0
libtpu: 0.0.40
codegen_flags: <defaults>
</compile_context>

<pallas_src>
import functools

import jax
import jax.numpy as jnp
from jax import lax
from jax.experimental import pallas as pl
from jax.experimental.pallas import tpu as pltpu


def _round_up(n, m):
    return ((n + m - 1) // m) * m


def _cdiv(a, b):
    return -(-a // b)


def _gate_pack_cols(w, H, Hp):
    """(rows, 3H) with gates (r,z,n) stacked on columns -> (rows, 3*Hp),
    each gate zero-padded to Hp columns (lane-tile aligned slabs)."""
    parts = [jnp.pad(w[:, g * H:(g + 1) * H], ((0, 0), (0, Hp - H))) for g in range(3)]
    return jnp.concatenate(parts, axis=1)


def _tpu_vmem_capacity_bytes(default=64 * 1024 * 1024):
    """Best-effort VMEM capacity query; conservative (v7x-sized) fallback."""
    try:
        return int(pltpu.get_tpu_info().vmem_capacity_bytes)
    except Exception:
        return default


def _gru_fc_kernel(x_ref, wih_ref, whh_ref, bhn_ref, wfc_ref, bfc_ref,
                   out_ref, h_ref, gi_ref, *, hidden_pad, block_batch, chunk_t,
                   seq_len, unroll, ragged):
    """One grid step = one (batch block, time chunk).

    x_ref:   (Tc*Bb, Ie)   chunk rows ordered (t, b); last column is all-ones
    wih_ref: (Ie, 3*Hp)    input->gates weights (last row = folded bias)
    whh_ref: (Hp, 3*Hp)    hidden->gates weights, gate-slab packed
    bhn_ref: (1, Hp)       b_hh for the n gate (must stay inside r * (.))
    wfc_ref: (Hp, Op)      fc weight
    bfc_ref: (1, Op)       fc bias
    out_ref: (Bb, Op)
    h_ref:   VMEM (Bb, Hp) hidden state carried across time chunks
    gi_ref:  VMEM (Tc*Bb, 3*Hp) hoisted input->gates activations
    """
    Hp = hidden_pad
    Bb = block_batch
    Tc = chunk_t
    ci = pl.program_id(1)

    # h_0 = 0 at the start of each batch block's sequence.
    @pl.when(ci == 0)
    def _():
        h_ref[...] = jnp.zeros_like(h_ref)

    # ---- Hoisted input->gates GEMM: one big MXU matmul per chunk.  The bias
    # is folded in via the ones column of x / bias row of W_ih, so there is no
    # extra VPU pass over the (Tc*Bb, 3Hp) slab.
    gi_ref[...] = jnp.dot(
        x_ref[...], wih_ref[...], preferred_element_type=jnp.float32
    ).astype(gi_ref.dtype)

    mm_dtype = whh_ref.dtype
    # Hoisted once per chunk (don't re-broadcast inside the loop).
    b_hn = jnp.broadcast_to(bhn_ref[...], (Bb, Hp))

    def step(tt, h_prev):
        # Aligned, contiguous per-timestep slices (Bb is a multiple of 8;
        # gate slabs are 128-lane aligned).
        base = pl.multiple_of(tt * Bb, Bb)
        h_mm = h_prev.astype(mm_dtype)

        # Per-gate (Hp x Hp) matmuls in dependency order; each gate's gi slab
        # is loaded next to its use so only one gh/gi slab is live at a time.
        gh_r = jnp.dot(h_mm, whh_ref[:, 0:Hp],
                       preferred_element_type=jnp.float32)
        r = jax.nn.sigmoid(gi_ref[pl.ds(base, Bb), 0:Hp] + gh_r)

        gh_z = jnp.dot(h_mm, whh_ref[:, Hp:2 * Hp],
                       preferred_element_type=jnp.float32)
        z = jax.nn.sigmoid(gi_ref[pl.ds(base, Bb), Hp:2 * Hp] + gh_z)

        gh_n = jnp.dot(h_mm, whh_ref[:, 2 * Hp:3 * Hp],
                       preferred_element_type=jnp.float32)
        n = jnp.tanh(gi_ref[pl.ds(base, Bb), 2 * Hp:3 * Hp] + r * (gh_n + b_hn))

        h_new = n + z * (h_prev - n)          # == (1 - z) * n + z * h_prev
        if ragged:
            # Ragged tail: padded timesteps leave the hidden state untouched.
            keep = (ci * Tc + tt) < seq_len
            h_new = jnp.where(keep, h_new, h_prev)
        return h_new

    h = lax.fori_loop(0, Tc, step, h_ref[...], unroll=unroll)
    h_ref[...] = h                            # one VMEM write per chunk

    # Final Linear layer after the last time chunk of this batch block.
    @pl.when(ci == pl.num_programs(1) - 1)
    def _():
        out_ref[...] = (
            jnp.dot(h.astype(mm_dtype), wfc_ref[...],
                    preferred_element_type=jnp.float32)
            + bfc_ref[...]).astype(out_ref.dtype)


def gru_model_forward(x, params, *, matmul_dtype=jnp.float32, block_batch=None,
                      max_chunk_timesteps=256, single_buffer_weights=True):
    """x: (B, T, I) float32 (batch_first, like the PyTorch module).
    Returns (B, output_size) float32.

    matmul_dtype=jnp.bfloat16 is the MXU throughput mode on v6e/v7x (f32
    accumulation, f32 gate math).  It is opt-in rather than default because
    pre-activation error compounds through the recurrence for long sequences.
    """
    w_ih, w_hh, b_ih, b_hh, w_fc, b_fc = (
        params["w_ih"], params["w_hh"], params["b_ih"],
        params["b_hh"], params["w_fc"], params["b_fc"])

    B, T, I = x.shape
    H = w_hh.shape[1]
    O = w_fc.shape[0]

    Hp = _round_up(H, 128)            # gate slab width (lane-aligned)
    # TODO: for 3*H <= 128 a single-slab gate packing would cut padded
    # MXU/EUP/VPU work ~3x at the cost of per-step lane shifts; not done here.
    Op = _round_up(O, 128)            # lane-dense output
    Ie = I + 1                        # +1 ones column carrying the folded bias

    # ---- generation-aware VMEM sizing / TC-count heuristic ----
    vmem_cap = _tpu_vmem_capacity_bytes()
    if vmem_cap >= 100 * 1024 * 1024:          # v5e / v6e: 128 MiB VMEM, 1 TC
        chunk_budget = 24 * 1024 * 1024
        vmem_limit = 96 * 1024 * 1024
        two_tc_chip = False
    else:                                       # v7x-like: 64 MiB / TC, 2 TCs
        chunk_budget = 8 * 1024 * 1024
        vmem_limit = 44 * 1024 * 1024
        two_tc_chip = True

    # ---- batch blocking ----
    Bp0 = _round_up(B, 8)
    if block_batch is not None:
        Bb = _round_up(block_batch, 8)
    else:
        Bb = min(Bp0, 64)                       # cap live vregs in the time loop
        if two_tc_chip and Bp0 >= 16:
            Bb = min(Bb, _round_up(_cdiv(Bp0, 2), 8))   # >=2 blocks -> both TCs busy
    Bp = _round_up(Bp0, Bb)
    nb = Bp // Bb

    # ---- time chunking: bounded VMEM footprint, no divisor requirement ----
    mm_itemsize = jnp.dtype(matmul_dtype).itemsize
    gi_dtype = matmul_dtype                     # bf16 path halves gi store traffic
    gi_itemsize = jnp.dtype(gi_dtype).itemsize
    weight_bufs = 1 if single_buffer_weights else 2
    weight_bytes = (weight_bufs * mm_itemsize *
                    (Ie * 3 * Hp + Hp * 3 * Hp + Hp * Op)
                    + 4 * (Hp + Op) + 4 * Bb * (Hp + Op))
    bytes_per_t = Bb * (2 * Ie * mm_itemsize + 3 * Hp * gi_itemsize)
    stream_budget = max(bytes_per_t, chunk_budget - weight_bytes)
    cap = max(1, stream_budget // bytes_per_t)

    Tc = max(1, min(cap, max_chunk_timesteps, T))
    nc = _cdiv(T, Tc)
    Tc = _cdiv(T, nc)                           # balance chunk sizes
    unroll = min(8, Tc)
    Tc = _round_up(Tc, unroll)                  # keep Tc a multiple of the unroll
    nc = _cdiv(T, Tc)
    Tp = nc * Tc
    ragged = (Tp != T)

    # ---- weight / bias preparation (gate-slab packed, zero padded) ----
    # Fold b_ih + b_hh(r,z) into an extra W_ih row (matched by x's ones col);
    # b_hh[n] stays separate because it must remain inside r * (.).
    b_gi = b_ih + jnp.concatenate(
        [b_hh[:H], b_hh[H:2 * H], jnp.zeros((H,), b_hh.dtype)])
    w_ih_aug = jnp.concatenate([w_ih.T, b_gi.reshape(1, 3 * H)], axis=0)    # (Ie, 3H)
    w_ih_p = _gate_pack_cols(w_ih_aug, H, Hp).astype(matmul_dtype)          # (Ie, 3Hp)
    w_hh_p = jnp.pad(_gate_pack_cols(w_hh.T, H, Hp),
                     ((0, Hp - H), (0, 0))).astype(matmul_dtype)            # (Hp, 3Hp)
    b_hn_p = jnp.pad(b_hh[2 * H:].reshape(1, H), ((0, 0), (0, Hp - H)))     # (1, Hp) f32
    w_fc_p = jnp.pad(w_fc.T, ((0, Hp - H), (0, Op - O))).astype(matmul_dtype)  # (Hp, Op)
    b_fc_p = jnp.pad(b_fc, (0, Op - O)).reshape(1, Op)                      # (1, Op) f32

    # ---- input re-layout: append ones column (folded bias), pad, and order
    # rows (batch-block, time, in-block batch) so every per-step read in the
    # kernel is a contiguous, sublane-aligned slice.  Done once in XLA.
    xe = jnp.concatenate([x, jnp.ones((B, T, 1), x.dtype)], axis=-1)        # (B,T,Ie)
    x_p = jnp.pad(xe, ((0, Bp - B), (0, Tp - T), (0, 0)))
    x_flat = (x_p.reshape(nb, Bb, Tp, Ie)
                 .transpose(0, 2, 1, 3)          # (nb, Tp, Bb, Ie)
                 .reshape(nb * Tp * Bb, Ie)
                 .astype(matmul_dtype))

    kernel = functools.partial(_gru_fc_kernel, hidden_pad=Hp, block_batch=Bb,
                               chunk_t=Tc, seq_len=T, unroll=unroll,
                               ragged=ragged)

    def _run(use_single_buffer):
        def _wspec(shape):
            # Resident operands: constant index map; single-buffer to halve
            # their VMEM footprint when supported.
            if use_single_buffer:
                return pl.BlockSpec(shape, lambda bi, ci: (0, 0),
                                    pipeline_mode=pl.Buffered(1))
            return pl.BlockSpec(shape, lambda bi, ci: (0, 0))

        grid_spec = pltpu.PrefetchScalarGridSpec(
            num_scalar_prefetch=0,
            grid=(nb, nc),
            in_specs=[
                pl.BlockSpec((Tc * Bb, Ie), lambda bi, ci: (bi * nc + ci, 0)),  # x chunk (streamed)
                _wspec((Ie, 3 * Hp)),     # W_ih (+ folded bias row)
                _wspec((Hp, 3 * Hp)),     # W_hh
                _wspec((1, Hp)),          # b_hh[n]
                _wspec((Hp, Op)),         # W_fc
                _wspec((1, Op)),          # b_fc
            ],
            out_specs=pl.BlockSpec((Bb, Op), lambda bi, ci: (bi, 0)),
            scratch_shapes=[
                pltpu.VMEM((Bb, Hp), jnp.float32),           # hidden state across chunks
                pltpu.VMEM((Tc * Bb, 3 * Hp), gi_dtype),     # hoisted gi for the chunk
            ],
        )
        return pl.pallas_call(
            kernel,
            out_shape=jax.ShapeDtypeStruct((Bp, Op), jnp.float32),
            grid_spec=grid_spec,
            compiler_params=pltpu.CompilerParams(
                dimension_semantics=("parallel", "arbitrary"),
                vmem_limit_bytes=vmem_limit,
            ),
        )(x_flat, w_ih_p, w_hh_p, b_hn_p, w_fc_p, b_fc_p)

    if single_buffer_weights:
        try:
            out_full = _run(True)
        except Exception:
            # pl.Buffered(1) not supported on this jax/Mosaic version:
            # fall back to default double-buffered resident weights.
            out_full = _run(False)
    else:
        out_full = _run(False)

    return out_full[:B, :O]


def init_params(key, input_size, hidden_size, output_size):
    """Deterministic init, matching PyTorch shapes / U(-1/sqrt(H), 1/sqrt(H))."""
    ks = jax.random.split(key, 6)
    bound = 1.0 / jnp.sqrt(jnp.float32(hidden_size))
    u = lambda k, shape, b: jax.random.uniform(k, shape, jnp.float32, -b, b)
    return {
        "w_ih": u(ks[0], (3 * hidden_size, input_size), bound),   # weight_ih_l0
        "w_hh": u(ks[1], (3 * hidden_size, hidden_size), bound),  # weight_hh_l0
        "b_ih": u(ks[2], (3 * hidden_size,), bound),              # bias_ih_l0
        "b_hh": u(ks[3], (3 * hidden_size,), bound),              # bias_hh_l0
        "w_fc": u(ks[4], (output_size, hidden_size), bound),      # fc.weight
        "b_fc": u(ks[5], (output_size,), bound),                  # fc.bias
    }


def gru_model_reference(x, params):
    """Pure-JAX reference of the same forward pass (PyTorch GRU equations)."""
    w_ih, w_hh, b_ih, b_hh = (params["w_ih"], params["w_hh"],
                              params["b_ih"], params["b_hh"])
    w_fc, b_fc = params["w_fc"], params["b_fc"]
    H = w_hh.shape[1]
    B = x.shape[0]

    def cell(h_prev, x_t):
        gi = x_t @ w_ih.T + b_ih
        gh = h_prev @ w_hh.T + b_hh
        i_r, i_z, i_n = gi[:, :H], gi[:, H:2 * H], gi[:, 2 * H:]
        h_r, h_z, h_n = gh[:, :H], gh[:, H:2 * H], gh[:, 2 * H:]
        r = jax.nn.sigmoid(i_r + h_r)
        z = jax.nn.sigmoid(i_z + h_z)
        n = jnp.tanh(i_n + r * h_n)
        h_new = (1.0 - z) * n + z * h_prev
        return h_new, None

    h0 = jnp.zeros((B, H), jnp.float32)
    hT, _ = lax.scan(cell, h0, jnp.transpose(x, (1, 0, 2)))
    return hT @ w_fc.T + b_fc


if __name__ == "__main__":
    INPUT_SIZE, HIDDEN_SIZE, OUTPUT_SIZE = 10, 20, 1
    BATCH, SEQ = 2, 8

    key = jax.random.PRNGKey(0)
    kx, kp = jax.random.split(key)
    x = jax.random.normal(kx, (BATCH, SEQ, INPUT_SIZE), jnp.float32)
    params = init_params(kp, INPUT_SIZE, HIDDEN_SIZE, OUTPUT_SIZE)

    ref = jax.block_until_ready(gru_model_reference(x, params))

    # f32 MXU-operand path: matches the f32 reference tightly.
    out = jax.block_until_ready(gru_model_forward(x, params))
    assert out.shape == (BATCH, OUTPUT_SIZE), out.shape
    assert jnp.allclose(out, ref, rtol=1e-4, atol=2e-5), (out, ref)

    # bf16 MXU-operand path (v6e/v7x throughput mode; gate math stays f32).
    out_bf16 = jax.block_until_ready(
        gru_model_forward(x, params, matmul_dtype=jnp.bfloat16))
    assert out_bf16.shape == (BATCH, OUTPUT_SIZE), out_bf16.shape
    assert jnp.allclose(out_bf16, ref, rtol=1e-1, atol=1e-1), (out_bf16, ref)

    # Exercise the multi-batch-block ("parallel"), multi-time-chunk
    # ("arbitrary") and ragged-tail paths: B=12 -> 2 blocks of 8; T=7 with
    # Tc=3 -> 3 chunks, last chunk has 1 valid + 2 masked steps.
    x2 = jax.random.normal(jax.random.PRNGKey(1), (12, 7, INPUT_SIZE), jnp.float32)
    ref2 = jax.block_until_ready(gru_model_reference(x2, params))
    out2 = jax.block_until_ready(
        gru_model_forward(x2, params, block_batch=8, max_chunk_timesteps=3))
    assert out2.shape == (12, OUTPUT_SIZE), out2.shape
    assert jnp.allclose(out2, ref2, rtol=1e-4, atol=2e-5), (out2, ref2)

    print("KERNEL_OK")
</pallas_src>

<mosaic_0001>
module attributes {stable_mosaic.version = 11 : i64} {
  func.func @_gru_fc_kernel(%arg0: i32, %arg1: i32, %arg2: memref<64x11xf32, #tpu.memory_space<vmem>>, %arg3: memref<11x384xf32, #tpu.memory_space<vmem>>, %arg4: memref<128x384xf32, #tpu.memory_space<vmem>>, %arg5: memref<1x128xf32, #tpu.memory_space<vmem>>, %arg6: memref<128x128xf32, #tpu.memory_space<vmem>>, %arg7: memref<1x128xf32, #tpu.memory_space<vmem>>, %arg8: memref<8x128xf32, #tpu.memory_space<vmem>>, %arg9: memref<8x128xf32, #tpu.memory_space<vmem>>, %arg10: memref<64x384xf32, #tpu.memory_space<vmem>>) attributes {dimension_semantics = [#tpu.dimension_semantics<parallel>, #tpu.dimension_semantics<arbitrary>], iteration_bounds = array<i64: 1, 1>, scalar_prefetch = 0 : i64, scratch_operands = 2 : i64, tpu.core_type = #tpu.core_type<tc>, window_params = [{transform_indices = @transform_0, window_bounds = array<i64: 64, 11>}, {pipeline_mode = #tpu.pipeline_mode<synchronous>, transform_indices = @transform_1, window_bounds = array<i64: 11, 384>}, {pipeline_mode = #tpu.pipeline_mode<synchronous>, transform_indices = @transform_2, window_bounds = array<i64: 128, 384>}, {pipeline_mode = #tpu.pipeline_mode<synchronous>, transform_indices = @transform_3, window_bounds = array<i64: 1, 128>}, {pipeline_mode = #tpu.pipeline_mode<synchronous>, transform_indices = @transform_4, window_bounds = array<i64: 128, 128>}, {pipeline_mode = #tpu.pipeline_mode<synchronous>, transform_indices = @transform_5, window_bounds = array<i64: 1, 128>}, {transform_indices = @transform_6, window_bounds = array<i64: 8, 128>}]} {
    %c0_i32 = arith.constant 0 : i32
    %0 = arith.cmpi eq, %arg1, %c0_i32 : i32
    %1 = arith.extui %0 : i1 to i32
    %c0_i32_0 = arith.constant 0 : i32
    %2 = arith.cmpi ne, %1, %c0_i32_0 : i32
    scf.if %2 {
      %cst_133 = arith.constant 0.000000e+00 : f32
      %279 = vector.broadcast %cst_133 : f32 to vector<8x128xf32>
      %c0_134 = arith.constant 0 : index
      %c0_135 = arith.constant 0 : index
      %280 = vector.load %arg9[%c0_134, %c0_135] : memref<8x128xf32, #tpu.memory_space<vmem>>, vector<8x128xf32>
      tpu.vector_store %arg9[%c0_134, %c0_135], %279 {strides = array<i32>} : memref<8x128xf32, #tpu.memory_space<vmem>>, vector<8x128xf32>,
    } else {
    }
    %c0 = arith.constant 0 : index
    %c0_1 = arith.constant 0 : index
    %3 = vector.load %arg2[%c0, %c0_1] : memref<64x11xf32, #tpu.memory_space<vmem>>, vector<64x11xf32>
    %c0_2 = arith.constant 0 : index
    %c0_3 = arith.constant 0 : index
    %4 = vector.load %arg3[%c0_2, %c0_3] : memref<11x384xf32, #tpu.memory_space<vmem>>, vector<11x384xf32>
    %cst = arith.constant dense<0.000000e+00> : vector<64x384xf32>
    %5 = tpu.matmul %3, %4, %cst {dimension_numbers = #tpu.dot_dimension_numbers<[1], [0], [0], [1], [0, 0, 1, 1], [], []>} : vector<64x11xf32>, vector<11x384xf32>, vector<64x384xf32> -> vector<64x384xf32>
    %c0_4 = arith.constant 0 : index
    %c0_5 = arith.constant 0 : index
    %6 = vector.load %arg10[%c0_4, %c0_5] : memref<64x384xf32, #tpu.memory_space<vmem>>, vector<64x384xf32>
    tpu.vector_store %arg10[%c0_4, %c0_5], %5 {strides = array<i32>} : memref<64x384xf32, #tpu.memory_space<vmem>>, vector<64x384xf32>,
    %c0_6 = arith.constant 0 : index
    %c0_7 = arith.constant 0 : index
    %7 = vector.load %arg5[%c0_6, %c0_7] : memref<1x128xf32, #tpu.memory_space<vmem>>, vector<1x128xf32>
    %8 = vector.shape_cast %7 : vector<1x128xf32> to vector<1x128xf32>
    %9 = vector.broadcast %8 : vector<1x128xf32> to vector<8x128xf32>
    %c0_8 = arith.constant 0 : index
    %c0_9 = arith.constant 0 : index
    %10 = vector.load %arg9[%c0_8, %c0_9] : memref<8x128xf32, #tpu.memory_space<vmem>>, vector<8x128xf32>
    %c0_i32_10 = arith.constant 0 : i32
    %c8_i32 = arith.constant 8 : i32
    %11 = arith.muli %c0_i32_10, %c8_i32 : i32
    %12 = tpu.assume_multiple %11, 8 : i32
    %c0_11 = arith.constant 0 : index
    %c0_12 = arith.constant 0 : index
    %13 = vector.load %arg4[%c0_11, %c0_12] : memref<128x384xf32, #tpu.memory_space<vmem>>, vector<128x128xf32>
    %cst_13 = arith.constant dense<0.000000e+00> : vector<8x128xf32>
    %14 = tpu.matmul %10, %13, %cst_13 {dimension_numbers = #tpu.dot_dimension_numbers<[1], [0], [0], [1], [0, 0, 1, 1], [], []>} : vector<8x128xf32>, vector<128x128xf32>, vector<8x128xf32> -> vector<8x128xf32>
    %15 = arith.index_cast %12 : i32 to index
    %c0_14 = arith.constant 0 : index
    %16 = vector.load %arg10[%15, %c0_14] : memref<64x384xf32, #tpu.memory_space<vmem>>, vector<8x128xf32>
    %17 = arith.addf %16, %14 : vector<8x128xf32>
    %18 = arith.negf %17 : vector<8x128xf32>
    %19 = math.exp %18 : vector<8x128xf32>
    %cst_15 = arith.constant 1.000000e+00 : f32
    %20 = vector.broadcast %cst_15 : f32 to vector<8x128xf32>
    %21 = arith.addf %20, %19 : vector<8x128xf32>
    %22 = arith.divf %20, %21 : vector<8x128xf32>
    %c0_16 = arith.constant 0 : index
    %c128 = arith.constant 128 : index
    %23 = vector.load %arg4[%c0_16, %c128] : memref<128x384xf32, #tpu.memory_space<vmem>>, vector<128x128xf32>
    %cst_17 = arith.constant dense<0.000000e+00> : vector<8x128xf32>
    %24 = tpu.matmul %10, %23, %cst_17 {dimension_numbers = #tpu.dot_dimension_numbers<[1], [0], [0], [1], [0, 0, 1, 1], [], []>} : vector<8x128xf32>, vector<128x128xf32>, vector<8x128xf32> -> vector<8x128xf32>
    %25 = arith.index_cast %12 : i32 to index
    %c128_18 = arith.constant 128 : index
    %26 = vector.load %arg10[%25, %c128_18] : memref<64x384xf32, #tpu.memory_space<vmem>>, vector<8x128xf32>
    %27 = arith.addf %26, %24 : vector<8x128xf32>
    %28 = arith.negf %27 : vector<8x128xf32>
    %29 = math.exp %28 : vector<8x128xf32>
    %cst_19 = arith.constant 1.000000e+00 : f32
    %30 = vector.broadcast %cst_19 : f32 to vector<8x128xf32>
    %31 = arith.addf %30, %29 : vector<8x128xf32>
    %32 = arith.divf %30, %31 : vector<8x128xf32>
    %c0_20 = arith.constant 0 : index
    %c256 = arith.constant 256 : index
    %33 = vector.load %arg4[%c0_20, %c256] : memref<128x384xf32, #tpu.memory_space<vmem>>, vector<128x128xf32>
    %cst_21 = arith.constant dense<0.000000e+00> : vector<8x128xf32>
    %34 = tpu.matmul %10, %33, %cst_21 {dimension_numbers = #tpu.dot_dimension_numbers<[1], [0], [0], [1], [0, 0, 1, 1], [], []>} : vector<8x128xf32>, vector<128x128xf32>, vector<8x128xf32> -> vector<8x128xf32>
    %35 = arith.index_cast %12 : i32 to index
    %c256_22 = arith.constant 256 : index
    %36 = vector.load %arg10[%35, %c256_22] : memref<64x384xf32, #tpu.memory_space<vmem>>, vector<8x128xf32>
    %37 = arith.addf %34, %9 : vector<8x128xf32>
    %38 = arith.mulf %22, %37 : vector<8x128xf32>
    %39 = arith.addf %36, %38 : vector<8x128xf32>
    %40 = math.tanh %39 : vector<8x128xf32>
    %41 = arith.subf %10, %40 : vector<8x128xf32>
    %42 = arith.mulf %32, %41 : vector<8x128xf32>
    %43 = arith.addf %40, %42 : vector<8x128xf32>
    %c1_i32 = arith.constant 1 : i32
    %c8_i32_23 = arith.constant 8 : i32
    %44 = arith.muli %c1_i32, %c8_i32_23 : i32
    %45 = tpu.assume_multiple %44, 8 : i32
    %c0_24 = arith.constant 0 : index
    %c0_25 = arith.constant 0 : index
    %46 = vector.load %arg4[%c0_24, %c0_25] : memref<128x384xf32, #tpu.memory_space<vmem>>, vector<128x128xf32>
    %cst_26 = arith.constant dense<0.000000e+00> : vector<8x128xf32>
    %47 = tpu.matmul %43, %46, %cst_26 {dimension_numbers = #tpu.dot_dimension_numbers<[1], [0], [0], [1], [0, 0, 1, 1], [], []>} : vector<8x128xf32>, vector<128x128xf32>, vector<8x128xf32> -> vector<8x128xf32>
    %48 = arith.index_cast %45 : i32 to index
    %c0_27 = arith.constant 0 : index
    %49 = vector.load %arg10[%48, %c0_27] : memref<64x384xf32, #tpu.memory_space<vmem>>, vector<8x128xf32>
    %50 = arith.addf %49, %47 : vector<8x128xf32>
    %51 = arith.negf %50 : vector<8x128xf32>
    %52 = math.exp %51 : vector<8x128xf32>
    %cst_28 = arith.constant 1.000000e+00 : f32
    %53 = vector.broadcast %cst_28 : f32 to vector<8x128xf32>
    %54 = arith.addf %53, %52 : vector<8x128xf32>
    %55 = arith.divf %53, %54 : vector<8x128xf32>
    %c0_29 = arith.constant 0 : index
    %c128_30 = arith.constant 128 : index
    %56 = vector.load %arg4[%c0_29, %c128_30] : memref<128x384xf32, #tpu.memory_space<vmem>>, vector<128x128xf32>
    %cst_31 = arith.constant dense<0.000000e+00> : vector<8x128xf32>
    %57 = tpu.matmul %43, %56, %cst_31 {dimension_numbers = #tpu.dot_dimension_numbers<[1], [0], [0], [1], [0, 0, 1, 1], [], []>} : vector<8x128xf32>, vector<128x128xf32>, vector<8x128xf32> -> vector<8x128xf32>
    %58 = arith.index_cast %45 : i32 to index
    %c128_32 = arith.constant 128 : index
    %59 = vector.load %arg10[%58, %c128_32] : memref<64x384xf32, #tpu.memory_space<vmem>>, vector<8x128xf32>
    %60 = arith.addf %59, %57 : vector<8x128xf32>
    %61 = arith.negf %60 : vector<8x128xf32>
    %62 = math.exp %61 : vector<8x128xf32>
    %cst_33 = arith.constant 1.000000e+00 : f32
    %63 = vector.broadcast %cst_33 : f32 to vector<8x128xf32>
    %64 = arith.addf %63, %62 : vector<8x128xf32>
    %65 = arith.divf %63, %64 : vector<8x128xf32>
    %c0_34 = arith.constant 0 : index
    %c256_35 = arith.constant 256 : index
    %66 = vector.load %arg4[%c0_34, %c256_35] : memref<128x384xf32, #tpu.memory_space<vmem>>, vector<128x128xf32>
    %cst_36 = arith.constant dense<0.000000e+00> : vector<8x128xf32>
    %67 = tpu.matmul %43, %66, %cst_36 {dimension_numbers = #tpu.dot_dimension_numbers<[1], [0], [0], [1], [0, 0, 1, 1], [], []>} : vector<8x128xf32>, vector<128x128xf32>, vector<8x128xf32> -> vector<8x128xf32>
    %68 = arith.index_cast %45 : i32 to index
    %c256_37 = arith.constant 256 : index
    %69 = vector.load %arg10[%68, %c256_37] : memref<64x384xf32, #tpu.memory_space<vmem>>, vector<8x128xf32>
    %70 = arith.addf %67, %9 : vector<8x128xf32>
    %71 = arith.mulf %55, %70 : vector<8x128xf32>
    %72 = arith.addf %69, %71 : vector<8x128xf32>
    %73 = math.tanh %72 : vector<8x128xf32>
    %74 = arith.subf %43, %73 : vector<8x128xf32>
    %75 = arith.mulf %65, %74 : vector<8x128xf32>
    %76 = arith.addf %73, %75 : vector<8x128xf32>
    %c2_i32 = arith.constant 2 : i32
    %c8_i32_38 = arith.constant 8 : i32
    %77 = arith.muli %c2_i32, %c8_i32_38 : i32
    %78 = tpu.assume_multiple %77, 8 : i32
    %c0_39 = arith.constant 0 : index
    %c0_40 = arith.constant 0 : index
    %79 = vector.load %arg4[%c0_39, %c0_40] : memref<128x384xf32, #tpu.memory_space<vmem>>, vector<128x128xf32>
    %cst_41 = arith.constant dense<0.000000e+00> : vector<8x128xf32>
    %80 = tpu.matmul %76, %79, %cst_41 {dimension_numbers = #tpu.dot_dimension_numbers<[1], [0], [0], [1], [0, 0, 1, 1], [], []>} : vector<8x128xf32>, vector<128x128xf32>, vector<8x128xf32> -> vector<8x128xf32>
    %81 = arith.index_cast %78 : i32 to index
    %c0_42 = arith.constant 0 : index
    %82 = vector.load %arg10[%81, %c0_42] : memref<64x384xf32, #tpu.memory_space<vmem>>, vector<8x128xf32>
    %83 = arith.addf %82, %80 : vector<8x128xf32>
    %84 = arith.negf %83 : vector<8x128xf32>
    %85 = math.exp %84 : vector<8x128xf32>
    %cst_43 = arith.constant 1.000000e+00 : f32
    %86 = vector.broadcast %cst_43 : f32 to vector<8x128xf32>
    %87 = arith.addf %86, %85 : vector<8x128xf32>
    %88 = arith.divf %86, %87 : vector<8x128xf32>
    %c0_44 = arith.constant 0 : index
    %c128_45 = arith.constant 128 : index
    %89 = vector.load %arg4[%c0_44, %c128_45] : memref<128x384xf32, #tpu.memory_space<vmem>>, vector<128x128xf32>
    %cst_46 = arith.constant dense<0.000000e+00> : vector<8x128xf32>
    %90 = tpu.matmul %76, %89, %cst_46 {dimension_numbers = #tpu.dot_dimension_numbers<[1], [0], [0], [1], [0, 0, 1, 1], [], []>} : vector<8x128xf32>, vector<128x128xf32>, vector<8x128xf32> -> vector<8x128xf32>
    %91 = arith.index_cast %78 : i32 to index
    %c128_47 = arith.constant 128 : index
    %92 = vector.load %arg10[%91, %c128_47] : memref<64x384xf32, #tpu.memory_space<vmem>>, vector<8x128xf32>
    %93 = arith.addf %92, %90 : vector<8x128xf32>
    %94 = arith.negf %93 : vector<8x128xf32>
    %95 = math.exp %94 : vector<8x128xf32>
    %cst_48 = arith.constant 1.000000e+00 : f32
    %96 = vector.broadcast %cst_48 : f32 to vector<8x128xf32>
    %97 = arith.addf %96, %95 : vector<8x128xf32>
    %98 = arith.divf %96, %97 : vector<8x128xf32>
    %c0_49 = arith.constant 0 : index
    %c256_50 = arith.constant 256 : index
    %99 = vector.load %arg4[%c0_49, %c256_50] : memref<128x384xf32, #tpu.memory_space<vmem>>, vector<128x128xf32>
    %cst_51 = arith.constant dense<0.000000e+00> : vector<8x128xf32>
    %100 = tpu.matmul %76, %99, %cst_51 {dimension_numbers = #tpu.dot_dimension_numbers<[1], [0], [0], [1], [0, 0, 1, 1], [], []>} : vector<8x128xf32>, vector<128x128xf32>, vector<8x128xf32> -> vector<8x128xf32>
    %101 = arith.index_cast %78 : i32 to index
    %c256_52 = arith.constant 256 : index
    %102 = vector.load %arg10[%101, %c256_52] : memref<64x384xf32, #tpu.memory_space<vmem>>, vector<8x128xf32>
    %103 = arith.addf %100, %9 : vector<8x128xf32>
    %104 = arith.mulf %88, %103 : vector<8x128xf32>
    %105 = arith.addf %102, %104 : vector<8x128xf32>
    %106 = math.tanh %105 : vector<8x128xf32>
    %107 = arith.subf %76, %106 : vector<8x128xf32>
    %108 = arith.mulf %98, %107 : vector<8x128xf32>
    %109 = arith.addf %106, %108 : vector<8x128xf32>
    %c3_i32 = arith.constant 3 : i32
    %c8_i32_53 = arith.constant 8 : i32
    %110 = arith.muli %c3_i32, %c8_i32_53 : i32
    %111 = tpu.assume_multiple %110, 8 : i32
    %c0_54 = arith.constant 0 : index
    %c0_55 = arith.constant 0 : index
    %112 = vector.load %arg4[%c0_54, %c0_55] : memref<128x384xf32, #tpu.memory_space<vmem>>, vector<128x128xf32>
    %cst_56 = arith.constant dense<0.000000e+00> : vector<8x128xf32>
    %113 = tpu.matmul %109, %112, %cst_56 {dimension_numbers = #tpu.dot_dimension_numbers<[1], [0], [0], [1], [0, 0, 1, 1], [], []>} : vector<8x128xf32>, vector<128x128xf32>, vector<8x128xf32> -> vector<8x128xf32>
    %114 = arith.index_cast %111 : i32 to index
    %c0_57 = arith.constant 0 : index
    %115 = vector.load %arg10[%114, %c0_57] : memref<64x384xf32, #tpu.memory_space<vmem>>, vector<8x128xf32>
    %116 = arith.addf %115, %113 : vector<8x128xf32>
    %117 = arith.negf %116 : vector<8x128xf32>
    %118 = math.exp %117 : vector<8x128xf32>
    %cst_58 = arith.constant 1.000000e+00 : f32
    %119 = vector.broadcast %cst_58 : f32 to vector<8x128xf32>
    %120 = arith.addf %119, %118 : vector<8x128xf32>
    %121 = arith.divf %119, %120 : vector<8x128xf32>
    %c0_59 = arith.constant 0 : index
    %c128_60 = arith.constant 128 : index
    %122 = vector.load %arg4[%c0_59, %c128_60] : memref<128x384xf32, #tpu.memory_space<vmem>>, vector<128x128xf32>
    %cst_61 = arith.constant dense<0.000000e+00> : vector<8x128xf32>
    %123 = tpu.matmul %109, %122, %cst_61 {dimension_numbers = #tpu.dot_dimension_numbers<[1], [0], [0], [1], [0, 0, 1, 1], [], []>} : vector<8x128xf32>, vector<128x128xf32>, vector<8x128xf32> -> vector<8x128xf32>
    %124 = arith.index_cast %111 : i32 to index
    %c128_62 = arith.constant 128 : index
    %125 = vector.load %arg10[%124, %c128_62] : memref<64x384xf32, #tpu.memory_space<vmem>>, vector<8x128xf32>
    %126 = arith.addf %125, %123 : vector<8x128xf32>
    %127 = arith.negf %126 : vector<8x128xf32>
    %128 = math.exp %127 : vector<8x128xf32>
    %cst_63 = arith.constant 1.000000e+00 : f32
    %129 = vector.broadcast %cst_63 : f32 to vector<8x128xf32>
    %130 = arith.addf %129, %128 : vector<8x128xf32>
    %131 = arith.divf %129, %130 : vector<8x128xf32>
    %c0_64 = arith.constant 0 : index
    %c256_65 = arith.constant 256 : index
    %132 = vector.load %arg4[%c0_64, %c256_65] : memref<128x384xf32, #tpu.memory_space<vmem>>, vector<128x128xf32>
    %cst_66 = arith.constant dense<0.000000e+00> : vector<8x128xf32>
    %133 = tpu.matmul %109, %132, %cst_66 {dimension_numbers = #tpu.dot_dimension_numbers<[1], [0], [0], [1], [0, 0, 1, 1], [], []>} : vector<8x128xf32>, vector<128x128xf32>, vector<8x128xf32> -> vector<8x128xf32>
    %134 = arith.index_cast %111 : i32 to index
    %c256_67 = arith.constant 256 : index
    %135 = vector.load %arg10[%134, %c256_67] : memref<64x384xf32, #tpu.memory_space<vmem>>, vector<8x128xf32>
    %136 = arith.addf %133, %9 : vector<8x128xf32>
    %137 = arith.mulf %121, %136 : vector<8x128xf32>
    %138 = arith.addf %135, %137 : vector<8x128xf32>
    %139 = math.tanh %138 : vector<8x128xf32>
    %140 = arith.subf %109, %139 : vector<8x128xf32>
    %141 = arith.mulf %131, %140 : vector<8x128xf32>
    %142 = arith.addf %139, %141 : vector<8x128xf32>
    %c4_i32 = arith.constant 4 : i32
    %c8_i32_68 = arith.constant 8 : i32
    %143 = arith.muli %c4_i32, %c8_i32_68 : i32
    %144 = tpu.assume_multiple %143, 8 : i32
    %c0_69 = arith.constant 0 : index
    %c0_70 = arith.constant 0 : index
    %145 = vector.load %arg4[%c0_69, %c0_70] : memref<128x384xf32, #tpu.memory_space<vmem>>, vector<128x128xf32>
    %cst_71 = arith.constant dense<0.000000e+00> : vector<8x128xf32>
    %146 = tpu.matmul %142, %145, %cst_71 {dimension_numbers = #tpu.dot_dimension_numbers<[1], [0], [0], [1], [0, 0, 1, 1], [], []>} : vector<8x128xf32>, vector<128x128xf32>, vector<8x128xf32> -> vector<8x128xf32>
    %147 = arith.index_cast %144 : i32 to index
    %c0_72 = arith.constant 0 : index
    %148 = vector.load %arg10[%147, %c0_72] : memref<64x384xf32, #tpu.memory_space<vmem>>, vector<8x128xf32>
    %149 = arith.addf %148, %146 : vector<8x128xf32>
    %150 = arith.negf %149 : vector<8x128xf32>
    %151 = math.exp %150 : vector<8x128xf32>
    %cst_73 = arith.constant 1.000000e+00 : f32
    %152 = vector.broadcast %cst_73 : f32 to vector<8x128xf32>
    %153 = arith.addf %152, %151 : vector<8x128xf32>
    %154 = arith.divf %152, %153 : vector<8x128xf32>
    %c0_74 = arith.constant 0 : index
    %c128_75 = arith.constant 128 : index
    %155 = vector.load %arg4[%c0_74, %c128_75] : memref<128x384xf32, #tpu.memory_space<vmem>>, vector<128x128xf32>
    %cst_76 = arith.constant dense<0.000000e+00> : vector<8x128xf32>
    %156 = tpu.matmul %142, %155, %cst_76 {dimension_numbers = #tpu.dot_dimension_numbers<[1], [0], [0], [1], [0, 0, 1, 1], [], []>} : vector<8x128xf32>, vector<128x128xf32>, vector<8x128xf32> -> vector<8x128xf32>
    %157 = arith.index_cast %144 : i32 to index
    %c128_77 = arith.constant 128 : index
    %158 = vector.load %arg10[%157, %c128_77] : memref<64x384xf32, #tpu.memory_space<vmem>>, vector<8x128xf32>
    %159 = arith.addf %158, %156 : vector<8x128xf32>
    %160 = arith.negf %159 : vector<8x128xf32>
    %161 = math.exp %160 : vector<8x128xf32>
    %cst_78 = arith.constant 1.000000e+00 : f32
    %162 = vector.broadcast %cst_78 : f32 to vector<8x128xf32>
    %163 = arith.addf %162, %161 : vector<8x128xf32>
    %164 = arith.divf %162, %163 : vector<8x128xf32>
    %c0_79 = arith.constant 0 : index
    %c256_80 = arith.constant 256 : index
    %165 = vector.load %arg4[%c0_79, %c256_80] : memref<128x384xf32, #tpu.memory_space<vmem>>, vector<128x128xf32>
    %cst_81 = arith.constant dense<0.000000e+00> : vector<8x128xf32>
    %166 = tpu.matmul %142, %165, %cst_81 {dimension_numbers = #tpu.dot_dimension_numbers<[1], [0], [0], [1], [0, 0, 1, 1], [], []>} : vector<8x128xf32>, vector<128x128xf32>, vector<8x128xf32> -> vector<8x128xf32>
    %167 = arith.index_cast %144 : i32 to index
    %c256_82 = arith.constant 256 : index
    %168 = vector.load %arg10[%167, %c256_82] : memref<64x384xf32, #tpu.memory_space<vmem>>, vector<8x128xf32>
    %169 = arith.addf %166, %9 : vector<8x128xf32>
    %170 = arith.mulf %154, %169 : vector<8x128xf32>
    %171 = arith.addf %168, %170 : vector<8x128xf32>
    %172 = math.tanh %171 : vector<8x128xf32>
    %173 = arith.subf %142, %172 : vector<8x128xf32>
    %174 = arith.mulf %164, %173 : vector<8x128xf32>
    %175 = arith.addf %172, %174 : vector<8x128xf32>
    %c5_i32 = arith.constant 5 : i32
    %c8_i32_83 = arith.constant 8 : i32
    %176 = arith.muli %c5_i32, %c8_i32_83 : i32
    %177 = tpu.assume_multiple %176, 8 : i32
    %c0_84 = arith.constant 0 : index
    %c0_85 = arith.constant 0 : index
    %178 = vector.load %arg4[%c0_84, %c0_85] : memref<128x384xf32, #tpu.memory_space<vmem>>, vector<128x128xf32>
    %cst_86 = arith.constant dense<0.000000e+00> : vector<8x128xf32>
    %179 = tpu.matmul %175, %178, %cst_86 {dimension_numbers = #tpu.dot_dimension_numbers<[1], [0], [0], [1], [0, 0, 1, 1], [], []>} : vector<8x128xf32>, vector<128x128xf32>, vector<8x128xf32> -> vector<8x128xf32>
    %180 = arith.index_cast %177 : i32 to index
    %c0_87 = arith.constant 0 : index
    %181 = vector.load %arg10[%180, %c0_87] : memref<64x384xf32, #tpu.memory_space<vmem>>, vector<8x128xf32>
    %182 = arith.addf %181, %179 : vector<8x128xf32>
    %183 = arith.negf %182 : vector<8x128xf32>
    %184 = math.exp %183 : vector<8x128xf32>
    %cst_88 = arith.constant 1.000000e+00 : f32
    %185 = vector.broadcast %cst_88 : f32 to vector<8x128xf32>
    %186 = arith.addf %185, %184 : vector<8x128xf32>
    %187 = arith.divf %185, %186 : vector<8x128xf32>
    %c0_89 = arith.constant 0 : index
    %c128_90 = arith.constant 128 : index
    %188 = vector.load %arg4[%c0_89, %c128_90] : memref<128x384xf32, #tpu.memory_space<vmem>>, vector<128x128xf32>
    %cst_91 = arith.constant dense<0.000000e+00> : vector<8x128xf32>
    %189 = tpu.matmul %175, %188, %cst_91 {dimension_numbers = #tpu.dot_dimension_numbers<[1], [0], [0], [1], [0, 0, 1, 1], [], []>} : vector<8x128xf32>, vector<128x128xf32>, vector<8x128xf32> -> vector<8x128xf32>
    %190 = arith.index_cast %177 : i32 to index
    %c128_92 = arith.constant 128 : index
    %191 = vector.load %arg10[%190, %c128_92] : memref<64x384xf32, #tpu.memory_space<vmem>>, vector<8x128xf32>
    %192 = arith.addf %191, %189 : vector<8x128xf32>
    %193 = arith.negf %192 : vector<8x128xf32>
    %194 = math.exp %193 : vector<8x128xf32>
    %cst_93 = arith.constant 1.000000e+00 : f32
    %195 = vector.broadcast %cst_93 : f32 to vector<8x128xf32>
    %196 = arith.addf %195, %194 : vector<8x128xf32>
    %197 = arith.divf %195, %196 : vector<8x128xf32>
    %c0_94 = arith.constant 0 : index
    %c256_95 = arith.constant 256 : index
    %198 = vector.load %arg4[%c0_94, %c256_95] : memref<128x384xf32, #tpu.memory_space<vmem>>, vector<128x128xf32>
    %cst_96 = arith.constant dense<0.000000e+00> : vector<8x128xf32>
    %199 = tpu.matmul %175, %198, %cst_96 {dimension_numbers = #tpu.dot_dimension_numbers<[1], [0], [0], [1], [0, 0, 1, 1], [], []>} : vector<8x128xf32>, vector<128x128xf32>, vector<8x128xf32> -> vector<8x128xf32>
    %200 = arith.index_cast %177 : i32 to index
    %c256_97 = arith.constant 256 : index
    %201 = vector.load %arg10[%200, %c256_97] : memref<64x384xf32, #tpu.memory_space<vmem>>, vector<8x128xf32>
    %202 = arith.addf %199, %9 : vector<8x128xf32>
    %203 = arith.mulf %187, %202 : vector<8x128xf32>
    %204 = arith.addf %201, %203 : vector<8x128xf32>
    %205 = math.tanh %204 : vector<8x128xf32>
    %206 = arith.subf %175, %205 : vector<8x128xf32>
    %207 = arith.mulf %197, %206 : vector<8x128xf32>
    %208 = arith.addf %205, %207 : vector<8x128xf32>
    %c6_i32 = arith.constant 6 : i32
    %c8_i32_98 = arith.constant 8 : i32
    %209 = arith.muli %c6_i32, %c8_i32_98 : i32
    %210 = tpu.assume_multiple %209, 8 : i32
    %c0_99 = arith.constant 0 : index
    %c0_100 = arith.constant 0 : index
    %211 = vector.load %arg4[%c0_99, %c0_100] : memref<128x384xf32, #tpu.memory_space<vmem>>, vector<128x128xf32>
    %cst_101 = arith.constant dense<0.000000e+00> : vector<8x128xf32>
    %212 = tpu.matmul %208, %211, %cst_101 {dimension_numbers = #tpu.dot_dimension_numbers<[1], [0], [0], [1], [0, 0, 1, 1], [], []>} : vector<8x128xf32>, vector<128x128xf32>, vector<8x128xf32> -> vector<8x128xf32>
    %213 = arith.index_cast %210 : i32 to index
    %c0_102 = arith.constant 0 : index
    %214 = vector.load %arg10[%213, %c0_102] : memref<64x384xf32, #tpu.memory_space<vmem>>, vector<8x128xf32>
    %215 = arith.addf %214, %212 : vector<8x128xf32>
    %216 = arith.negf %215 : vector<8x128xf32>
    %217 = math.exp %216 : vector<8x128xf32>
    %cst_103 = arith.constant 1.000000e+00 : f32
    %218 = vector.broadcast %cst_103 : f32 to vector<8x128xf32>
    %219 = arith.addf %218, %217 : vector<8x128xf32>
    %220 = arith.divf %218, %219 : vector<8x128xf32>
    %c0_104 = arith.constant 0 : index
    %c128_105 = arith.constant 128 : index
    %221 = vector.load %arg4[%c0_104, %c128_105] : memref<128x384xf32, #tpu.memory_space<vmem>>, vector<128x128xf32>
    %cst_106 = arith.constant dense<0.000000e+00> : vector<8x128xf32>
    %222 = tpu.matmul %208, %221, %cst_106 {dimension_numbers = #tpu.dot_dimension_numbers<[1], [0], [0], [1], [0, 0, 1, 1], [], []>} : vector<8x128xf32>, vector<128x128xf32>, vector<8x128xf32> -> vector<8x128xf32>
    %223 = arith.index_cast %210 : i32 to index
    %c128_107 = arith.constant 128 : index
    %224 = vector.load %arg10[%223, %c128_107] : memref<64x384xf32, #tpu.memory_space<vmem>>, vector<8x128xf32>
    %225 = arith.addf %224, %222 : vector<8x128xf32>
    %226 = arith.negf %225 : vector<8x128xf32>
    %227 = math.exp %226 : vector<8x128xf32>
    %cst_108 = arith.constant 1.000000e+00 : f32
    %228 = vector.broadcast %cst_108 : f32 to vector<8x128xf32>
    %229 = arith.addf %228, %227 : vector<8x128xf32>
    %230 = arith.divf %228, %229 : vector<8x128xf32>
    %c0_109 = arith.constant 0 : index
    %c256_110 = arith.constant 256 : index
    %231 = vector.load %arg4[%c0_109, %c256_110] : memref<128x384xf32, #tpu.memory_space<vmem>>, vector<128x128xf32>
    %cst_111 = arith.constant dense<0.000000e+00> : vector<8x128xf32>
    %232 = tpu.matmul %208, %231, %cst_111 {dimension_numbers = #tpu.dot_dimension_numbers<[1], [0], [0], [1], [0, 0, 1, 1], [], []>} : vector<8x128xf32>, vector<128x128xf32>, vector<8x128xf32> -> vector<8x128xf32>
    %233 = arith.index_cast %210 : i32 to index
    %c256_112 = arith.constant 256 : index
    %234 = vector.load %arg10[%233, %c256_112] : memref<64x384xf32, #tpu.memory_space<vmem>>, vector<8x128xf32>
    %235 = arith.addf %232, %9 : vector<8x128xf32>
    %236 = arith.mulf %220, %235 : vector<8x128xf32>
    %237 = arith.addf %234, %236 : vector<8x128xf32>
    %238 = math.tanh %237 : vector<8x128xf32>
    %239 = arith.subf %208, %238 : vector<8x128xf32>
    %240 = arith.mulf %230, %239 : vector<8x128xf32>
    %241 = arith.addf %238, %240 : vector<8x128xf32>
    %c7_i32 = arith.constant 7 : i32
    %c8_i32_113 = arith.constant 8 : i32
    %242 = arith.muli %c7_i32, %c8_i32_113 : i32
    %243 = tpu.assume_multiple %242, 8 : i32
    %c0_114 = arith.constant 0 : index
    %c0_115 = arith.constant 0 : index
    %244 = vector.load %arg4[%c0_114, %c0_115] : memref<128x384xf32, #tpu.memory_space<vmem>>, vector<128x128xf32>
    %cst_116 = arith.constant dense<0.000000e+00> : vector<8x128xf32>
    %245 = tpu.matmul %241, %244, %cst_116 {dimension_numbers = #tpu.dot_dimension_numbers<[1], [0], [0], [1], [0, 0, 1, 1], [], []>} : vector<8x128xf32>, vector<128x128xf32>, vector<8x128xf32> -> vector<8x128xf32>
    %246 = arith.index_cast %243 : i32 to index
    %c0_117 = arith.constant 0 : index
    %247 = vector.load %arg10[%246, %c0_117] : memref<64x384xf32, #tpu.memory_space<vmem>>, vector<8x128xf32>
    %248 = arith.addf %247, %245 : vector<8x128xf32>
    %249 = arith.negf %248 : vector<8x128xf32>
    %250 = math.exp %249 : vector<8x128xf32>
    %cst_118 = arith.constant 1.000000e+00 : f32
    %251 = vector.broadcast %cst_118 : f32 to vector<8x128xf32>
    %252 = arith.addf %251, %250 : vector<8x128xf32>
    %253 = arith.divf %251, %252 : vector<8x128xf32>
    %c0_119 = arith.constant 0 : index
    %c128_120 = arith.constant 128 : index
    %254 = vector.load %arg4[%c0_119, %c128_120] : memref<128x384xf32, #tpu.memory_space<vmem>>, vector<128x128xf32>
    %cst_121 = arith.constant dense<0.000000e+00> : vector<8x128xf32>
    %255 = tpu.matmul %241, %254, %cst_121 {dimension_numbers = #tpu.dot_dimension_numbers<[1], [0], [0], [1], [0, 0, 1, 1], [], []>} : vector<8x128xf32>, vector<128x128xf32>, vector<8x128xf32> -> vector<8x128xf32>
    %256 = arith.index_cast %243 : i32 to index
    %c128_122 = arith.constant 128 : index
    %257 = vector.load %arg10[%256, %c128_122] : memref<64x384xf32, #tpu.memory_space<vmem>>, vector<8x128xf32>
    %258 = arith.addf %257, %255 : vector<8x128xf32>
    %259 = arith.negf %258 : vector<8x128xf32>
    %260 = math.exp %259 : vector<8x128xf32>
    %cst_123 = arith.constant 1.000000e+00 : f32
    %261 = vector.broadcast %cst_123 : f32 to vector<8x128xf32>
    %262 = arith.addf %261, %260 : vector<8x128xf32>
    %263 = arith.divf %261, %262 : vector<8x128xf32>
    %c0_124 = arith.constant 0 : index
    %c256_125 = arith.constant 256 : index
    %264 = vector.load %arg4[%c0_124, %c256_125] : memref<128x384xf32, #tpu.memory_space<vmem>>, vector<128x128xf32>
    %cst_126 = arith.constant dense<0.000000e+00> : vector<8x128xf32>
    %265 = tpu.matmul %241, %264, %cst_126 {dimension_numbers = #tpu.dot_dimension_numbers<[1], [0], [0], [1], [0, 0, 1, 1], [], []>} : vector<8x128xf32>, vector<128x128xf32>, vector<8x128xf32> -> vector<8x128xf32>
    %266 = arith.index_cast %243 : i32 to index
    %c256_127 = arith.constant 256 : index
    %267 = vector.load %arg10[%266, %c256_127] : memref<64x384xf32, #tpu.memory_space<vmem>>, vector<8x128xf32>
    %268 = arith.addf %265, %9 : vector<8x128xf32>
    %269 = arith.mulf %253, %268 : vector<8x128xf32>
    %270 = arith.addf %267, %269 : vector<8x128xf32>
    %271 = math.tanh %270 : vector<8x128xf32>
    %272 = arith.subf %241, %271 : vector<8x128xf32>
    %273 = arith.mulf %263, %272 : vector<8x128xf32>
    %274 = arith.addf %271, %273 : vector<8x128xf32>
    %c8_i32_128 = arith.constant 8 : i32
    %c0_129 = arith.constant 0 : index
    %c0_130 = arith.constant 0 : index
    %275 = vector.load %arg9[%c0_129, %c0_130] : memref<8x128xf32, #tpu.memory_space<vmem>>, vector<8x128xf32>
    tpu.vector_store %arg9[%c0_129, %c0_130], %274 {strides = array<i32>} : memref<8x128xf32, #tpu.memory_space<vmem>>, vector<8x128xf32>,
    %c0_i32_131 = arith.constant 0 : i32
    %276 = arith.cmpi eq, %arg1, %c0_i32_131 : i32
    %277 = arith.extui %276 : i1 to i32
    %c0_i32_132 = arith.constant 0 : i32
    %278 = arith.cmpi ne, %277, %c0_i32_132 : i32
    scf.if %278 {
      %c0_133 = arith.constant 0 : index
      %c0_134 = arith.constant 0 : index
      %279 = vector.load %arg6[%c0_133, %c0_134] : memref<128x128xf32, #tpu.memory_space<vmem>>, vector<128x128xf32>
      %cst_135 = arith.constant dense<0.000000e+00> : vector<8x128xf32>
      %280 = tpu.matmul %274, %279, %cst_135 {dimension_numbers = #tpu.dot_dimension_numbers<[1], [0], [0], [1], [0, 0, 1, 1], [], []>} : vector<8x128xf32>, vector<128x128xf32>, vector<8x128xf32> -> vector<8x128xf32>
      %c0_136 = arith.constant 0 : index
      %c0_137 = arith.constant 0 : index
      %281 = vector.load %arg7[%c0_136, %c0_137] : memref<1x128xf32, #tpu.memory_space<vmem>>, vector<1x128xf32>
      %282 = vector.broadcast %281 : vector<1x128xf32> to vector<8x128xf32>
      %283 = arith.addf %280, %282 : vector<8x128xf32>
      %c0_138 = arith.constant 0 : index
      %c0_139 = arith.constant 0 : index
      %284 = vector.load %arg8[%c0_138, %c0_139] : memref<8x128xf32, #tpu.memory_space<vmem>>, vector<8x128xf32>
      tpu.vector_store %arg8[%c0_138, %c0_139], %283 {strides = array<i32>} : memref<8x128xf32, #tpu.memory_space<vmem>>, vector<8x128xf32>,
    } else {
    }
    return
  }
  func.func @transform_0(%arg0: i32, %arg1: i32) -> (i32, i32) {
    %c1_i32 = arith.constant 1 : i32
    %0 = arith.muli %arg0, %c1_i32 : i32
    %1 = arith.addi %0, %arg1 : i32
    %c0_i32 = arith.constant 0 : i32
    %c0_i32_0 = arith.constant 0 : i32
    return %1, %c0_i32 : i32, i32
  }
  func.func @transform_1(%arg0: i32, %arg1: i32) -> (i32, i32) {
    %c0_i32 = arith.constant 0 : i32
    %c0_i32_0 = arith.constant 0 : i32
    %c0_i32_1 = arith.constant 0 : i32
    return %c0_i32, %c0_i32_0 : i32, i32
  }
  func.func @transform_2(%arg0: i32, %arg1: i32) -> (i32, i32) {
    %c0_i32 = arith.constant 0 : i32
    %c0_i32_0 = arith.constant 0 : i32
    %c0_i32_1 = arith.constant 0 : i32
    return %c0_i32, %c0_i32_0 : i32, i32
  }
  func.func @transform_3(%arg0: i32, %arg1: i32) -> (i32, i32) {
    %c0_i32 = arith.constant 0 : i32
    %c0_i32_0 = arith.constant 0 : i32
    %c0_i32_1 = arith.constant 0 : i32
    return %c0_i32, %c0_i32_0 : i32, i32
  }
  func.func @transform_4(%arg0: i32, %arg1: i32) -> (i32, i32) {
    %c0_i32 = arith.constant 0 : i32
    %c0_i32_0 = arith.constant 0 : i32
    %c0_i32_1 = arith.constant 0 : i32
    return %c0_i32, %c0_i32_0 : i32, i32
  }
  func.func @transform_5(%arg0: i32, %arg1: i32) -> (i32, i32) {
    %c0_i32 = arith.constant 0 : i32
    %c0_i32_0 = arith.constant 0 : i32
    %c0_i32_1 = arith.constant 0 : i32
    return %c0_i32, %c0_i32_0 : i32, i32
  }
  func.func @transform_6(%arg0: i32, %arg1: i32) -> (i32, i32) {
    %c0_i32 = arith.constant 0 : i32
    %c0_i32_0 = arith.constant 0 : i32
    return %arg0, %c0_i32 : i32, i32
  }
}

module attributes {stable_mosaic.version = 11 : i64} {
  func.func @_gru_fc_kernel(%arg0: i32, %arg1: i32, %arg2: memref<64x11xf32, #tpu.memory_space<vmem>>, %arg3: memref<11x384xf32, #tpu.memory_space<vmem>>, %arg4: memref<128x384xf32, #tpu.memory_space<vmem>>, %arg5: memref<1x128xf32, #tpu.memory_space<vmem>>, %arg6: memref<128x128xf32, #tpu.memory_space<vmem>>, %arg7: memref<1x128xf32, #tpu.memory_space<vmem>>, %arg8: memref<8x128xf32, #tpu.memory_space<vmem>>, %arg9: memref<8x128xf32, #tpu.memory_space<vmem>>, %arg10: memref<64x384xf32, #tpu.memory_space<vmem>>) attributes {dimension_semantics = [#tpu.dimension_semantics<parallel>, #tpu.dimension_semantics<arbitrary>], iteration_bounds = array<i64: 1, 1>, scalar_prefetch = 0 : i64, scratch_operands = 2 : i64, tpu.core_type = #tpu.core_type<tc>, window_params = [{transform_indices = @transform_0, window_bounds = array<i64: 64, 11>}, {pipeline_mode = #tpu.pipeline_mode<synchronous>, transform_indices = @transform_1, window_bounds = array<i64: 11, 384>}, {pipeline_mode = #tpu.pipeline_mode<synchronous>, transform_indices = @transform_2, window_bounds = array<i64: 128, 384>}, {pipeline_mode = #tpu.pipeline_mode<synchronous>, transform_indices = @transform_3, window_bounds = array<i64: 1, 128>}, {pipeline_mode = #tpu.pipeline_mode<synchronous>, transform_indices = @transform_4, window_bounds = array<i64: 128, 128>}, {pipeline_mode = #tpu.pipeline_mode<synchronous>, transform_indices = @transform_5, window_bounds = array<i64: 1, 128>}, {transform_indices = @transform_6, window_bounds = array<i64: 8, 128>}]} {
    %c0_i32 = arith.constant 0 : i32
    %0 = arith.cmpi eq, %arg1, %c0_i32 : i32
    %1 = arith.extui %0 : i1 to i32
    %c0_i32_0 = arith.constant 0 : i32
    %2 = arith.cmpi ne, %1, %c0_i32_0 : i32
    scf.if %2 {
      %cst_133 = arith.constant 0.000000e+00 : f32
      %279 = vector.broadcast %cst_133 : f32 to vector<8x128xf32>
      %c0_134 = arith.constant 0 : index
      %c0_135 = arith.constant 0 : index
      %280 = vector.load %arg9[%c0_134, %c0_135] : memref<8x128xf32, #tpu.memory_space<vmem>>, vector<8x128xf32>
      tpu.vector_store %arg9[%c0_134, %c0_135], %279 {strides = array<i32>} : memref<8x128xf32, #tpu.memory_space<vmem>>, vector<8x128xf32>,
    } else {
    }
    %c0 = arith.constant 0 : index
    %c0_1 = arith.constant 0 : index
    %3 = vector.load %arg2[%c0, %c0_1] : memref<64x11xf32, #tpu.memory_space<vmem>>, vector<64x11xf32>
    %c0_2 = arith.constant 0 : index
    %c0_3 = arith.constant 0 : index
    %4 = vector.load %arg3[%c0_2, %c0_3] : memref<11x384xf32, #tpu.memory_space<vmem>>, vector<11x384xf32>
    %cst = arith.constant dense<0.000000e+00> : vector<64x384xf32>
    %5 = tpu.matmul %3, %4, %cst {dimension_numbers = #tpu.dot_dimension_numbers<[1], [0], [0], [1], [0, 0, 1, 1], [], []>} : vector<64x11xf32>, vector<11x384xf32>, vector<64x384xf32> -> vector<64x384xf32>
    %c0_4 = arith.constant 0 : index
    %c0_5 = arith.constant 0 : index
    %6 = vector.load %arg10[%c0_4, %c0_5] : memref<64x384xf32, #tpu.memory_space<vmem>>, vector<64x384xf32>
    tpu.vector_store %arg10[%c0_4, %c0_5], %5 {strides = array<i32>} : memref<64x384xf32, #tpu.memory_space<vmem>>, vector<64x384xf32>,
    %c0_6 = arith.constant 0 : index
    %c0_7 = arith.constant 0 : index
    %7 = vector.load %arg5[%c0_6, %c0_7] : memref<1x128xf32, #tpu.memory_space<vmem>>, vector<1x128xf32>
    %8 = vector.shape_cast %7 : vector<1x128xf32> to vector<1x128xf32>
    %9 = vector.broadcast %8 : vector<1x128xf32> to vector<8x128xf32>
    %c0_8 = arith.constant 0 : index
    %c0_9 = arith.constant 0 : index
    %10 = vector.load %arg9[%c0_8, %c0_9] : memref<8x128xf32, #tpu.memory_space<vmem>>, vector<8x128xf32>
    %c0_i32_10 = arith.constant 0 : i32
    %c8_i32 = arith.constant 8 : i32
    %11 = arith.muli %c0_i32_10, %c8_i32 : i32
    %12 = tpu.assume_multiple %11, 8 : i32
    %c0_11 = arith.constant 0 : index
    %c0_12 = arith.constant 0 : index
    %13 = vector.load %arg4[%c0_11, %c0_12] : memref<128x384xf32, #tpu.memory_space<vmem>>, vector<128x128xf32>
    %cst_13 = arith.constant dense<0.000000e+00> : vector<8x128xf32>
    %14 = tpu.matmul %10, %13, %cst_13 {dimension_numbers = #tpu.dot_dimension_numbers<[1], [0], [0], [1], [0, 0, 1, 1], [], []>} : vector<8x128xf32>, vector<128x128xf32>, vector<8x128xf32> -> vector<8x128xf32>
    %15 = arith.index_cast %12 : i32 to index
    %c0_14 = arith.constant 0 : index
    %16 = vector.load %arg10[%15, %c0_14] : memref<64x384xf32, #tpu.memory_space<vmem>>, vector<8x128xf32>
    %17 = arith.addf %16, %14 : vector<8x128xf32>
    %18 = arith.negf %17 : vector<8x128xf32>
    %19 = math.exp %18 : vector<8x128xf32>
    %cst_15 = arith.constant 1.000000e+00 : f32
    %20 = vector.broadcast %cst_15 : f32 to vector<8x128xf32>
    %21 = arith.addf %20, %19 : vector<8x128xf32>
    %22 = arith.divf %20, %21 : vector<8x128xf32>
    %c0_16 = arith.constant 0 : index
    %c128 = arith.constant 128 : index
    %23 = vector.load %arg4[%c0_16, %c128] : memref<128x384xf32, #tpu.memory_space<vmem>>, vector<128x128xf32>
    %cst_17 = arith.constant dense<0.000000e+00> : vector<8x128xf32>
    %24 = tpu.matmul %10, %23, %cst_17 {dimension_numbers = #tpu.dot_dimension_numbers<[1], [0], [0], [1], [0, 0, 1, 1], [], []>} : vector<8x128xf32>, vector<128x128xf32>, vector<8x128xf32> -> vector<8x128xf32>
    %25 = arith.index_cast %12 : i32 to index
    %c128_18 = arith.constant 128 : index
    %26 = vector.load %arg10[%25, %c128_18] : memref<64x384xf32, #tpu.memory_space<vmem>>, vector<8x128xf32>
    %27 = arith.addf %26, %24 : vector<8x128xf32>
    %28 = arith.negf %27 : vector<8x128xf32>
    %29 = math.exp %28 : vector<8x128xf32>
    %cst_19 = arith.constant 1.000000e+00 : f32
    %30 = vector.broadcast %cst_19 : f32 to vector<8x128xf32>
    %31 = arith.addf %30, %29 : vector<8x128xf32>
    %32 = arith.divf %30, %31 : vector<8x128xf32>
    %c0_20 = arith.constant 0 : index
    %c256 = arith.constant 256 : index
    %33 = vector.load %arg4[%c0_20, %c256] : memref<128x384xf32, #tpu.memory_space<vmem>>, vector<128x128xf32>
    %cst_21 = arith.constant dense<0.000000e+00> : vector<8x128xf32>
    %34 = tpu.matmul %10, %33, %cst_21 {dimension_numbers = #tpu.dot_dimension_numbers<[1], [0], [0], [1], [0, 0, 1, 1], [], []>} : vector<8x128xf32>, vector<128x128xf32>, vector<8x128xf32> -> vector<8x128xf32>
    %35 = arith.index_cast %12 : i32 to index
    %c256_22 = arith.constant 256 : index
    %36 = vector.load %arg10[%35, %c256_22] : memref<64x384xf32, #tpu.memory_space<vmem>>, vector<8x128xf32>
    %37 = arith.addf %34, %9 : vector<8x128xf32>
    %38 = arith.mulf %22, %37 : vector<8x128xf32>
    %39 = arith.addf %36, %38 : vector<8x128xf32>
    %40 = math.tanh %39 : vector<8x128xf32>
    %41 = arith.subf %10, %40 : vector<8x128xf32>
    %42 = arith.mulf %32, %41 : vector<8x128xf32>
    %43 = arith.addf %40, %42 : vector<8x128xf32>
    %c1_i32 = arith.constant 1 : i32
    %c8_i32_23 = arith.constant 8 : i32
    %44 = arith.muli %c1_i32, %c8_i32_23 : i32
    %45 = tpu.assume_multiple %44, 8 : i32
    %c0_24 = arith.constant 0 : index
    %c0_25 = arith.constant 0 : index
    %46 = vector.load %arg4[%c0_24, %c0_25] : memref<128x384xf32, #tpu.memory_space<vmem>>, vector<128x128xf32>
    %cst_26 = arith.constant dense<0.000000e+00> : vector<8x128xf32>
    %47 = tpu.matmul %43, %46, %cst_26 {dimension_numbers = #tpu.dot_dimension_numbers<[1], [0], [0], [1], [0, 0, 1, 1], [], []>} : vector<8x128xf32>, vector<128x128xf32>, vector<8x128xf32> -> vector<8x128xf32>
    %48 = arith.index_cast %45 : i32 to index
    %c0_27 = arith.constant 0 : index
    %49 = vector.load %arg10[%48, %c0_27] : memref<64x384xf32, #tpu.memory_space<vmem>>, vector<8x128xf32>
    %50 = arith.addf %49, %47 : vector<8x128xf32>
    %51 = arith.negf %50 : vector<8x128xf32>
    %52 = math.exp %51 : vector<8x128xf32>
    %cst_28 = arith.constant 1.000000e+00 : f32
    %53 = vector.broadcast %cst_28 : f32 to vector<8x128xf32>
    %54 = arith.addf %53, %52 : vector<8x128xf32>
    %55 = arith.divf %53, %54 : vector<8x128xf32>
    %c0_29 = arith.constant 0 : index
    %c128_30 = arith.constant 128 : index
    %56 = vector.load %arg4[%c0_29, %c128_30] : memref<128x384xf32, #tpu.memory_space<vmem>>, vector<128x128xf32>
    %cst_31 = arith.constant dense<0.000000e+00> : vector<8x128xf32>
    %57 = tpu.matmul %43, %56, %cst_31 {dimension_numbers = #tpu.dot_dimension_numbers<[1], [0], [0], [1], [0, 0, 1, 1], [], []>} : vector<8x128xf32>, vector<128x128xf32>, vector<8x128xf32> -> vector<8x128xf32>
    %58 = arith.index_cast %45 : i32 to index
    %c128_32 = arith.constant 128 : index
    %59 = vector.load %arg10[%58, %c128_32] : memref<64x384xf32, #tpu.memory_space<vmem>>, vector<8x128xf32>
    %60 = arith.addf %59, %57 : vector<8x128xf32>
    %61 = arith.negf %60 : vector<8x128xf32>
    %62 = math.exp %61 : vector<8x128xf32>
    %cst_33 = arith.constant 1.000000e+00 : f32
    %63 = vector.broadcast %cst_33 : f32 to vector<8x128xf32>
    %64 = arith.addf %63, %62 : vector<8x128xf32>
    %65 = arith.divf %63, %64 : vector<8x128xf32>
    %c0_34 = arith.constant 0 : index
    %c256_35 = arith.constant 256 : index
    %66 = vector.load %arg4[%c0_34, %c256_35] : memref<128x384xf32, #tpu.memory_space<vmem>>, vector<128x128xf32>
    %cst_36 = arith.constant dense<0.000000e+00> : vector<8x128xf32>
    %67 = tpu.matmul %43, %66, %cst_36 {dimension_numbers = #tpu.dot_dimension_numbers<[1], [0], [0], [1], [0, 0, 1, 1], [], []>} : vector<8x128xf32>, vector<128x128xf32>, vector<8x128xf32> -> vector<8x128xf32>
    %68 = arith.index_cast %45 : i32 to index
    %c256_37 = arith.constant 256 : index
    %69 = vector.load %arg10[%68, %c256_37] : memref<64x384xf32, #tpu.memory_space<vmem>>, vector<8x128xf32>
    %70 = arith.addf %67, %9 : vector<8x128xf32>
    %71 = arith.mulf %55, %70 : vector<8x128xf32>
    %72 = arith.addf %69, %71 : vector<8x128xf32>
    %73 = math.tanh %72 : vector<8x128xf32>
    %74 = arith.subf %43, %73 : vector<8x128xf32>
    %75 = arith.mulf %65, %74 : vector<8x128xf32>
    %76 = arith.addf %73, %75 : vector<8x128xf32>
    %c2_i32 = arith.constant 2 : i32
    %c8_i32_38 = arith.constant 8 : i32
    %77 = arith.muli %c2_i32, %c8_i32_38 : i32
    %78 = tpu.assume_multiple %77, 8 : i32
    %c0_39 = arith.constant 0 : index
    %c0_40 = arith.constant 0 : index
    %79 = vector.load %arg4[%c0_39, %c0_40] : memref<128x384xf32, #tpu.memory_space<vmem>>, vector<128x128xf32>
    %cst_41 = arith.constant dense<0.000000e+00> : vector<8x128xf32>
    %80 = tpu.matmul %76, %79, %cst_41 {dimension_numbers = #tpu.dot_dimension_numbers<[1], [0], [0], [1], [0, 0, 1, 1], [], []>} : vector<8x128xf32>, vector<128x128xf32>, vector<8x128xf32> -> vector<8x128xf32>
    %81 = arith.index_cast %78 : i32 to index
    %c0_42 = arith.constant 0 : index
    %82 = vector.load %arg10[%81, %c0_42] : memref<64x384xf32, #tpu.memory_space<vmem>>, vector<8x128xf32>
    %83 = arith.addf %82, %80 : vector<8x128xf32>
    %84 = arith.negf %83 : vector<8x128xf32>
    %85 = math.exp %84 : vector<8x128xf32>
    %cst_43 = arith.constant 1.000000e+00 : f32
    %86 = vector.broadcast %cst_43 : f32 to vector<8x128xf32>
    %87 = arith.addf %86, %85 : vector<8x128xf32>
    %88 = arith.divf %86, %87 : vector<8x128xf32>
    %c0_44 = arith.constant 0 : index
    %c128_45 = arith.constant 128 : index
    %89 = vector.load %arg4[%c0_44, %c128_45] : memref<128x384xf32, #tpu.memory_space<vmem>>, vector<128x128xf32>
    %cst_46 = arith.constant dense<0.000000e+00> : vector<8x128xf32>
    %90 = tpu.matmul %76, %89, %cst_46 {dimension_numbers = #tpu.dot_dimension_numbers<[1], [0], [0], [1], [0, 0, 1, 1], [], []>} : vector<8x128xf32>, vector<128x128xf32>, vector<8x128xf32> -> vector<8x128xf32>
    %91 = arith.index_cast %78 : i32 to index
    %c128_47 = arith.constant 128 : index
    %92 = vector.load %arg10[%91, %c128_47] : memref<64x384xf32, #tpu.memory_space<vmem>>, vector<8x128xf32>
    %93 = arith.addf %92, %90 : vector<8x128xf32>
    %94 = arith.negf %93 : vector<8x128xf32>
    %95 = math.exp %94 : vector<8x128xf32>
    %cst_48 = arith.constant 1.000000e+00 : f32
    %96 = vector.broadcast %cst_48 : f32 to vector<8x128xf32>
    %97 = arith.addf %96, %95 : vector<8x128xf32>
    %98 = arith.divf %96, %97 : vector<8x128xf32>
    %c0_49 = arith.constant 0 : index
    %c256_50 = arith.constant 256 : index
    %99 = vector.load %arg4[%c0_49, %c256_50] : memref<128x384xf32, #tpu.memory_space<vmem>>, vector<128x128xf32>
    %cst_51 = arith.constant dense<0.000000e+00> : vector<8x128xf32>
    %100 = tpu.matmul %76, %99, %cst_51 {dimension_numbers = #tpu.dot_dimension_numbers<[1], [0], [0], [1], [0, 0, 1, 1], [], []>} : vector<8x128xf32>, vector<128x128xf32>, vector<8x128xf32> -> vector<8x128xf32>
    %101 = arith.index_cast %78 : i32 to index
    %c256_52 = arith.constant 256 : index
    %102 = vector.load %arg10[%101, %c256_52] : memref<64x384xf32, #tpu.memory_space<vmem>>, vector<8x128xf32>
    %103 = arith.addf %100, %9 : vector<8x128xf32>
    %104 = arith.mulf %88, %103 : vector<8x128xf32>
    %105 = arith.addf %102, %104 : vector<8x128xf32>
    %106 = math.tanh %105 : vector<8x128xf32>
    %107 = arith.subf %76, %106 : vector<8x128xf32>
    %108 = arith.mulf %98, %107 : vector<8x128xf32>
    %109 = arith.addf %106, %108 : vector<8x128xf32>
    %c3_i32 = arith.constant 3 : i32
    %c8_i32_53 = arith.constant 8 : i32
    %110 = arith.muli %c3_i32, %c8_i32_53 : i32
    %111 = tpu.assume_multiple %110, 8 : i32
    %c0_54 = arith.constant 0 : index
    %c0_55 = arith.constant 0 : index
    %112 = vector.load %arg4[%c0_54, %c0_55] : memref<128x384xf32, #tpu.memory_space<vmem>>, vector<128x128xf32>
    %cst_56 = arith.constant dense<0.000000e+00> : vector<8x128xf32>
    %113 = tpu.matmul %109, %112, %cst_56 {dimension_numbers = #tpu.dot_dimension_numbers<[1], [0], [0], [1], [0, 0, 1, 1], [], []>} : vector<8x128xf32>, vector<128x128xf32>, vector<8x128xf32> -> vector<8x128xf32>
    %114 = arith.index_cast %111 : i32 to index
    %c0_57 = arith.constant 0 : index
    %115 = vector.load %arg10[%114, %c0_57] : memref<64x384xf32, #tpu.memory_space<vmem>>, vector<8x128xf32>
    %116 = arith.addf %115, %113 : vector<8x128xf32>
    %117 = arith.negf %116 : vector<8x128xf32>
    %118 = math.exp %117 : vector<8x128xf32>
    %cst_58 = arith.constant 1.000000e+00 : f32
    %119 = vector.broadcast %cst_58 : f32 to vector<8x128xf32>
    %120 = arith.addf %119, %118 : vector<8x128xf32>
    %121 = arith.divf %119, %120 : vector<8x128xf32>
    %c0_59 = arith.constant 0 : index
    %c128_60 = arith.constant 128 : index
    %122 = vector.load %arg4[%c0_59, %c128_60] : memref<128x384xf32, #tpu.memory_space<vmem>>, vector<128x128xf32>
    %cst_61 = arith.constant dense<0.000000e+00> : vector<8x128xf32>
    %123 = tpu.matmul %109, %122, %cst_61 {dimension_numbers = #tpu.dot_dimension_numbers<[1], [0], [0], [1], [0, 0, 1, 1], [], []>} : vector<8x128xf32>, vector<128x128xf32>, vector<8x128xf32> -> vector<8x128xf32>
    %124 = arith.index_cast %111 : i32 to index
    %c128_62 = arith.constant 128 : index
    %125 = vector.load %arg10[%124, %c128_62] : memref<64x384xf32, #tpu.memory_space<vmem>>, vector<8x128xf32>
    %126 = arith.addf %125, %123 : vector<8x128xf32>
    %127 = arith.negf %126 : vector<8x128xf32>
    %128 = math.exp %127 : vector<8x128xf32>
    %cst_63 = arith.constant 1.000000e+00 : f32
    %129 = vector.broadcast %cst_63 : f32 to vector<8x128xf32>
    %130 = arith.addf %129, %128 : vector<8x128xf32>
    %131 = arith.divf %129, %130 : vector<8x128xf32>
    %c0_64 = arith.constant 0 : index
    %c256_65 = arith.constant 256 : index
    %132 = vector.load %arg4[%c0_64, %c256_65] : memref<128x384xf32, #tpu.memory_space<vmem>>, vector<128x128xf32>
    %cst_66 = arith.constant dense<0.000000e+00> : vector<8x128xf32>
    %133 = tpu.matmul %109, %132, %cst_66 {dimension_numbers = #tpu.dot_dimension_numbers<[1], [0], [0], [1], [0, 0, 1, 1], [], []>} : vector<8x128xf32>, vector<128x128xf32>, vector<8x128xf32> -> vector<8x128xf32>
    %134 = arith.index_cast %111 : i32 to index
    %c256_67 = arith.constant 256 : index
    %135 = vector.load %arg10[%134, %c256_67] : memref<64x384xf32, #tpu.memory_space<vmem>>, vector<8x128xf32>
    %136 = arith.addf %133, %9 : vector<8x128xf32>
    %137 = arith.mulf %121, %136 : vector<8x128xf32>
    %138 = arith.addf %135, %137 : vector<8x128xf32>
    %139 = math.tanh %138 : vector<8x128xf32>
    %140 = arith.subf %109, %139 : vector<8x128xf32>
    %141 = arith.mulf %131, %140 : vector<8x128xf32>
    %142 = arith.addf %139, %141 : vector<8x128xf32>
    %c4_i32 = arith.constant 4 : i32
    %c8_i32_68 = arith.constant 8 : i32
    %143 = arith.muli %c4_i32, %c8_i32_68 : i32
    %144 = tpu.assume_multiple %143, 8 : i32
    %c0_69 = arith.constant 0 : index
    %c0_70 = arith.constant 0 : index
    %145 = vector.load %arg4[%c0_69, %c0_70] : memref<128x384xf32, #tpu.memory_space<vmem>>, vector<128x128xf32>
    %cst_71 = arith.constant dense<0.000000e+00> : vector<8x128xf32>
    %146 = tpu.matmul %142, %145, %cst_71 {dimension_numbers = #tpu.dot_dimension_numbers<[1], [0], [0], [1], [0, 0, 1, 1], [], []>} : vector<8x128xf32>, vector<128x128xf32>, vector<8x128xf32> -> vector<8x128xf32>
    %147 = arith.index_cast %144 : i32 to index
    %c0_72 = arith.constant 0 : index
    %148 = vector.load %arg10[%147, %c0_72] : memref<64x384xf32, #tpu.memory_space<vmem>>, vector<8x128xf32>
    %149 = arith.addf %148, %146 : vector<8x128xf32>
    %150 = arith.negf %149 : vector<8x128xf32>
    %151 = math.exp %150 : vector<8x128xf32>
    %cst_73 = arith.constant 1.000000e+00 : f32
    %152 = vector.broadcast %cst_73 : f32 to vector<8x128xf32>
    %153 = arith.addf %152, %151 : vector<8x128xf32>
    %154 = arith.divf %152, %153 : vector<8x128xf32>
    %c0_74 = arith.constant 0 : index
    %c128_75 = arith.constant 128 : index
    %155 = vector.load %arg4[%c0_74, %c128_75] : memref<128x384xf32, #tpu.memory_space<vmem>>, vector<128x128xf32>
    %cst_76 = arith.constant dense<0.000000e+00> : vector<8x128xf32>
    %156 = tpu.matmul %142, %155, %cst_76 {dimension_numbers = #tpu.dot_dimension_numbers<[1], [0], [0], [1], [0, 0, 1, 1], [], []>} : vector<8x128xf32>, vector<128x128xf32>, vector<8x128xf32> -> vector<8x128xf32>
    %157 = arith.index_cast %144 : i32 to index
    %c128_77 = arith.constant 128 : index
    %158 = vector.load %arg10[%157, %c128_77] : memref<64x384xf32, #tpu.memory_space<vmem>>, vector<8x128xf32>
    %159 = arith.addf %158, %156 : vector<8x128xf32>
    %160 = arith.negf %159 : vector<8x128xf32>
    %161 = math.exp %160 : vector<8x128xf32>
    %cst_78 = arith.constant 1.000000e+00 : f32
    %162 = vector.broadcast %cst_78 : f32 to vector<8x128xf32>
    %163 = arith.addf %162, %161 : vector<8x128xf32>
    %164 = arith.divf %162, %163 : vector<8x128xf32>
    %c0_79 = arith.constant 0 : index
    %c256_80 = arith.constant 256 : index
    %165 = vector.load %arg4[%c0_79, %c256_80] : memref<128x384xf32, #tpu.memory_space<vmem>>, vector<128x128xf32>
    %cst_81 = arith.constant dense<0.000000e+00> : vector<8x128xf32>
    %166 = tpu.matmul %142, %165, %cst_81 {dimension_numbers = #tpu.dot_dimension_numbers<[1], [0], [0], [1], [0, 0, 1, 1], [], []>} : vector<8x128xf32>, vector<128x128xf32>, vector<8x128xf32> -> vector<8x128xf32>
    %167 = arith.index_cast %144 : i32 to index
    %c256_82 = arith.constant 256 : index
    %168 = vector.load %arg10[%167, %c256_82] : memref<64x384xf32, #tpu.memory_space<vmem>>, vector<8x128xf32>
    %169 = arith.addf %166, %9 : vector<8x128xf32>
    %170 = arith.mulf %154, %169 : vector<8x128xf32>
    %171 = arith.addf %168, %170 : vector<8x128xf32>
    %172 = math.tanh %171 : vector<8x128xf32>
    %173 = arith.subf %142, %172 : vector<8x128xf32>
    %174 = arith.mulf %164, %173 : vector<8x128xf32>
    %175 = arith.addf %172, %174 : vector<8x128xf32>
    %c5_i32 = arith.constant 5 : i32
    %c8_i32_83 = arith.constant 8 : i32
    %176 = arith.muli %c5_i32, %c8_i32_83 : i32
    %177 = tpu.assume_multiple %176, 8 : i32
    %c0_84 = arith.constant 0 : index
    %c0_85 = arith.constant 0 : index
    %178 = vector.load %arg4[%c0_84, %c0_85] : memref<128x384xf32, #tpu.memory_space<vmem>>, vector<128x128xf32>
    %cst_86 = arith.constant dense<0.000000e+00> : vector<8x128xf32>
    %179 = tpu.matmul %175, %178, %cst_86 {dimension_numbers = #tpu.dot_dimension_numbers<[1], [0], [0], [1], [0, 0, 1, 1], [], []>} : vector<8x128xf32>, vector<128x128xf32>, vector<8x128xf32> -> vector<8x128xf32>
    %180 = arith.index_cast %177 : i32 to index
    %c0_87 = arith.constant 0 : index
    %181 = vector.load %arg10[%180, %c0_87] : memref<64x384xf32, #tpu.memory_space<vmem>>, vector<8x128xf32>
    %182 = arith.addf %181, %179 : vector<8x128xf32>
    %183 = arith.negf %182 : vector<8x128xf32>
    %184 = math.exp %183 : vector<8x128xf32>
    %cst_88 = arith.constant 1.000000e+00 : f32
    %185 = vector.broadcast %cst_88 : f32 to vector<8x128xf32>
    %186 = arith.addf %185, %184 : vector<8x128xf32>
    %187 = arith.divf %185, %186 : vector<8x128xf32>
    %c0_89 = arith.constant 0 : index
    %c128_90 = arith.constant 128 : index
    %188 = vector.load %arg4[%c0_89, %c128_90] : memref<128x384xf32, #tpu.memory_space<vmem>>, vector<128x128xf32>
    %cst_91 = arith.constant dense<0.000000e+00> : vector<8x128xf32>
    %189 = tpu.matmul %175, %188, %cst_91 {dimension_numbers = #tpu.dot_dimension_numbers<[1], [0], [0], [1], [0, 0, 1, 1], [], []>} : vector<8x128xf32>, vector<128x128xf32>, vector<8x128xf32> -> vector<8x128xf32>
    %190 = arith.index_cast %177 : i32 to index
    %c128_92 = arith.constant 128 : index
    %191 = vector.load %arg10[%190, %c128_92] : memref<64x384xf32, #tpu.memory_space<vmem>>, vector<8x128xf32>
    %192 = arith.addf %191, %189 : vector<8x128xf32>
    %193 = arith.negf %192 : vector<8x128xf32>
    %194 = math.exp %193 : vector<8x128xf32>
    %cst_93 = arith.constant 1.000000e+00 : f32
    %195 = vector.broadcast %cst_93 : f32 to vector<8x128xf32>
    %196 = arith.addf %195, %194 : vector<8x128xf32>
    %197 = arith.divf %195, %196 : vector<8x128xf32>
    %c0_94 = arith.constant 0 : index
    %c256_95 = arith.constant 256 : index
    %198 = vector.load %arg4[%c0_94, %c256_95] : memref<128x384xf32, #tpu.memory_space<vmem>>, vector<128x128xf32>
    %cst_96 = arith.constant dense<0.000000e+00> : vector<8x128xf32>
    %199 = tpu.matmul %175, %198, %cst_96 {dimension_numbers = #tpu.dot_dimension_numbers<[1], [0], [0], [1], [0, 0, 1, 1], [], []>} : vector<8x128xf32>, vector<128x128xf32>, vector<8x128xf32> -> vector<8x128xf32>
    %200 = arith.index_cast %177 : i32 to index
    %c256_97 = arith.constant 256 : index
    %201 = vector.load %arg10[%200, %c256_97] : memref<64x384xf32, #tpu.memory_space<vmem>>, vector<8x128xf32>
    %202 = arith.addf %199, %9 : vector<8x128xf32>
    %203 = arith.mulf %187, %202 : vector<8x128xf32>
    %204 = arith.addf %201, %203 : vector<8x128xf32>
    %205 = math.tanh %204 : vector<8x128xf32>
    %206 = arith.subf %175, %205 : vector<8x128xf32>
    %207 = arith.mulf %197, %206 : vector<8x128xf32>
    %208 = arith.addf %205, %207 : vector<8x128xf32>
    %c6_i32 = arith.constant 6 : i32
    %c8_i32_98 = arith.constant 8 : i32
    %209 = arith.muli %c6_i32, %c8_i32_98 : i32
    %210 = tpu.assume_multiple %209, 8 : i32
    %c0_99 = arith.constant 0 : index
    %c0_100 = arith.constant 0 : index
    %211 = vector.load %arg4[%c0_99, %c0_100] : memref<128x384xf32, #tpu.memory_space<vmem>>, vector<128x128xf32>
    %cst_101 = arith.constant dense<0.000000e+00> : vector<8x128xf32>
    %212 = tpu.matmul %208, %211, %cst_101 {dimension_numbers = #tpu.dot_dimension_numbers<[1], [0], [0], [1], [0, 0, 1, 1], [], []>} : vector<8x128xf32>, vector<128x128xf32>, vector<8x128xf32> -> vector<8x128xf32>
    %213 = arith.index_cast %210 : i32 to index
    %c0_102 = arith.constant 0 : index
    %214 = vector.load %arg10[%213, %c0_102] : memref<64x384xf32, #tpu.memory_space<vmem>>, vector<8x128xf32>
    %215 = arith.addf %214, %212 : vector<8x128xf32>
    %216 = arith.negf %215 : vector<8x128xf32>
    %217 = math.exp %216 : vector<8x128xf32>
    %cst_103 = arith.constant 1.000000e+00 : f32
    %218 = vector.broadcast %cst_103 : f32 to vector<8x128xf32>
    %219 = arith.addf %218, %217 : vector<8x128xf32>
    %220 = arith.divf %218, %219 : vector<8x128xf32>
    %c0_104 = arith.constant 0 : index
    %c128_105 = arith.constant 128 : index
    %221 = vector.load %arg4[%c0_104, %c128_105] : memref<128x384xf32, #tpu.memory_space<vmem>>, vector<128x128xf32>
    %cst_106 = arith.constant dense<0.000000e+00> : vector<8x128xf32>
    %222 = tpu.matmul %208, %221, %cst_106 {dimension_numbers = #tpu.dot_dimension_numbers<[1], [0], [0], [1], [0, 0, 1, 1], [], []>} : vector<8x128xf32>, vector<128x128xf32>, vector<8x128xf32> -> vector<8x128xf32>
    %223 = arith.index_cast %210 : i32 to index
    %c128_107 = arith.constant 128 : index
    %224 = vector.load %arg10[%223, %c128_107] : memref<64x384xf32, #tpu.memory_space<vmem>>, vector<8x128xf32>
    %225 = arith.addf %224, %222 : vector<8x128xf32>
    %226 = arith.negf %225 : vector<8x128xf32>
    %227 = math.exp %226 : vector<8x128xf32>
    %cst_108 = arith.constant 1.000000e+00 : f32
    %228 = vector.broadcast %cst_108 : f32 to vector<8x128xf32>
    %229 = arith.addf %228, %227 : vector<8x128xf32>
    %230 = arith.divf %228, %229 : vector<8x128xf32>
    %c0_109 = arith.constant 0 : index
    %c256_110 = arith.constant 256 : index
    %231 = vector.load %arg4[%c0_109, %c256_110] : memref<128x384xf32, #tpu.memory_space<vmem>>, vector<128x128xf32>
    %cst_111 = arith.constant dense<0.000000e+00> : vector<8x128xf32>
    %232 = tpu.matmul %208, %231, %cst_111 {dimension_numbers = #tpu.dot_dimension_numbers<[1], [0], [0], [1], [0, 0, 1, 1], [], []>} : vector<8x128xf32>, vector<128x128xf32>, vector<8x128xf32> -> vector<8x128xf32>
    %233 = arith.index_cast %210 : i32 to index
    %c256_112 = arith.constant 256 : index
    %234 = vector.load %arg10[%233, %c256_112] : memref<64x384xf32, #tpu.memory_space<vmem>>, vector<8x128xf32>
    %235 = arith.addf %232, %9 : vector<8x128xf32>
    %236 = arith.mulf %220, %235 : vector<8x128xf32>
    %237 = arith.addf %234, %236 : vector<8x128xf32>
    %238 = math.tanh %237 : vector<8x128xf32>
    %239 = arith.subf %208, %238 : vector<8x128xf32>
    %240 = arith.mulf %230, %239 : vector<8x128xf32>
    %241 = arith.addf %238, %240 : vector<8x128xf32>
    %c7_i32 = arith.constant 7 : i32
    %c8_i32_113 = arith.constant 8 : i32
    %242 = arith.muli %c7_i32, %c8_i32_113 : i32
    %243 = tpu.assume_multiple %242, 8 : i32
    %c0_114 = arith.constant 0 : index
    %c0_115 = arith.constant 0 : index
    %244 = vector.load %arg4[%c0_114, %c0_115] : memref<128x384xf32, #tpu.memory_space<vmem>>, vector<128x128xf32>
    %cst_116 = arith.constant dense<0.000000e+00> : vector<8x128xf32>
    %245 = tpu.matmul %241, %244, %cst_116 {dimension_numbers = #tpu.dot_dimension_numbers<[1], [0], [0], [1], [0, 0, 1, 1], [], []>} : vector<8x128xf32>, vector<128x128xf32>, vector<8x128xf32> -> vector<8x128xf32>
    %246 = arith.index_cast %243 : i32 to index
    %c0_117 = arith.constant 0 : index
    %247 = vector.load %arg10[%246, %c0_117] : memref<64x384xf32, #tpu.memory_space<vmem>>, vector<8x128xf32>
    %248 = arith.addf %247, %245 : vector<8x128xf32>
    %249 = arith.negf %248 : vector<8x128xf32>
    %250 = math.exp %249 : vector<8x128xf32>
    %cst_118 = arith.constant 1.000000e+00 : f32
    %251 = vector.broadcast %cst_118 : f32 to vector<8x128xf32>
    %252 = arith.addf %251, %250 : vector<8x128xf32>
    %253 = arith.divf %251, %252 : vector<8x128xf32>
    %c0_119 = arith.constant 0 : index
    %c128_120 = arith.constant 128 : index
    %254 = vector.load %arg4[%c0_119, %c128_120] : memref<128x384xf32, #tpu.memory_space<vmem>>, vector<128x128xf32>
    %cst_121 = arith.constant dense<0.000000e+00> : vector<8x128xf32>
    %255 = tpu.matmul %241, %254, %cst_121 {dimension_numbers = #tpu.dot_dimension_numbers<[1], [0], [0], [1], [0, 0, 1, 1], [], []>} : vector<8x128xf32>, vector<128x128xf32>, vector<8x128xf32> -> vector<8x128xf32>
    %256 = arith.index_cast %243 : i32 to index
    %c128_122 = arith.constant 128 : index
    %257 = vector.load %arg10[%256, %c128_122] : memref<64x384xf32, #tpu.memory_space<vmem>>, vector<8x128xf32>
    %258 = arith.addf %257, %255 : vector<8x128xf32>
    %259 = arith.negf %258 : vector<8x128xf32>
    %260 = math.exp %259 : vector<8x128xf32>
    %cst_123 = arith.constant 1.000000e+00 : f32
    %261 = vector.broadcast %cst_123 : f32 to vector<8x128xf32>
    %262 = arith.addf %261, %260 : vector<8x128xf32>
    %263 = arith.divf %261, %262 : vector<8x128xf32>
    %c0_124 = arith.constant 0 : index
    %c256_125 = arith.constant 256 : index
    %264 = vector.load %arg4[%c0_124, %c256_125] : memref<128x384xf32, #tpu.memory_space<vmem>>, vector<128x128xf32>
    %cst_126 = arith.constant dense<0.000000e+00> : vector<8x128xf32>
    %265 = tpu.matmul %241, %264, %cst_126 {dimension_numbers = #tpu.dot_dimension_numbers<[1], [0], [0], [1], [0, 0, 1, 1], [], []>} : vector<8x128xf32>, vector<128x128xf32>, vector<8x128xf32> -> vector<8x128xf32>
    %266 = arith.index_cast %243 : i32 to index
    %c256_127 = arith.constant 256 : index
    %267 = vector.load %arg10[%266, %c256_127] : memref<64x384xf32, #tpu.memory_space<vmem>>, vector<8x128xf32>
    %268 = arith.addf %265, %9 : vector<8x128xf32>
    %269 = arith.mulf %253, %268 : vector<8x128xf32>
    %270 = arith.addf %267, %269 : vector<8x128xf32>
    %271 = math.tanh %270 : vector<8x128xf32>
    %272 = arith.subf %241, %271 : vector<8x128xf32>
    %273 = arith.mulf %263, %272 : vector<8x128xf32>
    %274 = arith.addf %271, %273 : vector<8x128xf32>
    %c8_i32_128 = arith.constant 8 : i32
    %c0_129 = arith.constant 0 : index
    %c0_130 = arith.constant 0 : index
    %275 = vector.load %arg9[%c0_129, %c0_130] : memref<8x128xf32, #tpu.memory_space<vmem>>, vector<8x128xf32>
    tpu.vector_store %arg9[%c0_129, %c0_130], %274 {strides = array<i32>} : memref<8x128xf32, #tpu.memory_space<vmem>>, vector<8x128xf32>,
    %c0_i32_131 = arith.constant 0 : i32
    %276 = arith.cmpi eq, %arg1, %c0_i32_131 : i32
    %277 = arith.extui %276 : i1 to i32
    %c0_i32_132 = arith.constant 0 : i32
    %278 = arith.cmpi ne, %277, %c0_i32_132 : i32
    scf.if %278 {
      %c0_133 = arith.constant 0 : index
      %c0_134 = arith.constant 0 : index
      %279 = vector.load %arg6[%c0_133, %c0_134] : memref<128x128xf32, #tpu.memory_space<vmem>>, vector<128x128xf32>
      %cst_135 = arith.constant dense<0.000000e+00> : vector<8x128xf32>
      %280 = tpu.matmul %274, %279, %cst_135 {dimension_numbers = #tpu.dot_dimension_numbers<[1], [0], [0], [1], [0, 0, 1, 1], [], []>} : vector<8x128xf32>, vector<128x128xf32>, vector<8x128xf32> -> vector<8x128xf32>
      %c0_136 = arith.constant 0 : index
      %c0_137 = arith.constant 0 : index
      %281 = vector.load %arg7[%c0_136, %c0_137] : memref<1x128xf32, #tpu.memory_space<vmem>>, vector<1x128xf32>
      %282 = vector.broadcast %281 : vector<1x128xf32> to vector<8x128xf32>
      %283 = arith.addf %280, %282 : vector<8x128xf32>
      %c0_138 = arith.constant 0 : index
      %c0_139 = arith.constant 0 : index
      %284 = vector.load %arg8[%c0_138, %c0_139] : memref<8x128xf32, #tpu.memory_space<vmem>>, vector<8x128xf32>
      tpu.vector_store %arg8[%c0_138, %c0_139], %283 {strides = array<i32>} : memref<8x128xf32, #tpu.memory_space<vmem>>, vector<8x128xf32>,
    } else {
    }
    return
  }
  func.func @transform_0(%arg0: i32, %arg1: i32) -> (i32, i32) {
    %c1_i32 = arith.constant 1 : i32
    %0 = arith.muli %arg0, %c1_i32 : i32
    %1 = arith.addi %0, %arg1 : i32
    %c0_i32 = arith.constant 0 : i32
    %c0_i32_0 = arith.constant 0 : i32
    return %1, %c0_i32 : i32, i32
  }
  func.func @transform_1(%arg0: i32, %arg1: i32) -> (i32, i32) {
    %c0_i32 = arith.constant 0 : i32
    %c0_i32_0 = arith.constant 0 : i32
    %c0_i32_1 = arith.constant 0 : i32
    return %c0_i32, %c0_i32_0 : i32, i32
  }
  func.func @transform_2(%arg0: i32, %arg1: i32) -> (i32, i32) {
    %c0_i32 = arith.constant 0 : i32
    %c0_i32_0 = arith.constant 0 : i32
    %c0_i32_1 = arith.constant 0 : i32
    return %c0_i32, %c0_i32_0 : i32, i32
  }
  func.func @transform_3(%arg0: i32, %arg1: i32) -> (i32, i32) {
    %c0_i32 = arith.constant 0 : i32
    %c0_i32_0 = arith.constant 0 : i32
    %c0_i32_1 = arith.constant 0 : i32
    return %c0_i32, %c0_i32_0 : i32, i32
  }
  func.func @transform_4(%arg0: i32, %arg1: i32) -> (i32, i32) {
    %c0_i32 = arith.constant 0 : i32
    %c0_i32_0 = arith.constant 0 : i32
    %c0_i32_1 = arith.constant 0 : i32
    return %c0_i32, %c0_i32_0 : i32, i32
  }
  func.func @transform_5(%arg0: i32, %arg1: i32) -> (i32, i32) {
    %c0_i32 = arith.constant 0 : i32
    %c0_i32_0 = arith.constant 0 : i32
    %c0_i32_1 = arith.constant 0 : i32
    return %c0_i32, %c0_i32_0 : i32, i32
  }
  func.func @transform_6(%arg0: i32, %arg1: i32) -> (i32, i32) {
    %c0_i32 = arith.constant 0 : i32
    %c0_i32_0 = arith.constant 0 : i32
    return %arg0, %c0_i32 : i32, i32
  }
}

</mosaic_0001>

<llo_original>
// kernel: tpu_custom_call.1
$region0: #{tpu_custom_call.1}
  #allocation0 [shape = 'u32[]', space=smem, size = 0x4, offset = 0x4, fixed_abs, tag = 'smem constant byte address 0x4 - core index']
  #allocation1 [shape = 'u32[144,128]{1,0:T(1,128)}', space=vmem, size = 0x12000, scoped, tag = 'internal scratch']
  #allocation2 [shape = 'f32[8,128]{1,0:T(8,128)}', space=vmem, size = 0x1000, scoped, tag = 'scratch operand']
  #allocation3 [shape = 'f32[64,384]{1,0:T(8,128)}', space=vmem, size = 0x18000, scoped, tag = 'scratch operand']
  %s0 = inlined_call_operand.vmem [shape: f32[64,11], index: 0, kind: input, shape index: {}]
  %s1 = inlined_call_operand.vmem [shape: f32[11,384], index: 1, kind: input, shape index: {}]
  %s2 = inlined_call_operand.hbm [shape: f32[128,384], index: 2, kind: input, shape index: {}]
  %s3 = inlined_call_operand.vmem [shape: f32[1,128], index: 3, kind: input, shape index: {}]
  %s4 = inlined_call_operand.hbm [shape: f32[128,128], index: 4, kind: input, shape index: {}]
  %s5 = inlined_call_operand.vmem [shape: f32[1,128], index: 5, kind: input, shape index: {}]
  %s6 = inlined_call_operand.hbm [shape: f32[8,128], index: 6, kind: output, shape index: {}]
  %s7 = sld [smem:[#allocation0]]
  $region50: #{tpu_custom_call.1} parent=0
    _
  %s9 = ssub.s32 1, %s7
  %s10 = scalar_select 0, %s9, %s7
  $region1: #{tpu_custom_call.1} parent=0
    #allocation4 [shape = 'u8[196608]{0}', space=vmem, size = 0x30000, scoped, tag = 'input window, operand 2, single buffered']
    #allocation5 [shape = 's32[1]{0}', space=sflag, size = 0x4, scoped, tag = 'scoped memory for tpu_custom_call.1']
    #allocation6 [shape = 's32[1]{0}', space=sflag, size = 0x4, scoped, tag = 'scoped memory for tpu_custom_call.1']
    #allocation7 [shape = 'u8[65536]{0}', space=vmem, size = 0x10000, scoped, tag = 'input window, operand 4, single buffered']
    #allocation8 [shape = 's32[1]{0}', space=sflag, size = 0x4, scoped, tag = 'scoped memory for tpu_custom_call.1']
    #allocation9 [shape = 'u8[4096]{0}', space=vmem, size = 0x1000, scoped, tag = 'output window, operand 0, single buffered']
    %11 = vsyncpa [#allocation5], 0
    %12 = vsyncpa [#allocation8], 0
    %13 = vsyncpa [#allocation6], 0
    // Predicated region
    $region2: #{tpu_custom_call.1} parent=1 // pred_check
      _
    $region3: #{tpu_custom_call.1} parent=1 // pred_check_branch
      %15 = sbr.rel (0) target = $region5
    $region4: #{tpu_custom_call.1} parent=1 // pred_region
      %s16 = sadd.s32 0, 0
      %s17 = smul.u32 8, %s16
      %p18 = scmp.lt.s32.totalorder %s17, 7
      %s19 = scalar_select %p18, %s17, 7
      %s20 = smul.addr %s19, 8
      %s21 = scalar_lea.vmem %s0, %s20
      %s22 = sadd.s32 0, 0
      %s23 = smul.u32 8, %s22
    $region5: #{tpu_custom_call.1} parent=1 // pred_fallthru
      _
    // Predicated region
    $region6: #{tpu_custom_call.1} parent=1 // pred_check
      _
    $region7: #{tpu_custom_call.1} parent=1 // pred_check_branch
      %25 = sbr.rel (0) target = $region9
    $region8: #{tpu_custom_call.1} parent=1 // pred_region
      _
    $region9: #{tpu_custom_call.1} parent=1 // pred_fallthru
      _
    // Predicated region
    $region10: #{tpu_custom_call.1} parent=1 // pred_check
      _
    $region11: #{tpu_custom_call.1} parent=1 // pred_check_branch
      %27 = sbr.rel (0) target = $region13
    $region12: #{tpu_custom_call.1} parent=1 // pred_region
      %s29 = ssub.s32 6144, 6144
      %30 = vsyncadd [#allocation5], %s29
      %s31 = sshll.u32 [#allocation4], 4
      %s32 = int_to_ptr.vmem [resolvable:$true] %s31
      %37 = dma.hbm_to_vmem [thread:$0]  %s2, 6144, %s32, [#allocation5], 384, 384, 24
    $region13: #{tpu_custom_call.1} parent=1 // pred_fallthru
      _
    // Predicated region
    $region14: #{tpu_custom_call.1} parent=1 // pred_check
      _
    $region15: #{tpu_custom_call.1} parent=1 // pred_check_branch
      %39 = sbr.rel (0) target = $region17
    $region16: #{tpu_custom_call.1} parent=1 // pred_region
      _
    $region17: #{tpu_custom_call.1} parent=1 // pred_fallthru
      _
    // Predicated region
    $region18: #{tpu_custom_call.1} parent=1 // pred_check
      _
    $region19: #{tpu_custom_call.1} parent=1 // pred_check_branch
      %41 = sbr.rel (0) target = $region21
    $region20: #{tpu_custom_call.1} parent=1 // pred_region
      %s43 = ssub.s32 2048, 2048
      %44 = vsyncadd [#allocation8], %s43
      %s45 = sshll.u32 [#allocation7], 4
      %s46 = int_to_ptr.vmem [resolvable:$true] %s45
      %51 = dma.hbm_to_vmem [thread:$0]  %s4, 2048, %s46, [#allocation8], 128, 128, 8
    $region21: #{tpu_custom_call.1} parent=1 // pred_fallthru
      _
    // Predicated region
    $region22: #{tpu_custom_call.1} parent=1 // pred_check
      _
    $region23: #{tpu_custom_call.1} parent=1 // pred_check_branch
      %53 = sbr.rel (0) target = $region25
    $region24: #{tpu_custom_call.1} parent=1 // pred_region
      _
    $region25: #{tpu_custom_call.1} parent=1 // pred_fallthru
      _
    // Predicated region
    $region26: #{tpu_custom_call.1} parent=1 // pred_check
      _
    $region27: #{tpu_custom_call.1} parent=1 // pred_check_branch
      %55 = sbr.rel (0) target = $region29
    $region28: #{tpu_custom_call.1} parent=1 // pred_region
      %56 = dma.done [#allocation5], 6144
    $region29: #{tpu_custom_call.1} parent=1 // pred_fallthru
      _
    // Predicated region
    $region30: #{tpu_custom_call.1} parent=1 // pred_check
      _
    $region31: #{tpu_custom_call.1} parent=1 // pred_check_branch
      %58 = sbr.rel (0) target = $region33
    $region32: #{tpu_custom_call.1} parent=1 // pred_region
      %59 = dma.done [#allocation8], 2048
    $region33: #{tpu_custom_call.1} parent=1 // pred_fallthru
      _
    %s60 = sadd.s32 0, 0
    %s61 = smul.u32 8, %s60
    %p62 = scmp.lt.s32.totalorder %s61, 7
    %s63 = scalar_select %p62, %s61, 7
    %s64 = smul.addr %s63, 8
    %s65 = scalar_lea.vmem %s0, %s64
    %s66 = sadd.s32 0, 0
    %s67 = smul.u32 8, %s66
    %p68 = scmp.lt.s32.totalorder %s67, 7
    %s69 = scalar_select %p68, %s67, 7
    %s70 = smul.addr %s69, 8
    %s71 = scalar_lea.vmem %s0, %s70
    %s72 = sadd.s32 0, 0
    %s73 = smul.u32 8, %s72
    %p74 = scmp.eq.s32.totalorder 0, 0
    // Predicated region
    $region34: #{tpu_custom_call.1} parent=1 // pred_check
      %p75 = pneg %p74
    $region35: #{tpu_custom_call.1} parent=1 // pred_check_branch
      %77 = sbr.rel (%p75) target = $region37
    $region36: #{tpu_custom_call.1} parent=1 // pred_region
      %78 = vst [vmem:[#allocation2] sm:$0xff] 0.0
    $region37: #{tpu_custom_call.1} parent=1 // pred_fallthru
      _
    %v79 = vld [vmem:[%s71] sm:$0xff]
    %v80 = vld [vmem:[%s71 + $0x8] sm:$0xff]
    %v81 = vld [vmem:[%s71 + $0x10] sm:$0xff]
    %v82 = vld [vmem:[%s71 + $0x18] sm:$0xff]
    %v83 = vld [vmem:[%s71 + $0x20] sm:$0xff]
    %v84 = vld [vmem:[%s71 + $0x28] sm:$0xff]
    %v85 = vld [vmem:[%s71 + $0x30] sm:$0xff]
    %v86 = vld [vmem:[%s71 + $0x38] sm:$0xff]
    %v87 = vld [vmem:[%s1] sm:$0xff]
    %v88 = vld [vmem:[%s1 + $0x8] sm:$0xff]
    %v89 = vld [vmem:[%s1 + $0x10] sm:$0xff]
    %v90 = vld [vmem:[%s1 + $0x18] sm:$0x7]
    %v91 = vld [vmem:[%s1 + $0x20] sm:$0x7]
    %v92 = vld [vmem:[%s1 + $0x28] sm:$0x7]
    %vm93 = vcmask 89088
    %v95 = vsel %vm93, %v79, 0
    %v98 = vsel %vm93, %v80, 0
    %v101 = vsel %vm93, %v81, 0
    %v104 = vsel %vm93, %v82, 0
    %v107 = vsel %vm93, %v83, 0
    %v110 = vsel %vm93, %v84, 0
    %v113 = vsel %vm93, %v85, 0
    %v116 = vsel %vm93, %v86, 0
    %vm118 = vcmask 1042432
    %v120 = vsel %vm118, %v90, 0
    %v123 = vsel %vm118, %v91, 0
    %v126 = vsel %vm118, %v92, 0
    %128 = vmatprep.subr.mxu0 %v88
    %129 = vmatpush1.msra.mxu0 %v87
    %130 = vmatprep.subr.mxu0 %v123
    %131 = vmatpush1.msra.mxu0 %v120
    %132 = vmatprep.subr.mxu0 0.0
    %133 = vmatpush1.msra.mxu0 0.0
    %134 = vmatprep.subr.mxu0 0.0
    %135 = vmatpush1.msra.mxu0 0.0
    %136 = vmatprep.subr.mxu0 0.0
    %137 = vmatpush1.msra.mxu0 0.0
    %138 = vmatprep.subr.mxu0 0.0
    %139 = vmatpush1.msra.mxu0 0.0
    %140 = vmatprep.subr.mxu0 0.0
    %141 = vmatpush1.msra.mxu0 0.0
    %142 = vmatprep.subr.mxu0 0.0
    %143 = vmatpush1.msra.mxu0 0.0
    %144 = vmatprep.subr.mxu0 0.0
    %145 = vmatpush1.msra.mxu0 0.0
    %146 = vmatprep.subr.mxu0 0.0
    %147 = vmatpush1.msra.mxu0 0.0
    %148 = vmatprep.subr.mxu0 0.0
    %149 = vmatpush1.msra.mxu0 0.0
    %150 = vmatprep.subr.mxu0 0.0
    %151 = vmatpush1.msra.mxu0 0.0
    %152 = vmatprep.subr.mxu0 0.0
    %153 = vmatpush1.msra.mxu0 0.0
    %154 = vmatprep.subr.mxu0 0.0
    %155 = vmatpush1.msra.mxu0 0.0
    %156 = vmatprep.subr.mxu0 0.0
    %157 = vmatpush1.msra.mxu0 0.0
    %158 = vmatprep.subr.mxu0 0.0
    %159 = vmatpush1.msra.mxu0 0.0
    %160 = vmatprep.subr.mxu0 0.0
    %161 = vmatpush1.msra.mxu0 0.0
    %162 = vmatprep.subr.mxu0 0.0
    %163 = vmatpush1.msra.mxu0 0.0
    %164 = vmatprep.subr.mxu0 0.0
    %165 = vmatpush1.msra.mxu0 0.0
    %166 = vmatprep.subr.mxu0 0.0
    %167 = vmatpush1.msra.mxu0 0.0
    %168 = vmatprep.subr.mxu0 0.0
    %169 = vmatpush1.msra.mxu0 0.0
    %170 = vmatprep.subr.mxu0 0.0
    %171 = vmatpush1.msra.mxu0 0.0
    %172 = vmatprep.subr.mxu0 0.0
    %173 = vmatpush1.msra.mxu0 0.0
    %174 = vmatprep.subr.mxu0 0.0
    %175 = vmatpush1.msra.mxu0 0.0
    %176 = vmatprep.subr.mxu0 0.0
    %177 = vmatpush1.msra.mxu0 0.0
    %178 = vmatprep.subr.mxu0 0.0
    %179 = vmatpush1.msra.mxu0 0.0
    %180 = vmatprep.subr.mxu0 0.0
    %181 = vmatpush1.msra.mxu0 0.0
    %182 = vmatprep.subr.mxu0 0.0
    %183 = vmatpush1.msra.mxu0 0.0
    %184 = vmatprep.subr.mxu0 0.0
    %185 = vmatpush1.msra.mxu0 0.0
    %186 = vmatprep.subr.mxu0 0.0
    %187 = vmatpush1.msra.mxu0 0.0
    %188 = vmatprep.subr.mxu0 0.0
    %189 = vmatpush1.msra.mxu0 0.0
    %190 = vmatprep.subr.mxu0 0.0
    %191 = vmatpush1.msra.mxu0 0.0
    %192 = vmatprep.mubr.f32.mxu0 0.0
    %193 = vmatmul.mubr.f32.gmra.mrb[0].mxu0 %v95
    %v194 = vpop.f32.mrb[0].mxu0
    %v195 = vadd.f32 0.0, %v194
    %v196 = vpop.f32.mrb[0].mxu0
    %v197 = vadd.f32 0.0, %v196
    %198 = vmatprep.mubr.f32.mxu0 0.0
    %199 = vmatmul.mubr.f32.gmra.mrb[0].mxu0 %v98
    %v200 = vpop.f32.mrb[0].mxu0
    %v201 = vadd.f32 0.0, %v200
    %v202 = vpop.f32.mrb[0].mxu0
    %v203 = vadd.f32 0.0, %v202
    %204 = vmatprep.mubr.f32.mxu0 0.0
    %205 = vmatmul.mubr.f32.gmra.mrb[0].mxu0 %v101
    %v206 = vpop.f32.mrb[0].mxu0
    %v207 = vadd.f32 0.0, %v206
    %v208 = vpop.f32.mrb[0].mxu0
    %v209 = vadd.f32 0.0, %v208
    %210 = vmatprep.mubr.f32.mxu0 0.0
    %211 = vmatmul.mubr.f32.gmra.mrb[0].mxu0 %v104
    %v212 = vpop.f32.mrb[0].mxu0
    %v213 = vadd.f32 0.0, %v212
    %v214 = vpop.f32.mrb[0].mxu0
    %v215 = vadd.f32 0.0, %v214
    %216 = vmatprep.mubr.f32.mxu0 0.0
    %217 = vmatmul.mubr.f32.gmra.mrb[0].mxu0 %v107
    %v218 = vpop.f32.mrb[0].mxu0
    %v219 = vadd.f32 0.0, %v218
    %v220 = vpop.f32.mrb[0].mxu0
    %v221 = vadd.f32 0.0, %v220
    %222 = vmatprep.mubr.f32.mxu0 0.0
    %223 = vmatmul.mubr.f32.gmra.mrb[0].mxu0 %v110
    %v224 = vpop.f32.mrb[0].mxu0
    %v225 = vadd.f32 0.0, %v224
    %v226 = vpop.f32.mrb[0].mxu0
    %v227 = vadd.f32 0.0, %v226
    %228 = vmatprep.mubr.f32.mxu0 0.0
    %229 = vmatmul.mubr.f32.gmra.mrb[0].mxu0 %v113
    %v230 = vpop.f32.mrb[0].mxu0
    %v231 = vadd.f32 0.0, %v230
    %v232 = vpop.f32.mrb[0].mxu0
    %v233 = vadd.f32 0.0, %v232
    %234 = vmatprep.mubr.f32.mxu0 0.0
    %235 = vmatmul.mubr.f32.gmra.mrb[0].mxu0 %v116
    %v236 = vpop.f32.mrb[0].mxu0
    %v237 = vadd.f32 0.0, %v236
    %v238 = vpop.f32.mrb[0].mxu0
    %v239 = vadd.f32 0.0, %v238
    %240 = vdwg.mxu0
    %241 = vmatprep.subr.mxu0 0.0
    %242 = vmatpush1.msra.mxu0 %v89
    %243 = vmatprep.subr.mxu0 0.0
    %244 = vmatpush1.msra.mxu0 %v126
    %245 = vmatprep.subr.mxu0 0.0
    %246 = vmatpush1.msra.mxu0 0.0
    %247 = vmatprep.subr.mxu0 0.0
    %248 = vmatpush1.msra.mxu0 0.0
    %249 = vmatprep.subr.mxu0 0.0
    %250 = vmatpush1.msra.mxu0 0.0
    %251 = vmatprep.subr.mxu0 0.0
    %252 = vmatpush1.msra.mxu0 0.0
    %253 = vmatprep.subr.mxu0 0.0
    %254 = vmatpush1.msra.mxu0 0.0
    %255 = vmatprep.subr.mxu0 0.0
    %256 = vmatpush1.msra.mxu0 0.0
    %257 = vmatprep.subr.mxu0 0.0
    %258 = vmatpush1.msra.mxu0 0.0
    %259 = vmatprep.subr.mxu0 0.0
    %260 = vmatpush1.msra.mxu0 0.0
    %261 = vmatprep.subr.mxu0 0.0
    %262 = vmatpush1.msra.mxu0 0.0
    %263 = vmatprep.subr.mxu0 0.0
    %264 = vmatpush1.msra.mxu0 0.0
    %265 = vmatprep.subr.mxu0 0.0
    %266 = vmatpush1.msra.mxu0 0.0
    %267 = vmatprep.subr.mxu0 0.0
    %268 = vmatpush1.msra.mxu0 0.0
    %269 = vmatprep.subr.mxu0 0.0
    %270 = vmatpush1.msra.mxu0 0.0
    %271 = vmatprep.subr.mxu0 0.0
    %272 = vmatpush1.msra.mxu0 0.0
    %273 = vmatprep.subr.mxu0 0.0
    %274 = vmatpush1.msra.mxu0 0.0
    %275 = vmatprep.subr.mxu0 0.0
    %276 = vmatpush1.msra.mxu0 0.0
    %277 = vmatprep.subr.mxu0 0.0
    %278 = vmatpush1.msra.mxu0 0.0
    %279 = vmatprep.subr.mxu0 0.0
    %280 = vmatpush1.msra.mxu0 0.0
    %281 = vmatprep.subr.mxu0 0.0
    %282 = vmatpush1.msra.mxu0 0.0
    %283 = vmatprep.subr.mxu0 0.0
    %284 = vmatpush1.msra.mxu0 0.0
    %285 = vmatprep.subr.mxu0 0.0
    %286 = vmatpush1.msra.mxu0 0.0
    %287 = vmatprep.subr.mxu0 0.0
    %288 = vmatpush1.msra.mxu0 0.0
    %289 = vmatprep.subr.mxu0 0.0
    %290 = vmatpush1.msra.mxu0 0.0
    %291 = vmatprep.subr.mxu0 0.0
    %292 = vmatpush1.msra.mxu0 0.0
    %293 = vmatprep.subr.mxu0 0.0
    %294 = vmatpush1.msra.mxu0 0.0
    %295 = vmatprep.subr.mxu0 0.0
    %296 = vmatpush1.msra.mxu0 0.0
    %297 = vmatprep.subr.mxu0 0.0
    %298 = vmatpush1.msra.mxu0 0.0
    %299 = vmatprep.subr.mxu0 0.0
    %300 = vmatpush1.msra.mxu0 0.0
    %301 = vmatprep.subr.mxu0 0.0
    %302 = vmatpush1.msra.mxu0 0.0
    %303 = vmatprep.subr.mxu0 0.0
    %304 = vmatpush1.msra.mxu0 0.0
    %305 = vmatprep.mubr.f32.mxu0 0.0
    %306 = vmatmul.mubr.f32.gmra.mrb[0].mxu0 %v95
    %v307 = vpop.f32.mrb[0].mxu0
    %v308 = vadd.f32 0.0, %v307
    %v309 = vpop.f32.mrb[0].mxu0
    %310 = vmatprep.mubr.f32.mxu0 0.0
    %311 = vmatmul.mubr.f32.gmra.mrb[0].mxu0 %v98
    %v312 = vpop.f32.mrb[0].mxu0
    %v313 = vadd.f32 0.0, %v312
    %v314 = vpop.f32.mrb[0].mxu0
    %315 = vmatprep.mubr.f32.mxu0 0.0
    %316 = vmatmul.mubr.f32.gmra.mrb[0].mxu0 %v101
    %v317 = vpop.f32.mrb[0].mxu0
    %v318 = vadd.f32 0.0, %v317
    %v319 = vpop.f32.mrb[0].mxu0
    %320 = vmatprep.mubr.f32.mxu0 0.0
    %321 = vmatmul.mubr.f32.gmra.mrb[0].mxu0 %v104
    %v322 = vpop.f32.mrb[0].mxu0
    %v323 = vadd.f32 0.0, %v322
    %v324 = vpop.f32.mrb[0].mxu0
    %325 = vmatprep.mubr.f32.mxu0 0.0
    %326 = vmatmul.mubr.f32.gmra.mrb[0].mxu0 %v107
    %v327 = vpop.f32.mrb[0].mxu0
    %v328 = vadd.f32 0.0, %v327
    %v329 = vpop.f32.mrb[0].mxu0
    %330 = vmatprep.mubr.f32.mxu0 0.0
    %331 = vmatmul.mubr.f32.gmra.mrb[0].mxu0 %v110
    %v332 = vpop.f32.mrb[0].mxu0
    %v333 = vadd.f32 0.0, %v332
    %v334 = vpop.f32.mrb[0].mxu0
    %335 = vmatprep.mubr.f32.mxu0 0.0
    %336 = vmatmul.mubr.f32.gmra.mrb[0].mxu0 %v113
    %v337 = vpop.f32.mrb[0].mxu0
    %v338 = vadd.f32 0.0, %v337
    %v339 = vpop.f32.mrb[0].mxu0
    %340 = vmatprep.mubr.f32.mxu0 0.0
    %341 = vmatmul.mubr.f32.gmra.mrb[0].mxu0 %v116
    %v342 = vpop.f32.mrb[0].mxu0
    %v343 = vadd.f32 0.0, %v342
    %v344 = vpop.f32.mrb[0].mxu0
    %345 = vdwg.mxu0
    %346 = vst [vmem:[#allocation3] sm:$0xff] %v195
    %347 = vst [vmem:[#allocation3 + $0x8] sm:$0xff] %v197
    %348 = vst [vmem:[#allocation3 + $0x10] sm:$0xff] %v308
    %349 = vst [vmem:[#allocation3 + $0x18] sm:$0xff] %v201
    %350 = vst [vmem:[#allocation3 + $0x20] sm:$0xff] %v203
    %351 = vst [vmem:[#allocation3 + $0x28] sm:$0xff] %v313
    %352 = vst [vmem:[#allocation3 + $0x30] sm:$0xff] %v207
    %353 = vst [vmem:[#allocation3 + $0x38] sm:$0xff] %v209
    %354 = vst [vmem:[#allocation3 + $0x40] sm:$0xff] %v318
    %355 = vst [vmem:[#allocation3 + $0x48] sm:$0xff] %v213
    %356 = vst [vmem:[#allocation3 + $0x50] sm:$0xff] %v215
    %357 = vst [vmem:[#allocation3 + $0x58] sm:$0xff] %v323
    %358 = vst [vmem:[#allocation3 + $0x60] sm:$0xff] %v219
    %359 = vst [vmem:[#allocation3 + $0x68] sm:$0xff] %v221
    %360 = vst [vmem:[#allocation3 + $0x70] sm:$0xff] %v328
    %361 = vst [vmem:[#allocation3 + $0x78] sm:$0xff] %v225
    %362 = vst [vmem:[#allocation3 + $0x80] sm:$0xff] %v227
    %363 = vst [vmem:[#allocation3 + $0x88] sm:$0xff] %v333
    %364 = vst [vmem:[#allocation3 + $0x90] sm:$0xff] %v231
    %365 = vst [vmem:[#allocation3 + $0x98] sm:$0xff] %v233
    %366 = vst [vmem:[#allocation3 + $0xa0] sm:$0xff] %v338
    %367 = vst [vmem:[#allocation3 + $0xa8] sm:$0xff] %v237
    %368 = vst [vmem:[#allocation3 + $0xb0] sm:$0xff] %v239
    %369 = vst [vmem:[#allocation3 + $0xb8] sm:$0xff] %v343
    %v370 = vld [vmem:[%s3] sm:$0x1]
    %v372 = vlaneseq
    %v373 = vshrl.u32 %v372, 7
    %v374 = vsub.s32 0, %v373
    %v375 = vrot.slane %v370, %v374
    %v377 = vld [vmem:[#allocation2] sm:$0xff]
    %v378 = vld [vmem:[#allocation4] sm:$0xff]
    %v379 = vld [vmem:[#allocation4 + $0x18] sm:$0xff]
    %v380 = vld [vmem:[#allocation4 + $0x30] sm:$0xff]
    %v381 = vld [vmem:[#allocation4 + $0x48] sm:$0xff]
    %v382 = vld [vmem:[#allocation4 + $0x60] sm:$0xff]
    %v383 = vld [vmem:[#allocation4 + $0x78] sm:$0xff]
    %v384 = vld [vmem:[#allocation4 + $0x90] sm:$0xff]
    %v385 = vld [vmem:[#allocation4 + $0xa8] sm:$0xff]
    %v386 = vld [vmem:[#allocation4 + $0xc0] sm:$0xff]
    %v387 = vld [vmem:[#allocation4 + $0xd8] sm:$0xff]
    %v388 = vld [vmem:[#allocation4 + $0xf0] sm:$0xff]
    %v389 = vld [vmem:[#allocation4 + $0x108] sm:$0xff]
    %v390 = vld [vmem:[#allocation4 + $0x120] sm:$0xff]
    %v391 = vld [vmem:[#allocation4 + $0x138] sm:$0xff]
    %v392 = vld [vmem:[#allocation4 + $0x150] sm:$0xff]
    %v393 = vld [vmem:[#allocation4 + $0x168] sm:$0xff]
    %394 = vmatprep.subr.mxu0 0.0
    %395 = vmatpush1.msra.mxu0 %v378
    %396 = vmatprep.subr.mxu0 0.0
    %397 = vmatpush1.msra.mxu0 %v379
    %398 = vmatprep.subr.mxu0 0.0
    %399 = vmatpush1.msra.mxu0 %v380
    %400 = vmatprep.subr.mxu0 0.0
    %401 = vmatpush1.msra.mxu0 %v381
    %402 = vmatprep.subr.mxu0 0.0
    %403 = vmatpush1.msra.mxu0 %v382
    %404 = vmatprep.subr.mxu0 0.0
    %405 = vmatpush1.msra.mxu0 %v383
    %406 = vmatprep.subr.mxu0 0.0
    %407 = vmatpush1.msra.mxu0 %v384
    %408 = vmatprep.subr.mxu0 0.0
    %409 = vmatpush1.msra.mxu0 %v385
    %410 = vmatprep.subr.mxu0 0.0
    %411 = vmatpush1.msra.mxu0 %v386
    %412 = vmatprep.subr.mxu0 0.0
    %413 = vmatpush1.msra.mxu0 %v387
    %414 = vmatprep.subr.mxu0 0.0
    %415 = vmatpush1.msra.mxu0 %v388
    %416 = vmatprep.subr.mxu0 0.0
    %417 = vmatpush1.msra.mxu0 %v389
    %418 = vmatprep.subr.mxu0 0.0
    %419 = vmatpush1.msra.mxu0 %v390
    %420 = vmatprep.subr.mxu0 0.0
    %421 = vmatpush1.msra.mxu0 %v391
    %422 = vmatprep.subr.mxu0 0.0
    %423 = vmatpush1.msra.mxu0 %v392
    %424 = vmatprep.subr.mxu0 0.0
    %425 = vmatpush1.msra.mxu0 %v393
    %426 = vmatprep.subr.mxu0 0.0
    %427 = vmatpush1.msra.mxu0 0.0
    %428 = vmatprep.subr.mxu0 0.0
    %429 = vmatpush1.msra.mxu0 0.0
    %430 = vmatprep.subr.mxu0 0.0
    %431 = vmatpush1.msra.mxu0 0.0
    %432 = vmatprep.subr.mxu0 0.0
    %433 = vmatpush1.msra.mxu0 0.0
    %434 = vmatprep.subr.mxu0 0.0
    %435 = vmatpush1.msra.mxu0 0.0
    %436 = vmatprep.subr.mxu0 0.0
    %437 = vmatpush1.msra.mxu0 0.0
    %438 = vmatprep.subr.mxu0 0.0
    %439 = vmatpush1.msra.mxu0 0.0
    %440 = vmatprep.subr.mxu0 0.0
    %441 = vmatpush1.msra.mxu0 0.0
    %442 = vmatprep.subr.mxu0 0.0
    %443 = vmatpush1.msra.mxu0 0.0
    %444 = vmatprep.subr.mxu0 0.0
    %445 = vmatpush1.msra.mxu0 0.0
    %446 = vmatprep.subr.mxu0 0.0
    %447 = vmatpush1.msra.mxu0 0.0
    %448 = vmatprep.subr.mxu0 0.0
    %449 = vmatpush1.msra.mxu0 0.0
    %450 = vmatprep.subr.mxu0 0.0
    %451 = vmatpush1.msra.mxu0 0.0
    %452 = vmatprep.subr.mxu0 0.0
    %453 = vmatpush1.msra.mxu0 0.0
    %454 = vmatprep.subr.mxu0 0.0
    %455 = vmatpush1.msra.mxu0 0.0
    %456 = vmatprep.subr.mxu0 0.0
    %457 = vmatpush1.msra.mxu0 0.0
    %458 = vmatprep.mubr.f32.mxu0 0.0
    %459 = vmatmul.mubr.f32.gmra.mrb[0].mxu0 %v377
    %v460 = vpop.f32.mrb[0].mxu0
    %v461 = vadd.f32 0.0, %v460
    %v462 = vpop.f32.mrb[0].mxu0
    %463 = vdwg.mxu0
    %s464 = smul.u32 0, 3
    %s465 = smul.addr %s464, 8
    %s466 = scalar_lea.vmem [#allocation3], %s465
    %v467 = vld [vmem:[%s466] sm:$0xff]
    %v468 = vadd.f32 %v467, %v461
    %v469 = vxor.u32 %v468, 2147483648
    %v470 = vmul.f32 %v469, 1.442695
    %v471 = vpow.pop %v470
    %v472 = vadd.f32 %v471, 1.0
    %v473 = vrcp.pop %v472
    %v474 = vmul.f32 1.0, %v473
    %v475 = vld [vmem:[#allocation4 + $0x8] sm:$0xff]
    %v476 = vld [vmem:[#allocation4 + $0x20] sm:$0xff]
    %v477 = vld [vmem:[#allocation4 + $0x38] sm:$0xff]
    %v478 = vld [vmem:[#allocation4 + $0x50] sm:$0xff]
    %v479 = vld [vmem:[#allocation4 + $0x68] sm:$0xff]
    %v480 = vld [vmem:[#allocation4 + $0x80] sm:$0xff]
    %v481 = vld [vmem:[#allocation4 + $0x98] sm:$0xff]
    %v482 = vld [vmem:[#allocation4 + $0xb0] sm:$0xff]
    %v483 = vld [vmem:[#allocation4 + $0xc8] sm:$0xff]
    %v484 = vld [vmem:[#allocation4 + $0xe0] sm:$0xff]
    %v485 = vld [vmem:[#allocation4 + $0xf8] sm:$0xff]
    %v486 = vld [vmem:[#allocation4 + $0x110] sm:$0xff]
    %v487 = vld [vmem:[#allocation4 + $0x128] sm:$0xff]
    %v488 = vld [vmem:[#allocation4 + $0x140] sm:$0xff]
    %v489 = vld [vmem:[#allocation4 + $0x158] sm:$0xff]
    %v490 = vld [vmem:[#allocation4 + $0x170] sm:$0xff]
    %491 = vmatprep.subr.mxu0 0.0
    %492 = vmatpush1.msra.mxu0 %v475
    %493 = vmatprep.subr.mxu0 0.0
    %494 = vmatpush1.msra.mxu0 %v476
    %495 = vmatprep.subr.mxu0 0.0
    %496 = vmatpush1.msra.mxu0 %v477
    %497 = vmatprep.subr.mxu0 0.0
    %498 = vmatpush1.msra.mxu0 %v478
    %499 = vmatprep.subr.mxu0 0.0
    %500 = vmatpush1.msra.mxu0 %v479
    %501 = vmatprep.subr.mxu0 0.0
    %502 = vmatpush1.msra.mxu0 %v480
    %503 = vmatprep.subr.mxu0 0.0
    %504 = vmatpush1.msra.mxu0 %v481
    %505 = vmatprep.subr.mxu0 0.0
    %506 = vmatpush1.msra.mxu0 %v482
    %507 = vmatprep.subr.mxu0 0.0
    %508 = vmatpush1.msra.mxu0 %v483
    %509 = vmatprep.subr.mxu0 0.0
    %510 = vmatpush1.msra.mxu0 %v484
    %511 = vmatprep.subr.mxu0 0.0
    %512 = vmatpush1.msra.mxu0 %v485
    %513 = vmatprep.subr.mxu0 0.0
    %514 = vmatpush1.msra.mxu0 %v486
    %515 = vmatprep.subr.mxu0 0.0
    %516 = vmatpush1.msra.mxu0 %v487
    %517 = vmatprep.subr.mxu0 0.0
    %518 = vmatpush1.msra.mxu0 %v488
    %519 = vmatprep.subr.mxu0 0.0
    %520 = vmatpush1.msra.mxu0 %v489
    %521 = vmatprep.subr.mxu0 0.0
    %522 = vmatpush1.msra.mxu0 %v490
    %523 = vmatprep.subr.mxu0 0.0
    %524 = vmatpush1.msra.mxu0 0.0
    %525 = vmatprep.subr.mxu0 0.0
    %526 = vmatpush1.msra.mxu0 0.0
    %527 = vmatprep.subr.mxu0 0.0
    %528 = vmatpush1.msra.mxu0 0.0
    %529 = vmatprep.subr.mxu0 0.0
    %530 = vmatpush1.msra.mxu0 0.0
    %531 = vmatprep.subr.mxu0 0.0
    %532 = vmatpush1.msra.mxu0 0.0
    %533 = vmatprep.subr.mxu0 0.0
    %534 = vmatpush1.msra.mxu0 0.0
    %535 = vmatprep.subr.mxu0 0.0
    %536 = vmatpush1.msra.mxu0 0.0
    %537 = vmatprep.subr.mxu0 0.0
    %538 = vmatpush1.msra.mxu0 0.0
    %539 = vmatprep.subr.mxu0 0.0
    %540 = vmatpush1.msra.mxu0 0.0
    %541 = vmatprep.subr.mxu0 0.0
    %542 = vmatpush1.msra.mxu0 0.0
    %543 = vmatprep.subr.mxu0 0.0
    %544 = vmatpush1.msra.mxu0 0.0
    %545 = vmatprep.subr.mxu0 0.0
    %546 = vmatpush1.msra.mxu0 0.0
    %547 = vmatprep.subr.mxu0 0.0
    %548 = vmatpush1.msra.mxu0 0.0
    %549 = vmatprep.subr.mxu0 0.0
    %550 = vmatpush1.msra.mxu0 0.0
    %551 = vmatprep.subr.mxu0 0.0
    %552 = vmatpush1.msra.mxu0 0.0
    %553 = vmatprep.subr.mxu0 0.0
    %554 = vmatpush1.msra.mxu0 0.0
    %555 = vmatprep.mubr.f32.mxu0 0.0
    %556 = vmatmul.mubr.f32.gmra.mrb[0].mxu0 %v377
    %v557 = vpop.f32.mrb[0].mxu0
    %v558 = vadd.f32 0.0, %v557
    %v559 = vpop.f32.mrb[0].mxu0
    %560 = vdwg.mxu0
    %v561 = vld [vmem:[%s466 + $0x8] sm:$0xff]
    %v562 = vadd.f32 %v561, %v558
    %v563 = vxor.u32 %v562, 2147483648
    %v564 = vmul.f32 %v563, 1.442695
    %v565 = vpow.pop %v564
    %v566 = vadd.f32 %v565, 1.0
    %v567 = vrcp.pop %v566
    %v568 = vmul.f32 1.0, %v567
    %v569 = vld [vmem:[#allocation4 + $0x10] sm:$0xff]
    %v570 = vld [vmem:[#allocation4 + $0x28] sm:$0xff]
    %v571 = vld [vmem:[#allocation4 + $0x40] sm:$0xff]
    %v572 = vld [vmem:[#allocation4 + $0x58] sm:$0xff]
    %v573 = vld [vmem:[#allocation4 + $0x70] sm:$0xff]
    %v574 = vld [vmem:[#allocation4 + $0x88] sm:$0xff]
    %v575 = vld [vmem:[#allocation4 + $0xa0] sm:$0xff]
    %v576 = vld [vmem:[#allocation4 + $0xb8] sm:$0xff]
    %v577 = vld [vmem:[#allocation4 + $0xd0] sm:$0xff]
    %v578 = vld [vmem:[#allocation4 + $0xe8] sm:$0xff]
    %v579 = vld [vmem:[#allocation4 + $0x100] sm:$0xff]
    %v580 = vld [vmem:[#allocation4 + $0x118] sm:$0xff]
    %v581 = vld [vmem:[#allocation4 + $0x130] sm:$0xff]
    %v582 = vld [vmem:[#allocation4 + $0x148] sm:$0xff]
    %v583 = vld [vmem:[#allocation4 + $0x160] sm:$0xff]
    %v584 = vld [vmem:[#allocation4 + $0x178] sm:$0xff]
    %v585 = vld [vmem:[%s466 + $0x10] sm:$0xff]
    %586 = vmatprep.subr.mxu0 0.0
    %587 = vmatpush1.msra.mxu0 %v569
    %588 = vmatprep.subr.mxu0 0.0
    %589 = vmatpush1.msra.mxu0 %v570
    %590 = vmatprep.subr.mxu0 0.0
    %591 = vmatpush1.msra.mxu0 %v571
    %592 = vmatprep.subr.mxu0 0.0
    %593 = vmatpush1.msra.mxu0 %v572
    %594 = vmatprep.subr.mxu0 0.0
    %595 = vmatpush1.msra.mxu0 %v573
    %596 = vmatprep.subr.mxu0 0.0
    %597 = vmatpush1.msra.mxu0 %v574
    %598 = vmatprep.subr.mxu0 0.0
    %599 = vmatpush1.msra.mxu0 %v575
    %600 = vmatprep.subr.mxu0 0.0
    %601 = vmatpush1.msra.mxu0 %v576
    %602 = vmatprep.subr.mxu0 0.0
    %603 = vmatpush1.msra.mxu0 %v577
    %604 = vmatprep.subr.mxu0 0.0
    %605 = vmatpush1.msra.mxu0 %v578
    %606 = vmatprep.subr.mxu0 0.0
    %607 = vmatpush1.msra.mxu0 %v579
    %608 = vmatprep.subr.mxu0 0.0
    %609 = vmatpush1.msra.mxu0 %v580
    %610 = vmatprep.subr.mxu0 0.0
    %611 = vmatpush1.msra.mxu0 %v581
    %612 = vmatprep.subr.mxu0 0.0
    %613 = vmatpush1.msra.mxu0 %v582
    %614 = vmatprep.subr.mxu0 0.0
    %615 = vmatpush1.msra.mxu0 %v583
    %616 = vmatprep.subr.mxu0 0.0
    %617 = vmatpush1.msra.mxu0 %v584
    %618 = vmatprep.subr.mxu0 0.0
    %619 = vmatpush1.msra.mxu0 0.0
    %620 = vmatprep.subr.mxu0 0.0
    %621 = vmatpush1.msra.mxu0 0.0
    %622 = vmatprep.subr.mxu0 0.0
    %623 = vmatpush1.msra.mxu0 0.0
    %624 = vmatprep.subr.mxu0 0.0
    %625 = vmatpush1.msra.mxu0 0.0
    %626 = vmatprep.subr.mxu0 0.0
    %627 = vmatpush1.msra.mxu0 0.0
    %628 = vmatprep.subr.mxu0 0.0
    %629 = vmatpush1.msra.mxu0 0.0
    %630 = vmatprep.subr.mxu0 0.0
    %631 = vmatpush1.msra.mxu0 0.0
    %632 = vmatprep.subr.mxu0 0.0
    %633 = vmatpush1.msra.mxu0 0.0
    %634 = vmatprep.subr.mxu0 0.0
    %635 = vmatpush1.msra.mxu0 0.0
    %636 = vmatprep.subr.mxu0 0.0
    %637 = vmatpush1.msra.mxu0 0.0
    %638 = vmatprep.subr.mxu0 0.0
    %639 = vmatpush1.msra.mxu0 0.0
    %640 = vmatprep.subr.mxu0 0.0
    %641 = vmatpush1.msra.mxu0 0.0
    %642 = vmatprep.subr.mxu0 0.0
    %643 = vmatpush1.msra.mxu0 0.0
    %644 = vmatprep.subr.mxu0 0.0
    %645 = vmatpush1.msra.mxu0 0.0
    %646 = vmatprep.subr.mxu0 0.0
    %647 = vmatpush1.msra.mxu0 0.0
    %648 = vmatprep.subr.mxu0 0.0
    %649 = vmatpush1.msra.mxu0 0.0
    %650 = vmatprep.mubr.f32.mxu0 0.0
    %651 = vmatmul.mubr.f32.gmra.mrb[0].mxu0 %v377
    %v652 = vpop.f32.mrb[0].mxu0
    %v653 = vadd.f32 %v375, %v652
    %v654 = vpop.f32.mrb[0].mxu0
    %655 = vdwg.mxu0
    %v656 = vmul.f32 %v474, %v653
    %v657 = vadd.f32 %v585, %v656
    %v658 = vtanh.pop %v657
    %v659 = vsub.f32 %v377, %v658
    %v660 = vmul.f32 %v568, %v659
    %v661 = vadd.f32 %v658, %v660
    %662 = vmatprep.subr.mxu0 0.0
    %663 = vmatpush1.msra.mxu0 %v378
    %664 = vmatprep.subr.mxu0 0.0
    %665 = vmatpush1.msra.mxu0 %v379
    %666 = vmatprep.subr.mxu0 0.0
    %667 = vmatpush1.msra.mxu0 %v380
    %668 = vmatprep.subr.mxu0 0.0
    %669 = vmatpush1.msra.mxu0 %v381
    %670 = vmatprep.subr.mxu0 0.0
    %671 = vmatpush1.msra.mxu0 %v382
    %672 = vmatprep.subr.mxu0 0.0
    %673 = vmatpush1.msra.mxu0 %v383
    %674 = vmatprep.subr.mxu0 0.0
    %675 = vmatpush1.msra.mxu0 %v384
    %676 = vmatprep.subr.mxu0 0.0
    %677 = vmatpush1.msra.mxu0 %v385
    %678 = vmatprep.subr.mxu0 0.0
    %679 = vmatpush1.msra.mxu0 %v386
    %680 = vmatprep.subr.mxu0 0.0
    %681 = vmatpush1.msra.mxu0 %v387
    %682 = vmatprep.subr.mxu0 0.0
    %683 = vmatpush1.msra.mxu0 %v388
    %684 = vmatprep.subr.mxu0 0.0
    %685 = vmatpush1.msra.mxu0 %v389
    %686 = vmatprep.subr.mxu0 0.0
    %687 = vmatpush1.msra.mxu0 %v390
    %688 = vmatprep.subr.mxu0 0.0
    %689 = vmatpush1.msra.mxu0 %v391
    %690 = vmatprep.subr.mxu0 0.0
    %691 = vmatpush1.msra.mxu0 %v392
    %692 = vmatprep.subr.mxu0 0.0
    %693 = vmatpush1.msra.mxu0 %v393
    %694 = vmatprep.subr.mxu0 0.0
    %695 = vmatpush1.msra.mxu0 0.0
    %696 = vmatprep.subr.mxu0 0.0
    %697 = vmatpush1.msra.mxu0 0.0
    %698 = vmatprep.subr.mxu0 0.0
    %699 = vmatpush1.msra.mxu0 0.0
    %700 = vmatprep.subr.mxu0 0.0
    %701 = vmatpush1.msra.mxu0 0.0
    %702 = vmatprep.subr.mxu0 0.0
    %703 = vmatpush1.msra.mxu0 0.0
    %704 = vmatprep.subr.mxu0 0.0
    %705 = vmatpush1.msra.mxu0 0.0
    %706 = vmatprep.subr.mxu0 0.0
    %707 = vmatpush1.msra.mxu0 0.0
    %708 = vmatprep.subr.mxu0 0.0
    %709 = vmatpush1.msra.mxu0 0.0
    %710 = vmatprep.subr.mxu0 0.0
    %711 = vmatpush1.msra.mxu0 0.0
    %712 = vmatprep.subr.mxu0 0.0
    %713 = vmatpush1.msra.mxu0 0.0
    %714 = vmatprep.subr.mxu0 0.0
    %715 = vmatpush1.msra.mxu0 0.0
    %716 = vmatprep.subr.mxu0 0.0
    %717 = vmatpush1.msra.mxu0 0.0
    %718 = vmatprep.subr.mxu0 0.0
    %719 = vmatpush1.msra.mxu0 0.0
    %720 = vmatprep.subr.mxu0 0.0
    %721 = vmatpush1.msra.mxu0 0.0
    %722 = vmatprep.subr.mxu0 0.0
    %723 = vmatpush1.msra.mxu0 0.0
    %724 = vmatprep.subr.mxu0 0.0
    %725 = vmatpush1.msra.mxu0 0.0
    %726 = vmatprep.mubr.f32.mxu0 0.0
    %727 = vmatmul.mubr.f32.gmra.mrb[0].mxu0 %v661
    %v728 = vpop.f32.mrb[0].mxu0
    %v729 = vadd.f32 0.0, %v728
    %v730 = vpop.f32.mrb[0].mxu0
    %731 = vdwg.mxu0
    %s732 = smul.u32 1, 3
    %s733 = smul.addr %s732, 8
    %s734 = scalar_lea.vmem [#allocation3], %s733
    %v735 = vld [vmem:[%s734] sm:$0xff]
    %v736 = vadd.f32 %v735, %v729
    %v737 = vxor.u32 %v736, 2147483648
    %v738 = vmul.f32 %v737, 1.442695
    %v739 = vpow.pop %v738
    %v740 = vadd.f32 %v739, 1.0
    %v741 = vrcp.pop %v740
    %v742 = vmul.f32 1.0, %v741
    %743 = vmatprep.subr.mxu0 0.0
    %744 = vmatpush1.msra.mxu0 %v475
    %745 = vmatprep.subr.mxu0 0.0
    %746 = vmatpush1.msra.mxu0 %v476
    %747 = vmatprep.subr.mxu0 0.0
    %748 = vmatpush1.msra.mxu0 %v477
    %749 = vmatprep.subr.mxu0 0.0
    %750 = vmatpush1.msra.mxu0 %v478
    %751 = vmatprep.subr.mxu0 0.0
    %752 = vmatpush1.msra.mxu0 %v479
    %753 = vmatprep.subr.mxu0 0.0
    %754 = vmatpush1.msra.mxu0 %v480
    %755 = vmatprep.subr.mxu0 0.0
    %756 = vmatpush1.msra.mxu0 %v481
    %757 = vmatprep.subr.mxu0 0.0
    %758 = vmatpush1.msra.mxu0 %v482
    %759 = vmatprep.subr.mxu0 0.0
    %760 = vmatpush1.msra.mxu0 %v483
    %761 = vmatprep.subr.mxu0 0.0
    %762 = vmatpush1.msra.mxu0 %v484
    %763 = vmatprep.subr.mxu0 0.0
    %764 = vmatpush1.msra.mxu0 %v485
    %765 = vmatprep.subr.mxu0 0.0
    %766 = vmatpush1.msra.mxu0 %v486
    %767 = vmatprep.subr.mxu0 0.0
    %768 = vmatpush1.msra.mxu0 %v487
    %769 = vmatprep.subr.mxu0 0.0
    %770 = vmatpush1.msra.mxu0 %v488
    %771 = vmatprep.subr.mxu0 0.0
    %772 = vmatpush1.msra.mxu0 %v489
    %773 = vmatprep.subr.mxu0 0.0
    %774 = vmatpush1.msra.mxu0 %v490
    %775 = vmatprep.subr.mxu0 0.0
    %776 = vmatpush1.msra.mxu0 0.0
    %777 = vmatprep.subr.mxu0 0.0
    %778 = vmatpush1.msra.mxu0 0.0
    %779 = vmatprep.subr.mxu0 0.0
    %780 = vmatpush1.msra.mxu0 0.0
    %781 = vmatprep.subr.mxu0 0.0
    %782 = vmatpush1.msra.mxu0 0.0
    %783 = vmatprep.subr.mxu0 0.0
    %784 = vmatpush1.msra.mxu0 0.0
    %785 = vmatprep.subr.mxu0 0.0
    %786 = vmatpush1.msra.mxu0 0.0
    %787 = vmatprep.subr.mxu0 0.0
    %788 = vmatpush1.msra.mxu0 0.0
    %789 = vmatprep.subr.mxu0 0.0
    %790 = vmatpush1.msra.mxu0 0.0
    %791 = vmatprep.subr.mxu0 0.0
    %792 = vmatpush1.msra.mxu0 0.0
    %793 = vmatprep.subr.mxu0 0.0
    %794 = vmatpush1.msra.mxu0 0.0
    %795 = vmatprep.subr.mxu0 0.0
    %796 = vmatpush1.msra.mxu0 0.0
    %797 = vmatprep.subr.mxu0 0.0
    %798 = vmatpush1.msra.mxu0 0.0
    %799 = vmatprep.subr.mxu0 0.0
    %800 = vmatpush1.msra.mxu0 0.0
    %801 = vmatprep.subr.mxu0 0.0
    %802 = vmatpush1.msra.mxu0 0.0
    %803 = vmatprep.subr.mxu0 0.0
    %804 = vmatpush1.msra.mxu0 0.0
    %805 = vmatprep.subr.mxu0 0.0
    %806 = vmatpush1.msra.mxu0 0.0
    %807 = vmatprep.mubr.f32.mxu0 0.0
    %808 = vmatmul.mubr.f32.gmra.mrb[0].mxu0 %v661
    %v809 = vpop.f32.mrb[0].mxu0
    %v810 = vadd.f32 0.0, %v809
    %v811 = vpop.f32.mrb[0].mxu0
    %812 = vdwg.mxu0
    %v813 = vld [vmem:[%s734 + $0x8] sm:$0xff]
    %v814 = vadd.f32 %v813, %v810
    %v815 = vxor.u32 %v814, 2147483648
    %v816 = vmul.f32 %v815, 1.442695
    %v817 = vpow.pop %v816
    %v818 = vadd.f32 %v817, 1.0
    %v819 = vrcp.pop %v818
    %v820 = vmul.f32 1.0, %v819
    %v821 = vld [vmem:[%s734 + $0x10] sm:$0xff]
    %822 = vmatprep.subr.mxu0 0.0
    %823 = vmatpush1.msra.mxu0 %v569
    %824 = vmatprep.subr.mxu0 0.0
    %825 = vmatpush1.msra.mxu0 %v570
    %826 = vmatprep.subr.mxu0 0.0
    %827 = vmatpush1.msra.mxu0 %v571
    %828 = vmatprep.subr.mxu0 0.0
    %829 = vmatpush1.msra.mxu0 %v572
    %830 = vmatprep.subr.mxu0 0.0
    %831 = vmatpush1.msra.mxu0 %v573
    %832 = vmatprep.subr.mxu0 0.0
    %833 = vmatpush1.msra.mxu0 %v574
    %834 = vmatprep.subr.mxu0 0.0
    %835 = vmatpush1.msra.mxu0 %v575
    %836 = vmatprep.subr.mxu0 0.0
    %837 = vmatpush1.msra.mxu0 %v576
    %838 = vmatprep.subr.mxu0 0.0
    %839 = vmatpush1.msra.mxu0 %v577
    %840 = vmatprep.subr.mxu0 0.0
    %841 = vmatpush1.msra.mxu0 %v578
    %842 = vmatprep.subr.mxu0 0.0
    %843 = vmatpush1.msra.mxu0 %v579
    %844 = vmatprep.subr.mxu0 0.0
    %845 = vmatpush1.msra.mxu0 %v580
    %846 = vmatprep.subr.mxu0 0.0
    %847 = vmatpush1.msra.mxu0 %v581
    %848 = vmatprep.subr.mxu0 0.0
    %849 = vmatpush1.msra.mxu0 %v582
    %850 = vmatprep.subr.mxu0 0.0
    %851 = vmatpush1.msra.mxu0 %v583
    %852 = vmatprep.subr.mxu0 0.0
    %853 = vmatpush1.msra.mxu0 %v584
    %854 = vmatprep.subr.mxu0 0.0
    %855 = vmatpush1.msra.mxu0 0.0
    %856 = vmatprep.subr.mxu0 0.0
    %857 = vmatpush1.msra.mxu0 0.0
    %858 = vmatprep.subr.mxu0 0.0
    %859 = vmatpush1.msra.mxu0 0.0
    %860 = vmatprep.subr.mxu0 0.0
    %861 = vmatpush1.msra.mxu0 0.0
    %862 = vmatprep.subr.mxu0 0.0
    %863 = vmatpush1.msra.mxu0 0.0
    %864 = vmatprep.subr.mxu0 0.0
    %865 = vmatpush1.msra.mxu0 0.0
    %866 = vmatprep.subr.mxu0 0.0
    %867 = vmatpush1.msra.mxu0 0.0
    %868 = vmatprep.subr.mxu0 0.0
    %869 = vmatpush1.msra.mxu0 0.0
    %870 = vmatprep.subr.mxu0 0.0
    %871 = vmatpush1.msra.mxu0 0.0
    %872 = vmatprep.subr.mxu0 0.0
    %873 = vmatpush1.msra.mxu0 0.0
    %874 = vmatprep.subr.mxu0 0.0
    %875 = vmatpush1.msra.mxu0 0.0
    %876 = vmatprep.subr.mxu0 0.0
    %877 = vmatpush1.msra.mxu0 0.0
    %878 = vmatprep.subr.mxu0 0.0
    %879 = vmatpush1.msra.mxu0 0.0
    %880 = vmatprep.subr.mxu0 0.0
    %881 = vmatpush1.msra.mxu0 0.0
    %882 = vmatprep.subr.mxu0 0.0
    %883 = vmatpush1.msra.mxu0 0.0
    %884 = vmatprep.subr.mxu0 0.0
    %885 = vmatpush1.msra.mxu0 0.0
    %886 = vmatprep.mubr.f32.mxu0 0.0
    %887 = vmatmul.mubr.f32.gmra.mrb[0].mxu0 %v661
    %v888 = vpop.f32.mrb[0].mxu0
    %v889 = vadd.f32 %v375, %v888
    %v890 = vpop.f32.mrb[0].mxu0
    %891 = vdwg.mxu0
    %v892 = vmul.f32 %v742, %v889
    %v893 = vadd.f32 %v821, %v892
    %v894 = vtanh.pop %v893
    %v895 = vsub.f32 %v661, %v894
    %v896 = vmul.f32 %v820, %v895
    %v897 = vadd.f32 %v894, %v896
    %898 = vmatprep.subr.mxu0 0.0
    %899 = vmatpush1.msra.mxu0 %v378
    %900 = vmatprep.subr.mxu0 0.0
    %901 = vmatpush1.msra.mxu0 %v379
    %902 = vmatprep.subr.mxu0 0.0
    %903 = vmatpush1.msra.mxu0 %v380
    %904 = vmatprep.subr.mxu0 0.0
    %905 = vmatpush1.msra.mxu0 %v381
    %906 = vmatprep.subr.mxu0 0.0
    %907 = vmatpush1.msra.mxu0 %v382
    %908 = vmatprep.subr.mxu0 0.0
    %909 = vmatpush1.msra.mxu0 %v383
    %910 = vmatprep.subr.mxu0 0.0
    %911 = vmatpush1.msra.mxu0 %v384
    %912 = vmatprep.subr.mxu0 0.0
    %913 = vmatpush1.msra.mxu0 %v385
    %914 = vmatprep.subr.mxu0 0.0
    %915 = vmatpush1.msra.mxu0 %v386
    %916 = vmatprep.subr.mxu0 0.0
    %917 = vmatpush1.msra.mxu0 %v387
    %918 = vmatprep.subr.mxu0 0.0
    %919 = vmatpush1.msra.mxu0 %v388
    %920 = vmatprep.subr.mxu0 0.0
    %921 = vmatpush1.msra.mxu0 %v389
    %922 = vmatprep.subr.mxu0 0.0
    %923 = vmatpush1.msra.mxu0 %v390
    %924 = vmatprep.subr.mxu0 0.0
    %925 = vmatpush1.msra.mxu0 %v391
    %926 = vmatprep.subr.mxu0 0.0
    %927 = vmatpush1.msra.mxu0 %v392
    %928 = vmatprep.subr.mxu0 0.0
    %929 = vmatpush1.msra.mxu0 %v393
    %930 = vmatprep.subr.mxu0 0.0
    %931 = vmatpush1.msra.mxu0 0.0
    %932 = vmatprep.subr.mxu0 0.0
    %933 = vmatpush1.msra.mxu0 0.0
    %934 = vmatprep.subr.mxu0 0.0
    %935 = vmatpush1.msra.mxu0 0.0
    %936 = vmatprep.subr.mxu0 0.0
    %937 = vmatpush1.msra.mxu0 0.0
    %938 = vmatprep.subr.mxu0 0.0
    %939 = vmatpush1.msra.mxu0 0.0
    %940 = vmatprep.subr.mxu0 0.0
    %941 = vmatpush1.msra.mxu0 0.0
    %942 = vmatprep.subr.mxu0 0.0
    %943 = vmatpush1.msra.mxu0 0.0
    %944 = vmatprep.subr.mxu0 0.0
    %945 = vmatpush1.msra.mxu0 0.0
    %946 = vmatprep.subr.mxu0 0.0
    %947 = vmatpush1.msra.mxu0 0.0
    %948 = vmatprep.subr.mxu0 0.0
    %949 = vmatpush1.msra.mxu0 0.0
    %950 = vmatprep.subr.mxu0 0.0
    %951 = vmatpush1.msra.mxu0 0.0
    %952 = vmatprep.subr.mxu0 0.0
    %953 = vmatpush1.msra.mxu0 0.0
    %954 = vmatprep.subr.mxu0 0.0
    %955 = vmatpush1.msra.mxu0 0.0
    %956 = vmatprep.subr.mxu0 0.0
    %957 = vmatpush1.msra.mxu0 0.0
    %958 = vmatprep.subr.mxu0 0.0
    %959 = vmatpush1.msra.mxu0 0.0
    %960 = vmatprep.subr.mxu0 0.0
    %961 = vmatpush1.msra.mxu0 0.0
    %962 = vmatprep.mubr.f32.mxu0 0.0
    %963 = vmatmul.mubr.f32.gmra.mrb[0].mxu0 %v897
    %v964 = vpop.f32.mrb[0].mxu0
    %v965 = vadd.f32 0.0, %v964
    %v966 = vpop.f32.mrb[0].mxu0
    %967 = vdwg.mxu0
    %s968 = smul.u32 2, 3
    %s969 = smul.addr %s968, 8
    %s970 = scalar_lea.vmem [#allocation3], %s969
    %v971 = vld [vmem:[%s970] sm:$0xff]
    %v972 = vadd.f32 %v971, %v965
    %v973 = vxor.u32 %v972, 2147483648
    %v974 = vmul.f32 %v973, 1.442695
    %v975 = vpow.pop %v974
    %v976 = vadd.f32 %v975, 1.0
    %v977 = vrcp.pop %v976
    %v978 = vmul.f32 1.0, %v977
    %979 = vmatprep.subr.mxu0 0.0
    %980 = vmatpush1.msra.mxu0 %v475
    %981 = vmatprep.subr.mxu0 0.0
    %982 = vmatpush1.msra.mxu0 %v476
    %983 = vmatprep.subr.mxu0 0.0
    %984 = vmatpush1.msra.mxu0 %v477
    %985 = vmatprep.subr.mxu0 0.0
    %986 = vmatpush1.msra.mxu0 %v478
    %987 = vmatprep.subr.mxu0 0.0
    %988 = vmatpush1.msra.mxu0 %v479
    %989 = vmatprep.subr.mxu0 0.0
    %990 = vmatpush1.msra.mxu0 %v480
    %991 = vmatprep.subr.mxu0 0.0
    %992 = vmatpush1.msra.mxu0 %v481
    %993 = vmatprep.subr.mxu0 0.0
    %994 = vmatpush1.msra.mxu0 %v482
    %995 = vmatprep.subr.mxu0 0.0
    %996 = vmatpush1.msra.mxu0 %v483
    %997 = vmatprep.subr.mxu0 0.0
    %998 = vmatpush1.msra.mxu0 %v484
    %999 = vmatprep.subr.mxu0 0.0
    %1000 = vmatpush1.msra.mxu0 %v485
    %1001 = vmatprep.subr.mxu0 0.0
    %1002 = vmatpush1.msra.mxu0 %v486
    %1003 = vmatprep.subr.mxu0 0.0
    %1004 = vmatpush1.msra.mxu0 %v487
    %1005 = vmatprep.subr.mxu0 0.0
    %1006 = vmatpush1.msra.mxu0 %v488
    %1007 = vmatprep.subr.mxu0 0.0
    %1008 = vmatpush1.msra.mxu0 %v489
    %1009 = vmatprep.subr.mxu0 0.0
    %1010 = vmatpush1.msra.mxu0 %v490
    %1011 = vmatprep.subr.mxu0 0.0
    %1012 = vmatpush1.msra.mxu0 0.0
    %1013 = vmatprep.subr.mxu0 0.0
    %1014 = vmatpush1.msra.mxu0 0.0
    %1015 = vmatprep.subr.mxu0 0.0
    %1016 = vmatpush1.msra.mxu0 0.0
    %1017 = vmatprep.subr.mxu0 0.0
    %1018 = vmatpush1.msra.mxu0 0.0
    %1019 = vmatprep.subr.mxu0 0.0
    %1020 = vmatpush1.msra.mxu0 0.0
    %1021 = vmatprep.subr.mxu0 0.0
    %1022 = vmatpush1.msra.mxu0 0.0
    %1023 = vmatprep.subr.mxu0 0.0
    %1024 = vmatpush1.msra.mxu0 0.0
    %1025 = vmatprep.subr.mxu0 0.0
    %1026 = vmatpush1.msra.mxu0 0.0
    %1027 = vmatprep.subr.mxu0 0.0
    %1028 = vmatpush1.msra.mxu0 0.0
    %1029 = vmatprep.subr.mxu0 0.0
    %1030 = vmatpush1.msra.mxu0 0.0
    %1031 = vmatprep.subr.mxu0 0.0
    %1032 = vmatpush1.msra.mxu0 0.0
    %1033 = vmatprep.subr.mxu0 0.0
    %1034 = vmatpush1.msra.mxu0 0.0
    %1035 = vmatprep.subr.mxu0 0.0
    %1036 = vmatpush1.msra.mxu0 0.0
    %1037 = vmatprep.subr.mxu0 0.0
    %1038 = vmatpush1.msra.mxu0 0.0
    %1039 = vmatprep.subr.mxu0 0.0
    %1040 = vmatpush1.msra.mxu0 0.0
    %1041 = vmatprep.subr.mxu0 0.0
    %1042 = vmatpush1.msra.mxu0 0.0
    %1043 = vmatprep.mubr.f32.mxu0 0.0
    %1044 = vmatmul.mubr.f32.gmra.mrb[0].mxu0 %v897
    %v1045 = vpop.f32.mrb[0].mxu0
    %v1046 = vadd.f32 0.0, %v1045
    %v1047 = vpop.f32.mrb[0].mxu0
    %1048 = vdwg.mxu0
    %v1049 = vld [vmem:[%s970 + $0x8] sm:$0xff]
    %v1050 = vadd.f32 %v1049, %v1046
    %v1051 = vxor.u32 %v1050, 2147483648
    %v1052 = vmul.f32 %v1051, 1.442695
    %v1053 = vpow.pop %v1052
    %v1054 = vadd.f32 %v1053, 1.0
    %v1055 = vrcp.pop %v1054
    %v1056 = vmul.f32 1.0, %v1055
    %v1057 = vld [vmem:[%s970 + $0x10] sm:$0xff]
    %1058 = vmatprep.subr.mxu0 0.0
    %1059 = vmatpush1.msra.mxu0 %v569
    %1060 = vmatprep.subr.mxu0 0.0
    %1061 = vmatpush1.msra.mxu0 %v570
    %1062 = vmatprep.subr.mxu0 0.0
    %1063 = vmatpush1.msra.mxu0 %v571
    %1064 = vmatprep.subr.mxu0 0.0
    %1065 = vmatpush1.msra.mxu0 %v572
    %1066 = vmatprep.subr.mxu0 0.0
    %1067 = vmatpush1.msra.mxu0 %v573
    %1068 = vmatprep.subr.mxu0 0.0
    %1069 = vmatpush1.msra.mxu0 %v574
    %1070 = vmatprep.subr.mxu0 0.0
    %1071 = vmatpush1.msra.mxu0 %v575
    %1072 = vmatprep.subr.mxu0 0.0
    %1073 = vmatpush1.msra.mxu0 %v576
    %1074 = vmatprep.subr.mxu0 0.0
    %1075 = vmatpush1.msra.mxu0 %v577
    %1076 = vmatprep.subr.mxu0 0.0
    %1077 = vmatpush1.msra.mxu0 %v578
    %1078 = vmatprep.subr.mxu0 0.0
    %1079 = vmatpush1.msra.mxu0 %v579
    %1080 = vmatprep.subr.mxu0 0.0
    %1081 = vmatpush1.msra.mxu0 %v580
    %1082 = vmatprep.subr.mxu0 0.0
    %1083 = vmatpush1.msra.mxu0 %v581
    %1084 = vmatprep.subr.mxu0 0.0
    %1085 = vmatpush1.msra.mxu0 %v582
    %1086 = vmatprep.subr.mxu0 0.0
    %1087 = vmatpush1.msra.mxu0 %v583
    %1088 = vmatprep.subr.mxu0 0.0
    %1089 = vmatpush1.msra.mxu0 %v584
    %1090 = vmatprep.subr.mxu0 0.0
    %1091 = vmatpush1.msra.mxu0 0.0
    %1092 = vmatprep.subr.mxu0 0.0
    %1093 = vmatpush1.msra.mxu0 0.0
    %1094 = vmatprep.subr.mxu0 0.0
    %1095 = vmatpush1.msra.mxu0 0.0
    %1096 = vmatprep.subr.mxu0 0.0
    %1097 = vmatpush1.msra.mxu0 0.0
    %1098 = vmatprep.subr.mxu0 0.0
    %1099 = vmatpush1.msra.mxu0 0.0
    %1100 = vmatprep.subr.mxu0 0.0
    %1101 = vmatpush1.msra.mxu0 0.0
    %1102 = vmatprep.subr.mxu0 0.0
    %1103 = vmatpush1.msra.mxu0 0.0
    %1104 = vmatprep.subr.mxu0 0.0
    %1105 = vmatpush1.msra.mxu0 0.0
    %1106 = vmatprep.subr.mxu0 0.0
    %1107 = vmatpush1.msra.mxu0 0.0
    %1108 = vmatprep.subr.mxu0 0.0
    %1109 = vmatpush1.msra.mxu0 0.0
    %1110 = vmatprep.subr.mxu0 0.0
    %1111 = vmatpush1.msra.mxu0 0.0
    %1112 = vmatprep.subr.mxu0 0.0
    %1113 = vmatpush1.msra.mxu0 0.0
    %1114 = vmatprep.subr.mxu0 0.0
    %1115 = vmatpush1.msra.mxu0 0.0
    %1116 = vmatprep.subr.mxu0 0.0
    %1117 = vmatpush1.msra.mxu0 0.0
    %1118 = vmatprep.subr.mxu0 0.0
    %1119 = vmatpush1.msra.mxu0 0.0
    %1120 = vmatprep.subr.mxu0 0.0
    %1121 = vmatpush1.msra.mxu0 0.0
    %1122 = vmatprep.mubr.f32.mxu0 0.0
    %1123 = vmatmul.mubr.f32.gmra.mrb[0].mxu0 %v897
    %v1124 = vpop.f32.mrb[0].mxu0
    %v1125 = vadd.f32 %v375, %v1124
    %v1126 = vpop.f32.mrb[0].mxu0
    %1127 = vdwg.mxu0
    %v1128 = vmul.f32 %v978, %v1125
    %v1129 = vadd.f32 %v1057, %v1128
    %v1130 = vtanh.pop %v1129
    %v1131 = vsub.f32 %v897, %v1130
    %v1132 = vmul.f32 %v1056, %v1131
    %v1133 = vadd.f32 %v1130, %v1132
    %1134 = vmatprep.subr.mxu0 0.0
    %1135 = vmatpush1.msra.mxu0 %v378
    %1136 = vmatprep.subr.mxu0 0.0
    %1137 = vmatpush1.msra.mxu0 %v379
    %1138 = vmatprep.subr.mxu0 0.0
    %1139 = vmatpush1.msra.mxu0 %v380
    %1140 = vmatprep.subr.mxu0 0.0
    %1141 = vmatpush1.msra.mxu0 %v381
    %1142 = vmatprep.subr.mxu0 0.0
    %1143 = vmatpush1.msra.mxu0 %v382
    %1144 = vmatprep.subr.mxu0 0.0
    %1145 = vmatpush1.msra.mxu0 %v383
    %1146 = vmatprep.subr.mxu0 0.0
    %1147 = vmatpush1.msra.mxu0 %v384
    %1148 = vmatprep.subr.mxu0 0.0
    %1149 = vmatpush1.msra.mxu0 %v385
    %1150 = vmatprep.subr.mxu0 0.0
    %1151 = vmatpush1.msra.mxu0 %v386
    %1152 = vmatprep.subr.mxu0 0.0
    %1153 = vmatpush1.msra.mxu0 %v387
    %1154 = vmatprep.subr.mxu0 0.0
    %1155 = vmatpush1.msra.mxu0 %v388
    %1156 = vmatprep.subr.mxu0 0.0
    %1157 = vmatpush1.msra.mxu0 %v389
    %1158 = vmatprep.subr.mxu0 0.0
    %1159 = vmatpush1.msra.mxu0 %v390
    %1160 = vmatprep.subr.mxu0 0.0
    %1161 = vmatpush1.msra.mxu0 %v391
    %1162 = vmatprep.subr.mxu0 0.0
    %1163 = vmatpush1.msra.mxu0 %v392
    %1164 = vmatprep.subr.mxu0 0.0
    %1165 = vmatpush1.msra.mxu0 %v393
    %1166 = vmatprep.subr.mxu0 0.0
    %1167 = vmatpush1.msra.mxu0 0.0
    %1168 = vmatprep.subr.mxu0 0.0
    %1169 = vmatpush1.msra.mxu0 0.0
    %1170 = vmatprep.subr.mxu0 0.0
    %1171 = vmatpush1.msra.mxu0 0.0
    %1172 = vmatprep.subr.mxu0 0.0
    %1173 = vmatpush1.msra.mxu0 0.0
    %1174 = vmatprep.subr.mxu0 0.0
    %1175 = vmatpush1.msra.mxu0 0.0
    %1176 = vmatprep.subr.mxu0 0.0
    %1177 = vmatpush1.msra.mxu0 0.0
    %1178 = vmatprep.subr.mxu0 0.0
    %1179 = vmatpush1.msra.mxu0 0.0
    %1180 = vmatprep.subr.mxu0 0.0
    %1181 = vmatpush1.msra.mxu0 0.0
    %1182 = vmatprep.subr.mxu0 0.0
    %1183 = vmatpush1.msra.mxu0 0.0
    %1184 = vmatprep.subr.mxu0 0.0
    %1185 = vmatpush1.msra.mxu0 0.0
    %1186 = vmatprep.subr.mxu0 0.0
    %1187 = vmatpush1.msra.mxu0 0.0
    %1188 = vmatprep.subr.mxu0 0.0
    %1189 = vmatpush1.msra.mxu0 0.0
    %1190 = vmatprep.subr.mxu0 0.0
    %1191 = vmatpush1.msra.mxu0 0.0
    %1192 = vmatprep.subr.mxu0 0.0
    %1193 = vmatpush1.msra.mxu0 0.0
    %1194 = vmatprep.subr.mxu0 0.0
    %1195 = vmatpush1.msra.mxu0 0.0
    %1196 = vmatprep.subr.mxu0 0.0
    %1197 = vmatpush1.msra.mxu0 0.0
    %1198 = vmatprep.mubr.f32.mxu0 0.0
    %1199 = vmatmul.mubr.f32.gmra.mrb[0].mxu0 %v1133
    %v1200 = vpop.f32.mrb[0].mxu0
    %v1201 = vadd.f32 0.0, %v1200
    %v1202 = vpop.f32.mrb[0].mxu0
    %1203 = vdwg.mxu0
    %s1204 = smul.u32 3, 3
    %s1205 = smul.addr %s1204, 8
    %s1206 = scalar_lea.vmem [#allocation3], %s1205
    %v1207 = vld [vmem:[%s1206] sm:$0xff]
    %v1208 = vadd.f32 %v1207, %v1201
    %v1209 = vxor.u32 %v1208, 2147483648
    %v1210 = vmul.f32 %v1209, 1.442695
    %v1211 = vpow.pop %v1210
    %v1212 = vadd.f32 %v1211, 1.0
    %v1213 = vrcp.pop %v1212
    %v1214 = vmul.f32 1.0, %v1213
    %1215 = vmatprep.subr.mxu0 0.0
    %1216 = vmatpush1.msra.mxu0 %v475
    %1217 = vmatprep.subr.mxu0 0.0
    %1218 = vmatpush1.msra.mxu0 %v476
    %1219 = vmatprep.subr.mxu0 0.0
    %1220 = vmatpush1.msra.mxu0 %v477
    %1221 = vmatprep.subr.mxu0 0.0
    %1222 = vmatpush1.msra.mxu0 %v478
    %1223 = vmatprep.subr.mxu0 0.0
    %1224 = vmatpush1.msra.mxu0 %v479
    %1225 = vmatprep.subr.mxu0 0.0
    %1226 = vmatpush1.msra.mxu0 %v480
    %1227 = vmatprep.subr.mxu0 0.0
    %1228 = vmatpush1.msra.mxu0 %v481
    %1229 = vmatprep.subr.mxu0 0.0
    %1230 = vmatpush1.msra.mxu0 %v482
    %1231 = vmatprep.subr.mxu0 0.0
    %1232 = vmatpush1.msra.mxu0 %v483
    %1233 = vmatprep.subr.mxu0 0.0
    %1234 = vmatpush1.msra.mxu0 %v484
    %1235 = vmatprep.subr.mxu0 0.0
    %1236 = vmatpush1.msra.mxu0 %v485
    %1237 = vmatprep.subr.mxu0 0.0
    %1238 = vmatpush1.msra.mxu0 %v486
    %1239 = vmatprep.subr.mxu0 0.0
    %1240 = vmatpush1.msra.mxu0 %v487
    %1241 = vmatprep.subr.mxu0 0.0
    %1242 = vmatpush1.msra.mxu0 %v488
    %1243 = vmatprep.subr.mxu0 0.0
    %1244 = vmatpush1.msra.mxu0 %v489
    %1245 = vmatprep.subr.mxu0 0.0
    %1246 = vmatpush1.msra.mxu0 %v490
    %1247 = vmatprep.subr.mxu0 0.0
    %1248 = vmatpush1.msra.mxu0 0.0
    %1249 = vmatprep.subr.mxu0 0.0
    %1250 = vmatpush1.msra.mxu0 0.0
    %1251 = vmatprep.subr.mxu0 0.0
    %1252 = vmatpush1.msra.mxu0 0.0
    %1253 = vmatprep.subr.mxu0 0.0
    %1254 = vmatpush1.msra.mxu0 0.0
    %1255 = vmatprep.subr.mxu0 0.0
    %1256 = vmatpush1.msra.mxu0 0.0
    %1257 = vmatprep.subr.mxu0 0.0
    %1258 = vmatpush1.msra.mxu0 0.0
    %1259 = vmatprep.subr.mxu0 0.0
    %1260 = vmatpush1.msra.mxu0 0.0
    %1261 = vmatprep.subr.mxu0 0.0
    %1262 = vmatpush1.msra.mxu0 0.0
    %1263 = vmatprep.subr.mxu0 0.0
    %1264 = vmatpush1.msra.mxu0 0.0
    %1265 = vmatprep.subr.mxu0 0.0
    %1266 = vmatpush1.msra.mxu0 0.0
    %1267 = vmatprep.subr.mxu0 0.0
    %1268 = vmatpush1.msra.mxu0 0.0
    %1269 = vmatprep.subr.mxu0 0.0
    %1270 = vmatpush1.msra.mxu0 0.0
    %1271 = vmatprep.subr.mxu0 0.0
    %1272 = vmatpush1.msra.mxu0 0.0
    %1273 = vmatprep.subr.mxu0 0.0
    %1274 = vmatpush1.msra.mxu0 0.0
    %1275 = vmatprep.subr.mxu0 0.0
    %1276 = vmatpush1.msra.mxu0 0.0
    %1277 = vmatprep.subr.mxu0 0.0
    %1278 = vmatpush1.msra.mxu0 0.0
    %1279 = vmatprep.mubr.f32.mxu0 0.0
    %1280 = vmatmul.mubr.f32.gmra.mrb[0].mxu0 %v1133
    %v1281 = vpop.f32.mrb[0].mxu0
    %v1282 = vadd.f32 0.0, %v1281
    %v1283 = vpop.f32.mrb[0].mxu0
    %1284 = vdwg.mxu0
    %v1285 = vld [vmem:[%s1206 + $0x8] sm:$0xff]
    %v1286 = vadd.f32 %v1285, %v1282
    %v1287 = vxor.u32 %v1286, 2147483648
    %v1288 = vmul.f32 %v1287, 1.442695
    %v1289 = vpow.pop %v1288
    %v1290 = vadd.f32 %v1289, 1.0
    %v1291 = vrcp.pop %v1290
    %v1292 = vmul.f32 1.0, %v1291
    %v1293 = vld [vmem:[%s1206 + $0x10] sm:$0xff]
    %1294 = vmatprep.subr.mxu0 0.0
    %1295 = vmatpush1.msra.mxu0 %v569
    %1296 = vmatprep.subr.mxu0 0.0
    %1297 = vmatpush1.msra.mxu0 %v570
    %1298 = vmatprep.subr.mxu0 0.0
    %1299 = vmatpush1.msra.mxu0 %v571
    %1300 = vmatprep.subr.mxu0 0.0
    %1301 = vmatpush1.msra.mxu0 %v572
    %1302 = vmatprep.subr.mxu0 0.0
    %1303 = vmatpush1.msra.mxu0 %v573
    %1304 = vmatprep.subr.mxu0 0.0
    %1305 = vmatpush1.msra.mxu0 %v574
    %1306 = vmatprep.subr.mxu0 0.0
    %1307 = vmatpush1.msra.mxu0 %v575
    %1308 = vmatprep.subr.mxu0 0.0
    %1309 = vmatpush1.msra.mxu0 %v576
    %1310 = vmatprep.subr.mxu0 0.0
    %1311 = vmatpush1.msra.mxu0 %v577
    %1312 = vmatprep.subr.mxu0 0.0
    %1313 = vmatpush1.msra.mxu0 %v578
    %1314 = vmatprep.subr.mxu0 0.0
    %1315 = vmatpush1.msra.mxu0 %v579
    %1316 = vmatprep.subr.mxu0 0.0
    %1317 = vmatpush1.msra.mxu0 %v580
    %1318 = vmatprep.subr.mxu0 0.0
    %1319 = vmatpush1.msra.mxu0 %v581
    %1320 = vmatprep.subr.mxu0 0.0
    %1321 = vmatpush1.msra.mxu0 %v582
    %1322 = vmatprep.subr.mxu0 0.0
    %1323 = vmatpush1.msra.mxu0 %v583
    %1324 = vmatprep.subr.mxu0 0.0
    %1325 = vmatpush1.msra.mxu0 %v584
    %1326 = vmatprep.subr.mxu0 0.0
    %1327 = vmatpush1.msra.mxu0 0.0
    %1328 = vmatprep.subr.mxu0 0.0
    %1329 = vmatpush1.msra.mxu0 0.0
    %1330 = vmatprep.subr.mxu0 0.0
    %1331 = vmatpush1.msra.mxu0 0.0
    %1332 = vmatprep.subr.mxu0 0.0
    %1333 = vmatpush1.msra.mxu0 0.0
    %1334 = vmatprep.subr.mxu0 0.0
    %1335 = vmatpush1.msra.mxu0 0.0
    %1336 = vmatprep.subr.mxu0 0.0
    %1337 = vmatpush1.msra.mxu0 0.0
    %1338 = vmatprep.subr.mxu0 0.0
    %1339 = vmatpush1.msra.mxu0 0.0
    %1340 = vmatprep.subr.mxu0 0.0
    %1341 = vmatpush1.msra.mxu0 0.0
    %1342 = vmatprep.subr.mxu0 0.0
    %1343 = vmatpush1.msra.mxu0 0.0
    %1344 = vmatprep.subr.mxu0 0.0
    %1345 = vmatpush1.msra.mxu0 0.0
    %1346 = vmatprep.subr.mxu0 0.0
    %1347 = vmatpush1.msra.mxu0 0.0
    %1348 = vmatprep.subr.mxu0 0.0
    %1349 = vmatpush1.msra.mxu0 0.0
    %1350 = vmatprep.subr.mxu0 0.0
    %1351 = vmatpush1.msra.mxu0 0.0
    %1352 = vmatprep.subr.mxu0 0.0
    %1353 = vmatpush1.msra.mxu0 0.0
    %1354 = vmatprep.subr.mxu0 0.0
    %1355 = vmatpush1.msra.mxu0 0.0
    %1356 = vmatprep.subr.mxu0 0.0
    %1357 = vmatpush1.msra.mxu0 0.0
    %1358 = vmatprep.mubr.f32.mxu0 0.0
    %1359 = vmatmul.mubr.f32.gmra.mrb[0].mxu0 %v1133
    %v1360 = vpop.f32.mrb[0].mxu0
    %v1361 = vadd.f32 %v375, %v1360
    %v1362 = vpop.f32.mrb[0].mxu0
    %1363 = vdwg.mxu0
    %v1364 = vmul.f32 %v1214, %v1361
    %v1365 = vadd.f32 %v1293, %v1364
    %v1366 = vtanh.pop %v1365
    %v1367 = vsub.f32 %v1133, %v1366
    %v1368 = vmul.f32 %v1292, %v1367
    %v1369 = vadd.f32 %v1366, %v1368
    %1370 = vmatprep.subr.mxu0 0.0
    %1371 = vmatpush1.msra.mxu0 %v378
    %1372 = vmatprep.subr.mxu0 0.0
    %1373 = vmatpush1.msra.mxu0 %v379
    %1374 = vmatprep.subr.mxu0 0.0
    %1375 = vmatpush1.msra.mxu0 %v380
    %1376 = vmatprep.subr.mxu0 0.0
    %1377 = vmatpush1.msra.mxu0 %v381
    %1378 = vmatprep.subr.mxu0 0.0
    %1379 = vmatpush1.msra.mxu0 %v382
    %1380 = vmatprep.subr.mxu0 0.0
    %1381 = vmatpush1.msra.mxu0 %v383
    %1382 = vmatprep.subr.mxu0 0.0
    %1383 = vmatpush1.msra.mxu0 %v384
    %1384 = vmatprep.subr.mxu0 0.0
    %1385 = vmatpush1.msra.mxu0 %v385
    %1386 = vmatprep.subr.mxu0 0.0
    %1387 = vmatpush1.msra.mxu0 %v386
    %1388 = vmatprep.subr.mxu0 0.0
    %1389 = vmatpush1.msra.mxu0 %v387
    %1390 = vmatprep.subr.mxu0 0.0
    %1391 = vmatpush1.msra.mxu0 %v388
    %1392 = vmatprep.subr.mxu0 0.0
    %1393 = vmatpush1.msra.mxu0 %v389
    %1394 = vmatprep.subr.mxu0 0.0
    %1395 = vmatpush1.msra.mxu0 %v390
    %1396 = vmatprep.subr.mxu0 0.0
    %1397 = vmatpush1.msra.mxu0 %v391
    %1398 = vmatprep.subr.mxu0 0.0
    %1399 = vmatpush1.msra.mxu0 %v392
    %1400 = vmatprep.subr.mxu0 0.0
    %1401 = vmatpush1.msra.mxu0 %v393
    %1402 = vmatprep.subr.mxu0 0.0
    %1403 = vmatpush1.msra.mxu0 0.0
    %1404 = vmatprep.subr.mxu0 0.0
    %1405 = vmatpush1.msra.mxu0 0.0
    %1406 = vmatprep.subr.mxu0 0.0
    %1407 = vmatpush1.msra.mxu0 0.0
    %1408 = vmatprep.subr.mxu0 0.0
    %1409 = vmatpush1.msra.mxu0 0.0
    %1410 = vmatprep.subr.mxu0 0.0
    %1411 = vmatpush1.msra.mxu0 0.0
    %1412 = vmatprep.subr.mxu0 0.0
    %1413 = vmatpush1.msra.mxu0 0.0
    %1414 = vmatprep.subr.mxu0 0.0
    %1415 = vmatpush1.msra.mxu0 0.0
    %1416 = vmatprep.subr.mxu0 0.0
    %1417 = vmatpush1.msra.mxu0 0.0
    %1418 = vmatprep.subr.mxu0 0.0
    %1419 = vmatpush1.msra.mxu0 0.0
    %1420 = vmatprep.subr.mxu0 0.0
    %1421 = vmatpush1.msra.mxu0 0.0
    %1422 = vmatprep.subr.mxu0 0.0
    %1423 = vmatpush1.msra.mxu0 0.0
    %1424 = vmatprep.subr.mxu0 0.0
    %1425 = vmatpush1.msra.mxu0 0.0
    %1426 = vmatprep.subr.mxu0 0.0
    %1427 = vmatpush1.msra.mxu0 0.0
    %1428 = vmatprep.subr.mxu0 0.0
    %1429 = vmatpush1.msra.mxu0 0.0
    %1430 = vmatprep.subr.mxu0 0.0
    %1431 = vmatpush1.msra.mxu0 0.0
    %1432 = vmatprep.subr.mxu0 0.0
    %1433 = vmatpush1.msra.mxu0 0.0
    %1434 = vmatprep.mubr.f32.mxu0 0.0
    %1435 = vmatmul.mubr.f32.gmra.mrb[0].mxu0 %v1369
    %v1436 = vpop.f32.mrb[0].mxu0
    %v1437 = vadd.f32 0.0, %v1436
    %v1438 = vpop.f32.mrb[0].mxu0
    %1439 = vdwg.mxu0
    %s1440 = smul.u32 4, 3
    %s1441 = smul.addr %s1440, 8
    %s1442 = scalar_lea.vmem [#allocation3], %s1441
    %v1443 = vld [vmem:[%s1442] sm:$0xff]
    %v1444 = vadd.f32 %v1443, %v1437
    %v1445 = vxor.u32 %v1444, 2147483648
    %v1446 = vmul.f32 %v1445, 1.442695
    %v1447 = vpow.pop %v1446
    %v1448 = vadd.f32 %v1447, 1.0
    %v1449 = vrcp.pop %v1448
    %v1450 = vmul.f32 1.0, %v1449
    %1451 = vmatprep.subr.mxu0 0.0
    %1452 = vmatpush1.msra.mxu0 %v475
    %1453 = vmatprep.subr.mxu0 0.0
    %1454 = vmatpush1.msra.mxu0 %v476
    %1455 = vmatprep.subr.mxu0 0.0
    %1456 = vmatpush1.msra.mxu0 %v477
    %1457 = vmatprep.subr.mxu0 0.0
    %1458 = vmatpush1.msra.mxu0 %v478
    %1459 = vmatprep.subr.mxu0 0.0
    %1460 = vmatpush1.msra.mxu0 %v479
    %1461 = vmatprep.subr.mxu0 0.0
    %1462 = vmatpush1.msra.mxu0 %v480
    %1463 = vmatprep.subr.mxu0 0.0
    %1464 = vmatpush1.msra.mxu0 %v481
    %1465 = vmatprep.subr.mxu0 0.0
    %1466 = vmatpush1.msra.mxu0 %v482
    %1467 = vmatprep.subr.mxu0 0.0
    %1468 = vmatpush1.msra.mxu0 %v483
    %1469 = vmatprep.subr.mxu0 0.0
    %1470 = vmatpush1.msra.mxu0 %v484
    %1471 = vmatprep.subr.mxu0 0.0
    %1472 = vmatpush1.msra.mxu0 %v485
    %1473 = vmatprep.subr.mxu0 0.0
    %1474 = vmatpush1.msra.mxu0 %v486
    %1475 = vmatprep.subr.mxu0 0.0
    %1476 = vmatpush1.msra.mxu0 %v487
    %1477 = vmatprep.subr.mxu0 0.0
    %1478 = vmatpush1.msra.mxu0 %v488
    %1479 = vmatprep.subr.mxu0 0.0
    %1480 = vmatpush1.msra.mxu0 %v489
    %1481 = vmatprep.subr.mxu0 0.0
    %1482 = vmatpush1.msra.mxu0 %v490
    %1483 = vmatprep.subr.mxu0 0.0
    %1484 = vmatpush1.msra.mxu0 0.0
    %1485 = vmatprep.subr.mxu0 0.0
    %1486 = vmatpush1.msra.mxu0 0.0
    %1487 = vmatprep.subr.mxu0 0.0
    %1488 = vmatpush1.msra.mxu0 0.0
    %1489 = vmatprep.subr.mxu0 0.0
    %1490 = vmatpush1.msra.mxu0 0.0
    %1491 = vmatprep.subr.mxu0 0.0
    %1492 = vmatpush1.msra.mxu0 0.0
    %1493 = vmatprep.subr.mxu0 0.0
    %1494 = vmatpush1.msra.mxu0 0.0
    %1495 = vmatprep.subr.mxu0 0.0
    %1496 = vmatpush1.msra.mxu0 0.0
    %1497 = vmatprep.subr.mxu0 0.0
    %1498 = vmatpush1.msra.mxu0 0.0
    %1499 = vmatprep.subr.mxu0 0.0
    %1500 = vmatpush1.msra.mxu0 0.0
    %1501 = vmatprep.subr.mxu0 0.0
    %1502 = vmatpush1.msra.mxu0 0.0
    %1503 = vmatprep.subr.mxu0 0.0
    %1504 = vmatpush1.msra.mxu0 0.0
    %1505 = vmatprep.subr.mxu0 0.0
    %1506 = vmatpush1.msra.mxu0 0.0
    %1507 = vmatprep.subr.mxu0 0.0
    %1508 = vmatpush1.msra.mxu0 0.0
    %1509 = vmatprep.subr.mxu0 0.0
    %1510 = vmatpush1.msra.mxu0 0.0
    %1511 = vmatprep.subr.mxu0 0.0
    %1512 = vmatpush1.msra.mxu0 0.0
    %1513 = vmatprep.subr.mxu0 0.0
    %1514 = vmatpush1.msra.mxu0 0.0
    %1515 = vmatprep.mubr.f32.mxu0 0.0
    %1516 = vmatmul.mubr.f32.gmra.mrb[0].mxu0 %v1369
    %v1517 = vpop.f32.mrb[0].mxu0
    %v1518 = vadd.f32 0.0, %v1517
    %v1519 = vpop.f32.mrb[0].mxu0
    %1520 = vdwg.mxu0
    %v1521 = vld [vmem:[%s1442 + $0x8] sm:$0xff]
    %v1522 = vadd.f32 %v1521, %v1518
    %v1523 = vxor.u32 %v1522, 2147483648
    %v1524 = vmul.f32 %v1523, 1.442695
    %v1525 = vpow.pop %v1524
    %v1526 = vadd.f32 %v1525, 1.0
    %v1527 = vrcp.pop %v1526
    %v1528 = vmul.f32 1.0, %v1527
    %v1529 = vld [vmem:[%s1442 + $0x10] sm:$0xff]
    %1530 = vmatprep.subr.mxu0 0.0
    %1531 = vmatpush1.msra.mxu0 %v569
    %1532 = vmatprep.subr.mxu0 0.0
    %1533 = vmatpush1.msra.mxu0 %v570
    %1534 = vmatprep.subr.mxu0 0.0
    %1535 = vmatpush1.msra.mxu0 %v571
    %1536 = vmatprep.subr.mxu0 0.0
    %1537 = vmatpush1.msra.mxu0 %v572
    %1538 = vmatprep.subr.mxu0 0.0
    %1539 = vmatpush1.msra.mxu0 %v573
    %1540 = vmatprep.subr.mxu0 0.0
    %1541 = vmatpush1.msra.mxu0 %v574
    %1542 = vmatprep.subr.mxu0 0.0
    %1543 = vmatpush1.msra.mxu0 %v575
    %1544 = vmatprep.subr.mxu0 0.0
    %1545 = vmatpush1.msra.mxu0 %v576
    %1546 = vmatprep.subr.mxu0 0.0
    %1547 = vmatpush1.msra.mxu0 %v577
    %1548 = vmatprep.subr.mxu0 0.0
    %1549 = vmatpush1.msra.mxu0 %v578
    %1550 = vmatprep.subr.mxu0 0.0
    %1551 = vmatpush1.msra.mxu0 %v579
    %1552 = vmatprep.subr.mxu0 0.0
    %1553 = vmatpush1.msra.mxu0 %v580
    %1554 = vmatprep.subr.mxu0 0.0
    %1555 = vmatpush1.msra.mxu0 %v581
    %1556 = vmatprep.subr.mxu0 0.0
    %1557 = vmatpush1.msra.mxu0 %v582
    %1558 = vmatprep.subr.mxu0 0.0
    %1559 = vmatpush1.msra.mxu0 %v583
    %1560 = vmatprep.subr.mxu0 0.0
    %1561 = vmatpush1.msra.mxu0 %v584
    %1562 = vmatprep.subr.mxu0 0.0
    %1563 = vmatpush1.msra.mxu0 0.0
    %1564 = vmatprep.subr.mxu0 0.0
    %1565 = vmatpush1.msra.mxu0 0.0
    %1566 = vmatprep.subr.mxu0 0.0
    %1567 = vmatpush1.msra.mxu0 0.0
    %1568 = vmatprep.subr.mxu0 0.0
    %1569 = vmatpush1.msra.mxu0 0.0
    %1570 = vmatprep.subr.mxu0 0.0
    %1571 = vmatpush1.msra.mxu0 0.0
    %1572 = vmatprep.subr.mxu0 0.0
    %1573 = vmatpush1.msra.mxu0 0.0
    %1574 = vmatprep.subr.mxu0 0.0
    %1575 = vmatpush1.msra.mxu0 0.0
    %1576 = vmatprep.subr.mxu0 0.0
    %1577 = vmatpush1.msra.mxu0 0.0
    %1578 = vmatprep.subr.mxu0 0.0
    %1579 = vmatpush1.msra.mxu0 0.0
    %1580 = vmatprep.subr.mxu0 0.0
    %1581 = vmatpush1.msra.mxu0 0.0
    %1582 = vmatprep.subr.mxu0 0.0
    %1583 = vmatpush1.msra.mxu0 0.0
    %1584 = vmatprep.subr.mxu0 0.0
    %1585 = vmatpush1.msra.mxu0 0.0
    %1586 = vmatprep.subr.mxu0 0.0
    %1587 = vmatpush1.msra.mxu0 0.0
    %1588 = vmatprep.subr.mxu0 0.0
    %1589 = vmatpush1.msra.mxu0 0.0
    %1590 = vmatprep.subr.mxu0 0.0
    %1591 = vmatpush1.msra.mxu0 0.0
    %1592 = vmatprep.subr.mxu0 0.0
    %1593 = vmatpush1.msra.mxu0 0.0
    %1594 = vmatprep.mubr.f32.mxu0 0.0
    %1595 = vmatmul.mubr.f32.gmra.mrb[0].mxu0 %v1369
    %v1596 = vpop.f32.mrb[0].mxu0
    %v1597 = vadd.f32 %v375, %v1596
    %v1598 = vpop.f32.mrb[0].mxu0
    %1599 = vdwg.mxu0
    %v1600 = vmul.f32 %v1450, %v1597
    %v1601 = vadd.f32 %v1529, %v1600
    %v1602 = vtanh.pop %v1601
    %v1603 = vsub.f32 %v1369, %v1602
    %v1604 = vmul.f32 %v1528, %v1603
    %v1605 = vadd.f32 %v1602, %v1604
    %1606 = vmatprep.subr.mxu0 0.0
    %1607 = vmatpush1.msra.mxu0 %v378
    %1608 = vmatprep.subr.mxu0 0.0
    %1609 = vmatpush1.msra.mxu0 %v379
    %1610 = vmatprep.subr.mxu0 0.0
    %1611 = vmatpush1.msra.mxu0 %v380
    %1612 = vmatprep.subr.mxu0 0.0
    %1613 = vmatpush1.msra.mxu0 %v381
    %1614 = vmatprep.subr.mxu0 0.0
    %1615 = vmatpush1.msra.mxu0 %v382
    %1616 = vmatprep.subr.mxu0 0.0
    %1617 = vmatpush1.msra.mxu0 %v383
    %1618 = vmatprep.subr.mxu0 0.0
    %1619 = vmatpush1.msra.mxu0 %v384
    %1620 = vmatprep.subr.mxu0 0.0
    %1621 = vmatpush1.msra.mxu0 %v385
    %1622 = vmatprep.subr.mxu0 0.0
    %1623 = vmatpush1.msra.mxu0 %v386
    %1624 = vmatprep.subr.mxu0 0.0
    %1625 = vmatpush1.msra.mxu0 %v387
    %1626 = vmatprep.subr.mxu0 0.0
    %1627 = vmatpush1.msra.mxu0 %v388
    %1628 = vmatprep.subr.mxu0 0.0
    %1629 = vmatpush1.msra.mxu0 %v389
    %1630 = vmatprep.subr.mxu0 0.0
    %1631 = vmatpush1.msra.mxu0 %v390
    %1632 = vmatprep.subr.mxu0 0.0
    %1633 = vmatpush1.msra.mxu0 %v391
    %1634 = vmatprep.subr.mxu0 0.0
    %1635 = vmatpush1.msra.mxu0 %v392
    %1636 = vmatprep.subr.mxu0 0.0
    %1637 = vmatpush1.msra.mxu0 %v393
    %1638 = vmatprep.subr.mxu0 0.0
    %1639 = vmatpush1.msra.mxu0 0.0
    %1640 = vmatprep.subr.mxu0 0.0
    %1641 = vmatpush1.msra.mxu0 0.0
    %1642 = vmatprep.subr.mxu0 0.0
    %1643 = vmatpush1.msra.mxu0 0.0
    %1644 = vmatprep.subr.mxu0 0.0
    %1645 = vmatpush1.msra.mxu0 0.0
    %1646 = vmatprep.subr.mxu0 0.0
    %1647 = vmatpush1.msra.mxu0 0.0
    %1648 = vmatprep.subr.mxu0 0.0
    %1649 = vmatpush1.msra.mxu0 0.0
    %1650 = vmatprep.subr.mxu0 0.0
    %1651 = vmatpush1.msra.mxu0 0.0
    %1652 = vmatprep.subr.mxu0 0.0
    %1653 = vmatpush1.msra.mxu0 0.0
    %1654 = vmatprep.subr.mxu0 0.0
    %1655 = vmatpush1.msra.mxu0 0.0
    %1656 = vmatprep.subr.mxu0 0.0
    %1657 = vmatpush1.msra.mxu0 0.0
    %1658 = vmatprep.subr.mxu0 0.0
    %1659 = vmatpush1.msra.mxu0 0.0
    %1660 = vmatprep.subr.mxu0 0.0
    %1661 = vmatpush1.msra.mxu0 0.0
    %1662 = vmatprep.subr.mxu0 0.0
    %1663 = vmatpush1.msra.mxu0 0.0
    %1664 = vmatprep.subr.mxu0 0.0
    %1665 = vmatpush1.msra.mxu0 0.0
    %1666 = vmatprep.subr.mxu0 0.0
    %1667 = vmatpush1.msra.mxu0 0.0
    %1668 = vmatprep.subr.mxu0 0.0
    %1669 = vmatpush1.msra.mxu0 0.0
    %1670 = vmatprep.mubr.f32.mxu0 0.0
    %1671 = vmatmul.mubr.f32.gmra.mrb[0].mxu0 %v1605
    %v1672 = vpop.f32.mrb[0].mxu0
    %v1673 = vadd.f32 0.0, %v1672
    %v1674 = vpop.f32.mrb[0].mxu0
    %1675 = vdwg.mxu0
    %s1676 = smul.u32 5, 3
    %s1677 = smul.addr %s1676, 8
    %s1678 = scalar_lea.vmem [#allocation3], %s1677
    %v1679 = vld [vmem:[%s1678] sm:$0xff]
    %v1680 = vadd.f32 %v1679, %v1673
    %v1681 = vxor.u32 %v1680, 2147483648
    %v1682 = vmul.f32 %v1681, 1.442695
    %v1683 = vpow.pop %v1682
    %v1684 = vadd.f32 %v1683, 1.0
    %v1685 = vrcp.pop %v1684
    %v1686 = vmul.f32 1.0, %v1685
    %1687 = vmatprep.subr.mxu0 0.0
    %1688 = vmatpush1.msra.mxu0 %v475
    %1689 = vmatprep.subr.mxu0 0.0
    %1690 = vmatpush1.msra.mxu0 %v476
    %1691 = vmatprep.subr.mxu0 0.0
    %1692 = vmatpush1.msra.mxu0 %v477
    %1693 = vmatprep.subr.mxu0 0.0
    %1694 = vmatpush1.msra.mxu0 %v478
    %1695 = vmatprep.subr.mxu0 0.0
    %1696 = vmatpush1.msra.mxu0 %v479
    %1697 = vmatprep.subr.mxu0 0.0
    %1698 = vmatpush1.msra.mxu0 %v480
    %1699 = vmatprep.subr.mxu0 0.0
    %1700 = vmatpush1.msra.mxu0 %v481
    %1701 = vmatprep.subr.mxu0 0.0
    %1702 = vmatpush1.msra.mxu0 %v482
    %1703 = vmatprep.subr.mxu0 0.0
    %1704 = vmatpush1.msra.mxu0 %v483
    %1705 = vmatprep.subr.mxu0 0.0
    %1706 = vmatpush1.msra.mxu0 %v484
    %1707 = vmatprep.subr.mxu0 0.0
    %1708 = vmatpush1.msra.mxu0 %v485
    %1709 = vmatprep.subr.mxu0 0.0
    %1710 = vmatpush1.msra.mxu0 %v486
    %1711 = vmatprep.subr.mxu0 0.0
    %1712 = vmatpush1.msra.mxu0 %v487
    %1713 = vmatprep.subr.mxu0 0.0
    %1714 = vmatpush1.msra.mxu0 %v488
    %1715 = vmatprep.subr.mxu0 0.0
    %1716 = vmatpush1.msra.mxu0 %v489
    %1717 = vmatprep.subr.mxu0 0.0
    %1718 = vmatpush1.msra.mxu0 %v490
    %1719 = vmatprep.subr.mxu0 0.0
    %1720 = vmatpush1.msra.mxu0 0.0
    %1721 = vmatprep.subr.mxu0 0.0
    %1722 = vmatpush1.msra.mxu0 0.0
    %1723 = vmatprep.subr.mxu0 0.0
    %1724 = vmatpush1.msra.mxu0 0.0
    %1725 = vmatprep.subr.mxu0 0.0
    %1726 = vmatpush1.msra.mxu0 0.0
    %1727 = vmatprep.subr.mxu0 0.0
    %1728 = vmatpush1.msra.mxu0 0.0
    %1729 = vmatprep.subr.mxu0 0.0
    %1730 = vmatpush1.msra.mxu0 0.0
    %1731 = vmatprep.subr.mxu0 0.0
    %1732 = vmatpush1.msra.mxu0 0.0
    %1733 = vmatprep.subr.mxu0 0.0
    %1734 = vmatpush1.msra.mxu0 0.0
    %1735 = vmatprep.subr.mxu0 0.0
    %1736 = vmatpush1.msra.mxu0 0.0
    %1737 = vmatprep.subr.mxu0 0.0
    %1738 = vmatpush1.msra.mxu0 0.0
    %1739 = vmatprep.subr.mxu0 0.0
    %1740 = vmatpush1.msra.mxu0 0.0
    %1741 = vmatprep.subr.mxu0 0.0
    %1742 = vmatpush1.msra.mxu0 0.0
    %1743 = vmatprep.subr.mxu0 0.0
    %1744 = vmatpush1.msra.mxu0 0.0
    %1745 = vmatprep.subr.mxu0 0.0
    %1746 = vmatpush1.msra.mxu0 0.0
    %1747 = vmatprep.subr.mxu0 0.0
    %1748 = vmatpush1.msra.mxu0 0.0
    %1749 = vmatprep.subr.mxu0 0.0
    %1750 = vmatpush1.msra.mxu0 0.0
    %1751 = vmatprep.mubr.f32.mxu0 0.0
    %1752 = vmatmul.mubr.f32.gmra.mrb[0].mxu0 %v1605
    %v1753 = vpop.f32.mrb[0].mxu0
    %v1754 = vadd.f32 0.0, %v1753
    %v1755 = vpop.f32.mrb[0].mxu0
    %1756 = vdwg.mxu0
    %v1757 = vld [vmem:[%s1678 + $0x8] sm:$0xff]
    %v1758 = vadd.f32 %v1757, %v1754
    %v1759 = vxor.u32 %v1758, 2147483648
    %v1760 = vmul.f32 %v1759, 1.442695
    %v1761 = vpow.pop %v1760
    %v1762 = vadd.f32 %v1761, 1.0
    %v1763 = vrcp.pop %v1762
    %v1764 = vmul.f32 1.0, %v1763
    %v1765 = vld [vmem:[%s1678 + $0x10] sm:$0xff]
    %1766 = vmatprep.subr.mxu0 0.0
    %1767 = vmatpush1.msra.mxu0 %v569
    %1768 = vmatprep.subr.mxu0 0.0
    %1769 = vmatpush1.msra.mxu0 %v570
    %1770 = vmatprep.subr.mxu0 0.0
    %1771 = vmatpush1.msra.mxu0 %v571
    %1772 = vmatprep.subr.mxu0 0.0
    %1773 = vmatpush1.msra.mxu0 %v572
    %1774 = vmatprep.subr.mxu0 0.0
    %1775 = vmatpush1.msra.mxu0 %v573
    %1776 = vmatprep.subr.mxu0 0.0
    %1777 = vmatpush1.msra.mxu0 %v574
    %1778 = vmatprep.subr.mxu0 0.0
    %1779 = vmatpush1.msra.mxu0 %v575
    %1780 = vmatprep.subr.mxu0 0.0
    %1781 = vmatpush1.msra.mxu0 %v576
    %1782 = vmatprep.subr.mxu0 0.0
    %1783 = vmatpush1.msra.mxu0 %v577
    %1784 = vmatprep.subr.mxu0 0.0
    %1785 = vmatpush1.msra.mxu0 %v578
    %1786 = vmatprep.subr.mxu0 0.0
    %1787 = vmatpush1.msra.mxu0 %v579
    %1788 = vmatprep.subr.mxu0 0.0
    %1789 = vmatpush1.msra.mxu0 %v580
    %1790 = vmatprep.subr.mxu0 0.0
    %1791 = vmatpush1.msra.mxu0 %v581
    %1792 = vmatprep.subr.mxu0 0.0
    %1793 = vmatpush1.msra.mxu0 %v582
    %1794 = vmatprep.subr.mxu0 0.0
    %1795 = vmatpush1.msra.mxu0 %v583
    %1796 = vmatprep.subr.mxu0 0.0
    %1797 = vmatpush1.msra.mxu0 %v584
    %1798 = vmatprep.subr.mxu0 0.0
    %1799 = vmatpush1.msra.mxu0 0.0
    %1800 = vmatprep.subr.mxu0 0.0
    %1801 = vmatpush1.msra.mxu0 0.0
    %1802 = vmatprep.subr.mxu0 0.0
    %1803 = vmatpush1.msra.mxu0 0.0
    %1804 = vmatprep.subr.mxu0 0.0
    %1805 = vmatpush1.msra.mxu0 0.0
    %1806 = vmatprep.subr.mxu0 0.0
    %1807 = vmatpush1.msra.mxu0 0.0
    %1808 = vmatprep.subr.mxu0 0.0
    %1809 = vmatpush1.msra.mxu0 0.0
    %1810 = vmatprep.subr.mxu0 0.0
    %1811 = vmatpush1.msra.mxu0 0.0
    %1812 = vmatprep.subr.mxu0 0.0
    %1813 = vmatpush1.msra.mxu0 0.0
    %1814 = vmatprep.subr.mxu0 0.0
    %1815 = vmatpush1.msra.mxu0 0.0
    %1816 = vmatprep.subr.mxu0 0.0
    %1817 = vmatpush1.msra.mxu0 0.0
    %1818 = vmatprep.subr.mxu0 0.0
    %1819 = vmatpush1.msra.mxu0 0.0
    %1820 = vmatprep.subr.mxu0 0.0
    %1821 = vmatpush1.msra.mxu0 0.0
    %1822 = vmatprep.subr.mxu0 0.0
    %1823 = vmatpush1.msra.mxu0 0.0
    %1824 = vmatprep.subr.mxu0 0.0
    %1825 = vmatpush1.msra.mxu0 0.0
    %1826 = vmatprep.subr.mxu0 0.0
    %1827 = vmatpush1.msra.mxu0 0.0
    %1828 = vmatprep.subr.mxu0 0.0
    %1829 = vmatpush1.msra.mxu0 0.0
    %1830 = vmatprep.mubr.f32.mxu0 0.0
    %1831 = vmatmul.mubr.f32.gmra.mrb[0].mxu0 %v1605
    %v1832 = vpop.f32.mrb[0].mxu0
    %v1833 = vadd.f32 %v375, %v1832
    %v1834 = vpop.f32.mrb[0].mxu0
    %1835 = vdwg.mxu0
    %v1836 = vmul.f32 %v1686, %v1833
    %v1837 = vadd.f32 %v1765, %v1836
    %v1838 = vtanh.pop %v1837
    %v1839 = vsub.f32 %v1605, %v1838
    %v1840 = vmul.f32 %v1764, %v1839
    %v1841 = vadd.f32 %v1838, %v1840
    %1842 = vmatprep.subr.mxu0 0.0
    %1843 = vmatpush1.msra.mxu0 %v378
    %1844 = vmatprep.subr.mxu0 0.0
    %1845 = vmatpush1.msra.mxu0 %v379
    %1846 = vmatprep.subr.mxu0 0.0
    %1847 = vmatpush1.msra.mxu0 %v380
    %1848 = vmatprep.subr.mxu0 0.0
    %1849 = vmatpush1.msra.mxu0 %v381
    %1850 = vmatprep.subr.mxu0 0.0
    %1851 = vmatpush1.msra.mxu0 %v382
    %1852 = vmatprep.subr.mxu0 0.0
    %1853 = vmatpush1.msra.mxu0 %v383
    %1854 = vmatprep.subr.mxu0 0.0
    %1855 = vmatpush1.msra.mxu0 %v384
    %1856 = vmatprep.subr.mxu0 0.0
    %1857 = vmatpush1.msra.mxu0 %v385
    %1858 = vmatprep.subr.mxu0 0.0
    %1859 = vmatpush1.msra.mxu0 %v386
    %1860 = vmatprep.subr.mxu0 0.0
    %1861 = vmatpush1.msra.mxu0 %v387
    %1862 = vmatprep.subr.mxu0 0.0
    %1863 = vmatpush1.msra.mxu0 %v388
    %1864 = vmatprep.subr.mxu0 0.0
    %1865 = vmatpush1.msra.mxu0 %v389
    %1866 = vmatprep.subr.mxu0 0.0
    %1867 = vmatpush1.msra.mxu0 %v390
    %1868 = vmatprep.subr.mxu0 0.0
    %1869 = vmatpush1.msra.mxu0 %v391
    %1870 = vmatprep.subr.mxu0 0.0
    %1871 = vmatpush1.msra.mxu0 %v392
    %1872 = vmatprep.subr.mxu0 0.0
    %1873 = vmatpush1.msra.mxu0 %v393
    %1874 = vmatprep.subr.mxu0 0.0
    %1875 = vmatpush1.msra.mxu0 0.0
    %1876 = vmatprep.subr.mxu0 0.0
    %1877 = vmatpush1.msra.mxu0 0.0
    %1878 = vmatprep.subr.mxu0 0.0
    %1879 = vmatpush1.msra.mxu0 0.0
    %1880 = vmatprep.subr.mxu0 0.0
    %1881 = vmatpush1.msra.mxu0 0.0
    %1882 = vmatprep.subr.mxu0 0.0
    %1883 = vmatpush1.msra.mxu0 0.0
    %1884 = vmatprep.subr.mxu0 0.0
    %1885 = vmatpush1.msra.mxu0 0.0
    %1886 = vmatprep.subr.mxu0 0.0
    %1887 = vmatpush1.msra.mxu0 0.0
    %1888 = vmatprep.subr.mxu0 0.0
    %1889 = vmatpush1.msra.mxu0 0.0
    %1890 = vmatprep.subr.mxu0 0.0
    %1891 = vmatpush1.msra.mxu0 0.0
    %1892 = vmatprep.subr.mxu0 0.0
    %1893 = vmatpush1.msra.mxu0 0.0
    %1894 = vmatprep.subr.mxu0 0.0
    %1895 = vmatpush1.msra.mxu0 0.0
    %1896 = vmatprep.subr.mxu0 0.0
    %1897 = vmatpush1.msra.mxu0 0.0
    %1898 = vmatprep.subr.mxu0 0.0
    %1899 = vmatpush1.msra.mxu0 0.0
    %1900 = vmatprep.subr.mxu0 0.0
    %1901 = vmatpush1.msra.mxu0 0.0
    %1902 = vmatprep.subr.mxu0 0.0
    %1903 = vmatpush1.msra.mxu0 0.0
    %1904 = vmatprep.subr.mxu0 0.0
    %1905 = vmatpush1.msra.mxu0 0.0
    %1906 = vmatprep.mubr.f32.mxu0 0.0
    %1907 = vmatmul.mubr.f32.gmra.mrb[0].mxu0 %v1841
    %v1908 = vpop.f32.mrb[0].mxu0
    %v1909 = vadd.f32 0.0, %v1908
    %v1910 = vpop.f32.mrb[0].mxu0
    %1911 = vdwg.mxu0
    %s1912 = smul.u32 6, 3
    %s1913 = smul.addr %s1912, 8
    %s1914 = scalar_lea.vmem [#allocation3], %s1913
    %v1915 = vld [vmem:[%s1914] sm:$0xff]
    %v1916 = vadd.f32 %v1915, %v1909
    %v1917 = vxor.u32 %v1916, 2147483648
    %v1918 = vmul.f32 %v1917, 1.442695
    %v1919 = vpow.pop %v1918
    %v1920 = vadd.f32 %v1919, 1.0
    %v1921 = vrcp.pop %v1920
    %v1922 = vmul.f32 1.0, %v1921
    %1923 = vmatprep.subr.mxu0 0.0
    %1924 = vmatpush1.msra.mxu0 %v475
    %1925 = vmatprep.subr.mxu0 0.0
    %1926 = vmatpush1.msra.mxu0 %v476
    %1927 = vmatprep.subr.mxu0 0.0
    %1928 = vmatpush1.msra.mxu0 %v477
    %1929 = vmatprep.subr.mxu0 0.0
    %1930 = vmatpush1.msra.mxu0 %v478
    %1931 = vmatprep.subr.mxu0 0.0
    %1932 = vmatpush1.msra.mxu0 %v479
    %1933 = vmatprep.subr.mxu0 0.0
    %1934 = vmatpush1.msra.mxu0 %v480
    %1935 = vmatprep.subr.mxu0 0.0
    %1936 = vmatpush1.msra.mxu0 %v481
    %1937 = vmatprep.subr.mxu0 0.0
    %1938 = vmatpush1.msra.mxu0 %v482
    %1939 = vmatprep.subr.mxu0 0.0
    %1940 = vmatpush1.msra.mxu0 %v483
    %1941 = vmatprep.subr.mxu0 0.0
    %1942 = vmatpush1.msra.mxu0 %v484
    %1943 = vmatprep.subr.mxu0 0.0
    %1944 = vmatpush1.msra.mxu0 %v485
    %1945 = vmatprep.subr.mxu0 0.0
    %1946 = vmatpush1.msra.mxu0 %v486
    %1947 = vmatprep.subr.mxu0 0.0
    %1948 = vmatpush1.msra.mxu0 %v487
    %1949 = vmatprep.subr.mxu0 0.0
    %1950 = vmatpush1.msra.mxu0 %v488
    %1951 = vmatprep.subr.mxu0 0.0
    %1952 = vmatpush1.msra.mxu0 %v489
    %1953 = vmatprep.subr.mxu0 0.0
    %1954 = vmatpush1.msra.mxu0 %v490
    %1955 = vmatprep.subr.mxu0 0.0
    %1956 = vmatpush1.msra.mxu0 0.0
    %1957 = vmatprep.subr.mxu0 0.0
    %1958 = vmatpush1.msra.mxu0 0.0
    %1959 = vmatprep.subr.mxu0 0.0
    %1960 = vmatpush1.msra.mxu0 0.0
    %1961 = vmatprep.subr.mxu0 0.0
    %1962 = vmatpush1.msra.mxu0 0.0
    %1963 = vmatprep.subr.mxu0 0.0
    %1964 = vmatpush1.msra.mxu0 0.0
    %1965 = vmatprep.subr.mxu0 0.0
    %1966 = vmatpush1.msra.mxu0 0.0
    %1967 = vmatprep.subr.mxu0 0.0
    %1968 = vmatpush1.msra.mxu0 0.0
    %1969 = vmatprep.subr.mxu0 0.0
    %1970 = vmatpush1.msra.mxu0 0.0
    %1971 = vmatprep.subr.mxu0 0.0
    %1972 = vmatpush1.msra.mxu0 0.0
    %1973 = vmatprep.subr.mxu0 0.0
    %1974 = vmatpush1.msra.mxu0 0.0
    %1975 = vmatprep.subr.mxu0 0.0
    %1976 = vmatpush1.msra.mxu0 0.0
    %1977 = vmatprep.subr.mxu0 0.0
    %1978 = vmatpush1.msra.mxu0 0.0
    %1979 = vmatprep.subr.mxu0 0.0
    %1980 = vmatpush1.msra.mxu0 0.0
    %1981 = vmatprep.subr.mxu0 0.0
    %1982 = vmatpush1.msra.mxu0 0.0
    %1983 = vmatprep.subr.mxu0 0.0
    %1984 = vmatpush1.msra.mxu0 0.0
    %1985 = vmatprep.subr.mxu0 0.0
    %1986 = vmatpush1.msra.mxu0 0.0
    %1987 = vmatprep.mubr.f32.mxu0 0.0
    %1988 = vmatmul.mubr.f32.gmra.mrb[0].mxu0 %v1841
    %v1989 = vpop.f32.mrb[0].mxu0
    %v1990 = vadd.f32 0.0, %v1989
    %v1991 = vpop.f32.mrb[0].mxu0
    %1992 = vdwg.mxu0
    %v1993 = vld [vmem:[%s1914 + $0x8] sm:$0xff]
    %v1994 = vadd.f32 %v1993, %v1990
    %v1995 = vxor.u32 %v1994, 2147483648
    %v1996 = vmul.f32 %v1995, 1.442695
    %v1997 = vpow.pop %v1996
    %v1998 = vadd.f32 %v1997, 1.0
    %v1999 = vrcp.pop %v1998
    %v2000 = vmul.f32 1.0, %v1999
    %v2001 = vld [vmem:[%s1914 + $0x10] sm:$0xff]
    %2002 = vmatprep.subr.mxu0 0.0
    %2003 = vmatpush1.msra.mxu0 %v569
    %2004 = vmatprep.subr.mxu0 0.0
    %2005 = vmatpush1.msra.mxu0 %v570
    %2006 = vmatprep.subr.mxu0 0.0
    %2007 = vmatpush1.msra.mxu0 %v571
    %2008 = vmatprep.subr.mxu0 0.0
    %2009 = vmatpush1.msra.mxu0 %v572
    %2010 = vmatprep.subr.mxu0 0.0
    %2011 = vmatpush1.msra.mxu0 %v573
    %2012 = vmatprep.subr.mxu0 0.0
    %2013 = vmatpush1.msra.mxu0 %v574
    %2014 = vmatprep.subr.mxu0 0.0
    %2015 = vmatpush1.msra.mxu0 %v575
    %2016 = vmatprep.subr.mxu0 0.0
    %2017 = vmatpush1.msra.mxu0 %v576
    %2018 = vmatprep.subr.mxu0 0.0
    %2019 = vmatpush1.msra.mxu0 %v577
    %2020 = vmatprep.subr.mxu0 0.0
    %2021 = vmatpush1.msra.mxu0 %v578
    %2022 = vmatprep.subr.mxu0 0.0
    %2023 = vmatpush1.msra.mxu0 %v579
    %2024 = vmatprep.subr.mxu0 0.0
    %2025 = vmatpush1.msra.mxu0 %v580
    %2026 = vmatprep.subr.mxu0 0.0
    %2027 = vmatpush1.msra.mxu0 %v581
    %2028 = vmatprep.subr.mxu0 0.0
    %2029 = vmatpush1.msra.mxu0 %v582
    %2030 = vmatprep.subr.mxu0 0.0
    %2031 = vmatpush1.msra.mxu0 %v583
    %2032 = vmatprep.subr.mxu0 0.0
    %2033 = vmatpush1.msra.mxu0 %v584
    %2034 = vmatprep.subr.mxu0 0.0
    %2035 = vmatpush1.msra.mxu0 0.0
    %2036 = vmatprep.subr.mxu0 0.0
    %2037 = vmatpush1.msra.mxu0 0.0
    %2038 = vmatprep.subr.mxu0 0.0
    %2039 = vmatpush1.msra.mxu0 0.0
    %2040 = vmatprep.subr.mxu0 0.0
    %2041 = vmatpush1.msra.mxu0 0.0
    %2042 = vmatprep.subr.mxu0 0.0
    %2043 = vmatpush1.msra.mxu0 0.0
    %2044 = vmatprep.subr.mxu0 0.0
    %2045 = vmatpush1.msra.mxu0 0.0
    %2046 = vmatprep.subr.mxu0 0.0
    %2047 = vmatpush1.msra.mxu0 0.0
    %2048 = vmatprep.subr.mxu0 0.0
    %2049 = vmatpush1.msra.mxu0 0.0
    %2050 = vmatprep.subr.mxu0 0.0
    %2051 = vmatpush1.msra.mxu0 0.0
    %2052 = vmatprep.subr.mxu0 0.0
    %2053 = vmatpush1.msra.mxu0 0.0
    %2054 = vmatprep.subr.mxu0 0.0
    %2055 = vmatpush1.msra.mxu0 0.0
    %2056 = vmatprep.subr.mxu0 0.0
    %2057 = vmatpush1.msra.mxu0 0.0
    %2058 = vmatprep.subr.mxu0 0.0
    %2059 = vmatpush1.msra.mxu0 0.0
    %2060 = vmatprep.subr.mxu0 0.0
    %2061 = vmatpush1.msra.mxu0 0.0
    %2062 = vmatprep.subr.mxu0 0.0
    %2063 = vmatpush1.msra.mxu0 0.0
    %2064 = vmatprep.subr.mxu0 0.0
    %2065 = vmatpush1.msra.mxu0 0.0
    %2066 = vmatprep.mubr.f32.mxu0 0.0
    %2067 = vmatmul.mubr.f32.gmra.mrb[0].mxu0 %v1841
    %v2068 = vpop.f32.mrb[0].mxu0
    %v2069 = vadd.f32 %v375, %v2068
    %v2070 = vpop.f32.mrb[0].mxu0
    %2071 = vdwg.mxu0
    %v2072 = vmul.f32 %v1922, %v2069
    %v2073 = vadd.f32 %v2001, %v2072
    %v2074 = vtanh.pop %v2073
    %v2075 = vsub.f32 %v1841, %v2074
    %v2076 = vmul.f32 %v2000, %v2075
    %v2077 = vadd.f32 %v2074, %v2076
    %2078 = vmatprep.subr.mxu0 0.0
    %2079 = vmatpush1.msra.mxu0 %v378
    %2080 = vmatprep.subr.mxu0 0.0
    %2081 = vmatpush1.msra.mxu0 %v379
    %2082 = vmatprep.subr.mxu0 0.0
    %2083 = vmatpush1.msra.mxu0 %v380
    %2084 = vmatprep.subr.mxu0 0.0
    %2085 = vmatpush1.msra.mxu0 %v381
    %2086 = vmatprep.subr.mxu0 0.0
    %2087 = vmatpush1.msra.mxu0 %v382
    %2088 = vmatprep.subr.mxu0 0.0
    %2089 = vmatpush1.msra.mxu0 %v383
    %2090 = vmatprep.subr.mxu0 0.0
    %2091 = vmatpush1.msra.mxu0 %v384
    %2092 = vmatprep.subr.mxu0 0.0
    %2093 = vmatpush1.msra.mxu0 %v385
    %2094 = vmatprep.subr.mxu0 0.0
    %2095 = vmatpush1.msra.mxu0 %v386
    %2096 = vmatprep.subr.mxu0 0.0
    %2097 = vmatpush1.msra.mxu0 %v387
    %2098 = vmatprep.subr.mxu0 0.0
    %2099 = vmatpush1.msra.mxu0 %v388
    %2100 = vmatprep.subr.mxu0 0.0
    %2101 = vmatpush1.msra.mxu0 %v389
    %2102 = vmatprep.subr.mxu0 0.0
    %2103 = vmatpush1.msra.mxu0 %v390
    %2104 = vmatprep.subr.mxu0 0.0
    %2105 = vmatpush1.msra.mxu0 %v391
    %2106 = vmatprep.subr.mxu0 0.0
    %2107 = vmatpush1.msra.mxu0 %v392
    %2108 = vmatprep.subr.mxu0 0.0
    %2109 = vmatpush1.msra.mxu0 %v393
    %2110 = vmatprep.subr.mxu0 0.0
    %2111 = vmatpush1.msra.mxu0 0.0
    %2112 = vmatprep.subr.mxu0 0.0
    %2113 = vmatpush1.msra.mxu0 0.0
    %2114 = vmatprep.subr.mxu0 0.0
    %2115 = vmatpush1.msra.mxu0 0.0
    %2116 = vmatprep.subr.mxu0 0.0
    %2117 = vmatpush1.msra.mxu0 0.0
    %2118 = vmatprep.subr.mxu0 0.0
    %2119 = vmatpush1.msra.mxu0 0.0
    %2120 = vmatprep.subr.mxu0 0.0
    %2121 = vmatpush1.msra.mxu0 0.0
    %2122 = vmatprep.subr.mxu0 0.0
    %2123 = vmatpush1.msra.mxu0 0.0
    %2124 = vmatprep.subr.mxu0 0.0
    %2125 = vmatpush1.msra.mxu0 0.0
    %2126 = vmatprep.subr.mxu0 0.0
    %2127 = vmatpush1.msra.mxu0 0.0
    %2128 = vmatprep.subr.mxu0 0.0
    %2129 = vmatpush1.msra.mxu0 0.0
    %2130 = vmatprep.subr.mxu0 0.0
    %2131 = vmatpush1.msra.mxu0 0.0
    %2132 = vmatprep.subr.mxu0 0.0
    %2133 = vmatpush1.msra.mxu0 0.0
    %2134 = vmatprep.subr.mxu0 0.0
    %2135 = vmatpush1.msra.mxu0 0.0
    %2136 = vmatprep.subr.mxu0 0.0
    %2137 = vmatpush1.msra.mxu0 0.0
    %2138 = vmatprep.subr.mxu0 0.0
    %2139 = vmatpush1.msra.mxu0 0.0
    %2140 = vmatprep.subr.mxu0 0.0
    %2141 = vmatpush1.msra.mxu0 0.0
    %2142 = vmatprep.mubr.f32.mxu0 0.0
    %2143 = vmatmul.mubr.f32.gmra.mrb[0].mxu0 %v2077
    %v2144 = vpop.f32.mrb[0].mxu0
    %v2145 = vadd.f32 0.0, %v2144
    %v2146 = vpop.f32.mrb[0].mxu0
    %2147 = vdwg.mxu0
    %s2148 = smul.u32 7, 3
    %s2149 = smul.addr %s2148, 8
    %s2150 = scalar_lea.vmem [#allocation3], %s2149
    %v2151 = vld [vmem:[%s2150] sm:$0xff]
    %v2152 = vadd.f32 %v2151, %v2145
    %v2153 = vxor.u32 %v2152, 2147483648
    %v2154 = vmul.f32 %v2153, 1.442695
    %v2155 = vpow.pop %v2154
    %v2156 = vadd.f32 %v2155, 1.0
    %v2157 = vrcp.pop %v2156
    %v2158 = vmul.f32 1.0, %v2157
    %2159 = vmatprep.subr.mxu0 0.0
    %2160 = vmatpush1.msra.mxu0 %v475
    %2161 = vmatprep.subr.mxu0 0.0
    %2162 = vmatpush1.msra.mxu0 %v476
    %2163 = vmatprep.subr.mxu0 0.0
    %2164 = vmatpush1.msra.mxu0 %v477
    %2165 = vmatprep.subr.mxu0 0.0
    %2166 = vmatpush1.msra.mxu0 %v478
    %2167 = vmatprep.subr.mxu0 0.0
    %2168 = vmatpush1.msra.mxu0 %v479
    %2169 = vmatprep.subr.mxu0 0.0
    %2170 = vmatpush1.msra.mxu0 %v480
    %2171 = vmatprep.subr.mxu0 0.0
    %2172 = vmatpush1.msra.mxu0 %v481
    %2173 = vmatprep.subr.mxu0 0.0
    %2174 = vmatpush1.msra.mxu0 %v482
    %2175 = vmatprep.subr.mxu0 0.0
    %2176 = vmatpush1.msra.mxu0 %v483
    %2177 = vmatprep.subr.mxu0 0.0
    %2178 = vmatpush1.msra.mxu0 %v484
    %2179 = vmatprep.subr.mxu0 0.0
    %2180 = vmatpush1.msra.mxu0 %v485
    %2181 = vmatprep.subr.mxu0 0.0
    %2182 = vmatpush1.msra.mxu0 %v486
    %2183 = vmatprep.subr.mxu0 0.0
    %2184 = vmatpush1.msra.mxu0 %v487
    %2185 = vmatprep.subr.mxu0 0.0
    %2186 = vmatpush1.msra.mxu0 %v488
    %2187 = vmatprep.subr.mxu0 0.0
    %2188 = vmatpush1.msra.mxu0 %v489
    %2189 = vmatprep.subr.mxu0 0.0
    %2190 = vmatpush1.msra.mxu0 %v490
    %2191 = vmatprep.subr.mxu0 0.0
    %2192 = vmatpush1.msra.mxu0 0.0
    %2193 = vmatprep.subr.mxu0 0.0
    %2194 = vmatpush1.msra.mxu0 0.0
    %2195 = vmatprep.subr.mxu0 0.0
    %2196 = vmatpush1.msra.mxu0 0.0
    %2197 = vmatprep.subr.mxu0 0.0
    %2198 = vmatpush1.msra.mxu0 0.0
    %2199 = vmatprep.subr.mxu0 0.0
    %2200 = vmatpush1.msra.mxu0 0.0
    %2201 = vmatprep.subr.mxu0 0.0
    %2202 = vmatpush1.msra.mxu0 0.0
    %2203 = vmatprep.subr.mxu0 0.0
    %2204 = vmatpush1.msra.mxu0 0.0
    %2205 = vmatprep.subr.mxu0 0.0
    %2206 = vmatpush1.msra.mxu0 0.0
    %2207 = vmatprep.subr.mxu0 0.0
    %2208 = vmatpush1.msra.mxu0 0.0
    %2209 = vmatprep.subr.mxu0 0.0
    %2210 = vmatpush1.msra.mxu0 0.0
    %2211 = vmatprep.subr.mxu0 0.0
    %2212 = vmatpush1.msra.mxu0 0.0
    %2213 = vmatprep.subr.mxu0 0.0
    %2214 = vmatpush1.msra.mxu0 0.0
    %2215 = vmatprep.subr.mxu0 0.0
    %2216 = vmatpush1.msra.mxu0 0.0
    %2217 = vmatprep.subr.mxu0 0.0
    %2218 = vmatpush1.msra.mxu0 0.0
    %2219 = vmatprep.subr.mxu0 0.0
    %2220 = vmatpush1.msra.mxu0 0.0
    %2221 = vmatprep.subr.mxu0 0.0
    %2222 = vmatpush1.msra.mxu0 0.0
    %2223 = vmatprep.mubr.f32.mxu0 0.0
    %2224 = vmatmul.mubr.f32.gmra.mrb[0].mxu0 %v2077
    %v2225 = vpop.f32.mrb[0].mxu0
    %v2226 = vadd.f32 0.0, %v2225
    %v2227 = vpop.f32.mrb[0].mxu0
    %2228 = vdwg.mxu0
    %v2229 = vld [vmem:[%s2150 + $0x8] sm:$0xff]
    %v2230 = vadd.f32 %v2229, %v2226
    %v2231 = vxor.u32 %v2230, 2147483648
    %v2232 = vmul.f32 %v2231, 1.442695
    %v2233 = vpow.pop %v2232
    %v2234 = vadd.f32 %v2233, 1.0
    %v2235 = vrcp.pop %v2234
    %v2236 = vmul.f32 1.0, %v2235
    %v2237 = vld [vmem:[%s2150 + $0x10] sm:$0xff]
    %2238 = vmatprep.subr.mxu0 0.0
    %2239 = vmatpush1.msra.mxu0 %v569
    %2240 = vmatprep.subr.mxu0 0.0
    %2241 = vmatpush1.msra.mxu0 %v570
    %2242 = vmatprep.subr.mxu0 0.0
    %2243 = vmatpush1.msra.mxu0 %v571
    %2244 = vmatprep.subr.mxu0 0.0
    %2245 = vmatpush1.msra.mxu0 %v572
    %2246 = vmatprep.subr.mxu0 0.0
    %2247 = vmatpush1.msra.mxu0 %v573
    %2248 = vmatprep.subr.mxu0 0.0
    %2249 = vmatpush1.msra.mxu0 %v574
    %2250 = vmatprep.subr.mxu0 0.0
    %2251 = vmatpush1.msra.mxu0 %v575
    %2252 = vmatprep.subr.mxu0 0.0
    %2253 = vmatpush1.msra.mxu0 %v576
    %2254 = vmatprep.subr.mxu0 0.0
    %2255 = vmatpush1.msra.mxu0 %v577
    %2256 = vmatprep.subr.mxu0 0.0
    %2257 = vmatpush1.msra.mxu0 %v578
    %2258 = vmatprep.subr.mxu0 0.0
    %2259 = vmatpush1.msra.mxu0 %v579
    %2260 = vmatprep.subr.mxu0 0.0
    %2261 = vmatpush1.msra.mxu0 %v580
    %2262 = vmatprep.subr.mxu0 0.0
    %2263 = vmatpush1.msra.mxu0 %v581
    %2264 = vmatprep.subr.mxu0 0.0
    %2265 = vmatpush1.msra.mxu0 %v582
    %2266 = vmatprep.subr.mxu0 0.0
    %2267 = vmatpush1.msra.mxu0 %v583
    %2268 = vmatprep.subr.mxu0 0.0
    %2269 = vmatpush1.msra.mxu0 %v584
    %2270 = vmatprep.subr.mxu0 0.0
    %2271 = vmatpush1.msra.mxu0 0.0
    %2272 = vmatprep.subr.mxu0 0.0
    %2273 = vmatpush1.msra.mxu0 0.0
    %2274 = vmatprep.subr.mxu0 0.0
    %2275 = vmatpush1.msra.mxu0 0.0
    %2276 = vmatprep.subr.mxu0 0.0
    %2277 = vmatpush1.msra.mxu0 0.0
    %2278 = vmatprep.subr.mxu0 0.0
    %2279 = vmatpush1.msra.mxu0 0.0
    %2280 = vmatprep.subr.mxu0 0.0
    %2281 = vmatpush1.msra.mxu0 0.0
    %2282 = vmatprep.subr.mxu0 0.0
    %2283 = vmatpush1.msra.mxu0 0.0
    %2284 = vmatprep.subr.mxu0 0.0
    %2285 = vmatpush1.msra.mxu0 0.0
    %2286 = vmatprep.subr.mxu0 0.0
    %2287 = vmatpush1.msra.mxu0 0.0
    %2288 = vmatprep.subr.mxu0 0.0
    %2289 = vmatpush1.msra.mxu0 0.0
    %2290 = vmatprep.subr.mxu0 0.0
    %2291 = vmatpush1.msra.mxu0 0.0
    %2292 = vmatprep.subr.mxu0 0.0
    %2293 = vmatpush1.msra.mxu0 0.0
    %2294 = vmatprep.subr.mxu0 0.0
    %2295 = vmatpush1.msra.mxu0 0.0
    %2296 = vmatprep.subr.mxu0 0.0
    %2297 = vmatpush1.msra.mxu0 0.0
    %2298 = vmatprep.subr.mxu0 0.0
    %2299 = vmatpush1.msra.mxu0 0.0
    %2300 = vmatprep.subr.mxu0 0.0
    %2301 = vmatpush1.msra.mxu0 0.0
    %2302 = vmatprep.mubr.f32.mxu0 0.0
    %2303 = vmatmul.mubr.f32.gmra.mrb[0].mxu0 %v2077
    %v2304 = vpop.f32.mrb[0].mxu0
    %v2305 = vadd.f32 %v375, %v2304
    %v2306 = vpop.f32.mrb[0].mxu0
    %2307 = vdwg.mxu0
    %v2308 = vmul.f32 %v2158, %v2305
    %v2309 = vadd.f32 %v2237, %v2308
    %v2310 = vtanh.pop %v2309
    %v2311 = vsub.f32 %v2077, %v2310
    %v2312 = vmul.f32 %v2236, %v2311
    %v2313 = vadd.f32 %v2310, %v2312
    %2314 = vst [vmem:[#allocation2] sm:$0xff] %v2313
    // Predicated region
    $region38: #{tpu_custom_call.1} parent=1 // pred_check
      %p2315 = pneg %p74
    $region39: #{tpu_custom_call.1} parent=1 // pred_check_branch
      %2317 = sbr.rel (%p2315) target = $region41
    $region40: #{tpu_custom_call.1} parent=1 // pred_region
      %v2318 = vld [vmem:[#allocation7] sm:$0xff]
      %v2319 = vld [vmem:[#allocation7 + $0x8] sm:$0xff]
      %v2320 = vld [vmem:[#allocation7 + $0x10] sm:$0xff]
      %v2321 = vld [vmem:[#allocation7 + $0x18] sm:$0xff]
      %v2322 = vld [vmem:[#allocation7 + $0x20] sm:$0xff]
      %v2323 = vld [vmem:[#allocation7 + $0x28] sm:$0xff]
      %v2324 = vld [vmem:[#allocation7 + $0x30] sm:$0xff]
      %v2325 = vld [vmem:[#allocation7 + $0x38] sm:$0xff]
      %v2326 = vld [vmem:[#allocation7 + $0x40] sm:$0xff]
      %v2327 = vld [vmem:[#allocation7 + $0x48] sm:$0xff]
      %v2328 = vld [vmem:[#allocation7 + $0x50] sm:$0xff]
      %v2329 = vld [vmem:[#allocation7 + $0x58] sm:$0xff]
      %v2330 = vld [vmem:[#allocation7 + $0x60] sm:$0xff]
      %v2331 = vld [vmem:[#allocation7 + $0x68] sm:$0xff]
      %v2332 = vld [vmem:[#allocation7 + $0x70] sm:$0xff]
      %v2333 = vld [vmem:[#allocation7 + $0x78] sm:$0xff]
      %v2334 = vld [vmem:[%s5] sm:$0x1]
      %v2336 = vlaneseq
      %v2337 = vshrl.u32 %v2336, 7
      %v2338 = vsub.s32 0, %v2337
      %v2339 = vrot.slane %v2334, %v2338
      %2341 = vmatprep.subr.mxu0 0.0
      %2342 = vmatpush1.msra.mxu0 %v2318
      %2343 = vmatprep.subr.mxu0 0.0
      %2344 = vmatpush1.msra.mxu0 %v2319
      %2345 = vmatprep.subr.mxu0 0.0
      %2346 = vmatpush1.msra.mxu0 %v2320
      %2347 = vmatprep.subr.mxu0 0.0
      %2348 = vmatpush1.msra.mxu0 %v2321
      %2349 = vmatprep.subr.mxu0 0.0
      %2350 = vmatpush1.msra.mxu0 %v2322
      %2351 = vmatprep.subr.mxu0 0.0
      %2352 = vmatpush1.msra.mxu0 %v2323
      %2353 = vmatprep.subr.mxu0 0.0
      %2354 = vmatpush1.msra.mxu0 %v2324
      %2355 = vmatprep.subr.mxu0 0.0
      %2356 = vmatpush1.msra.mxu0 %v2325
      %2357 = vmatprep.subr.mxu0 0.0
      %2358 = vmatpush1.msra.mxu0 %v2326
      %2359 = vmatprep.subr.mxu0 0.0
      %2360 = vmatpush1.msra.mxu0 %v2327
      %2361 = vmatprep.subr.mxu0 0.0
      %2362 = vmatpush1.msra.mxu0 %v2328
      %2363 = vmatprep.subr.mxu0 0.0
      %2364 = vmatpush1.msra.mxu0 %v2329
      %2365 = vmatprep.subr.mxu0 0.0
      %2366 = vmatpush1.msra.mxu0 %v2330
      %2367 = vmatprep.subr.mxu0 0.0
      %2368 = vmatpush1.msra.mxu0 %v2331
      %2369 = vmatprep.subr.mxu0 0.0
      %2370 = vmatpush1.msra.mxu0 %v2332
      %2371 = vmatprep.subr.mxu0 0.0
      %2372 = vmatpush1.msra.mxu0 %v2333
      %2373 = vmatprep.subr.mxu0 0.0
      %2374 = vmatpush1.msra.mxu0 0.0
      %2375 = vmatprep.subr.mxu0 0.0
      %2376 = vmatpush1.msra.mxu0 0.0
      %2377 = vmatprep.subr.mxu0 0.0
      %2378 = vmatpush1.msra.mxu0 0.0
      %2379 = vmatprep.subr.mxu0 0.0
      %2380 = vmatpush1.msra.mxu0 0.0
      %2381 = vmatprep.subr.mxu0 0.0
      %2382 = vmatpush1.msra.mxu0 0.0
      %2383 = vmatprep.subr.mxu0 0.0
      %2384 = vmatpush1.msra.mxu0 0.0
      %2385 = vmatprep.subr.mxu0 0.0
      %2386 = vmatpush1.msra.mxu0 0.0
      %2387 = vmatprep.subr.mxu0 0.0
      %2388 = vmatpush1.msra.mxu0 0.0
      %2389 = vmatprep.subr.mxu0 0.0
      %2390 = vmatpush1.msra.mxu0 0.0
      %2391 = vmatprep.subr.mxu0 0.0
      %2392 = vmatpush1.msra.mxu0 0.0
      %2393 = vmatprep.subr.mxu0 0.0
      %2394 = vmatpush1.msra.mxu0 0.0
      %2395 = vmatprep.subr.mxu0 0.0
      %2396 = vmatpush1.msra.mxu0 0.0
      %2397 = vmatprep.subr.mxu0 0.0
      %2398 = vmatpush1.msra.mxu0 0.0
      %2399 = vmatprep.subr.mxu0 0.0
      %2400 = vmatpush1.msra.mxu0 0.0
      %2401 = vmatprep.subr.mxu0 0.0
      %2402 = vmatpush1.msra.mxu0 0.0
      %2403 = vmatprep.subr.mxu0 0.0
      %2404 = vmatpush1.msra.mxu0 0.0
      %2405 = vmatprep.mubr.f32.mxu0 0.0
      %2406 = vmatmul.mubr.f32.gmra.mrb[0].mxu0 %v2313
      %v2407 = vpop.f32.mrb[0].mxu0
      %v2408 = vadd.f32 %v2339, %v2407
      %v2409 = vpop.f32.mrb[0].mxu0
      %2410 = vdwg.mxu0
      %2411 = vst [vmem:[#allocation9] sm:$0xff] %v2408
    $region41: #{tpu_custom_call.1} parent=1 // pred_fallthru
      _
    // Predicated region
    $region42: #{tpu_custom_call.1} parent=1 // pred_check
      _
    $region43: #{tpu_custom_call.1} parent=1 // pred_check_branch
      %2413 = sbr.rel (0) target = $region45
    $region44: #{tpu_custom_call.1} parent=1 // pred_region
      %s2415 = ssub.s32 128, 128
      %2416 = vsyncadd [#allocation6], %s2415
      %s2418 = sshll.u32 [#allocation9], 4
      %s2419 = int_to_ptr.vmem [resolvable:$true] %s2418
      %2421 = dma.vmem_to_hbm [thread:$0]  %s2419, 128, %s6, [#allocation6]
    $region45: #{tpu_custom_call.1} parent=1 // pred_fallthru
      _
    // Predicated region
    $region46: #{tpu_custom_call.1} parent=1 // pred_check
      _
    $region47: #{tpu_custom_call.1} parent=1 // pred_check_branch
      %2423 = sbr.rel (0) target = $region49
    $region48: #{tpu_custom_call.1} parent=1 // pred_region
      %2424 = dma.done [#allocation6], 128
    $region49: #{tpu_custom_call.1} parent=1 // pred_fallthru
      _
    %2425 = vsyncpa [#allocation5], 1
    %2426 = vsyncpa [#allocation8], 1
    %2427 = vsyncpa [#allocation6], 1

// kernel: tpu_custom_call.1
$region0: #{tpu_custom_call.1}
  #allocation0 [shape = 'u32[]', space=smem, size = 0x4, offset = 0x4, fixed_abs, tag = 'smem constant byte address 0x4 - core index']
  #allocation1 [shape = 'u32[144,128]{1,0:T(1,128)}', space=vmem, size = 0x12000, scoped, tag = 'internal scratch']
  #allocation2 [shape = 'f32[8,128]{1,0:T(8,128)}', space=vmem, size = 0x1000, scoped, tag = 'scratch operand']
  #allocation3 [shape = 'f32[64,384]{1,0:T(8,128)}', space=vmem, size = 0x18000, scoped, tag = 'scratch operand']
  %s0 = inlined_call_operand.vmem [shape: f32[64,11], index: 0, kind: input, shape index: {}]
  %s1 = inlined_call_operand.vmem [shape: f32[11,384], index: 1, kind: input, shape index: {}]
  %s2 = inlined_call_operand.hbm [shape: f32[128,384], index: 2, kind: input, shape index: {}]
  %s3 = inlined_call_operand.vmem [shape: f32[1,128], index: 3, kind: input, shape index: {}]
  %s4 = inlined_call_operand.hbm [shape: f32[128,128], index: 4, kind: input, shape index: {}]
  %s5 = inlined_call_operand.vmem [shape: f32[1,128], index: 5, kind: input, shape index: {}]
  %s6 = inlined_call_operand.hbm [shape: f32[8,128], index: 6, kind: output, shape index: {}]
  %s7 = sld [smem:[#allocation0]]
  $region50: #{tpu_custom_call.1} parent=0
    _
  %s9 = ssub.s32 1, %s7
  %s10 = scalar_select 0, %s9, %s7
  $region1: #{tpu_custom_call.1} parent=0
    #allocation4 [shape = 'u8[196608]{0}', space=vmem, size = 0x30000, scoped, tag = 'input window, operand 2, single buffered']
    #allocation5 [shape = 's32[1]{0}', space=sflag, size = 0x4, scoped, tag = 'scoped memory for tpu_custom_call.1']
    #allocation6 [shape = 's32[1]{0}', space=sflag, size = 0x4, scoped, tag = 'scoped memory for tpu_custom_call.1']
    #allocation7 [shape = 'u8[65536]{0}', space=vmem, size = 0x10000, scoped, tag = 'input window, operand 4, single buffered']
    #allocation8 [shape = 's32[1]{0}', space=sflag, size = 0x4, scoped, tag = 'scoped memory for tpu_custom_call.1']
    #allocation9 [shape = 'u8[4096]{0}', space=vmem, size = 0x1000, scoped, tag = 'output window, operand 0, single buffered']
    %11 = vsyncpa [#allocation5], 0
    %12 = vsyncpa [#allocation8], 0
    %13 = vsyncpa [#allocation6], 0
    // Predicated region
    $region2: #{tpu_custom_call.1} parent=1 // pred_check
      _
    $region3: #{tpu_custom_call.1} parent=1 // pred_check_branch
      %15 = sbr.rel (0) target = $region5
    $region4: #{tpu_custom_call.1} parent=1 // pred_region
      %s16 = sadd.s32 0, 0
      %s17 = smul.u32 8, %s16
      %p18 = scmp.lt.s32.totalorder %s17, 7
      %s19 = scalar_select %p18, %s17, 7
      %s20 = smul.addr %s19, 8
      %s21 = scalar_lea.vmem %s0, %s20
      %s22 = sadd.s32 0, 0
      %s23 = smul.u32 8, %s22
    $region5: #{tpu_custom_call.1} parent=1 // pred_fallthru
      _
    // Predicated region
    $region6: #{tpu_custom_call.1} parent=1 // pred_check
      _
    $region7: #{tpu_custom_call.1} parent=1 // pred_check_branch
      %25 = sbr.rel (0) target = $region9
    $region8: #{tpu_custom_call.1} parent=1 // pred_region
      _
    $region9: #{tpu_custom_call.1} parent=1 // pred_fallthru
      _
    // Predicated region
    $region10: #{tpu_custom_call.1} parent=1 // pred_check
      _
    $region11: #{tpu_custom_call.1} parent=1 // pred_check_branch
      %27 = sbr.rel (0) target = $region13
    $region12: #{tpu_custom_call.1} parent=1 // pred_region
      %s29 = ssub.s32 6144, 6144
      %30 = vsyncadd [#allocation5], %s29
      %s31 = sshll.u32 [#allocation4], 4
      %s32 = int_to_ptr.vmem [resolvable:$true] %s31
      %37 = dma.hbm_to_vmem [thread:$0]  %s2, 6144, %s32, [#allocation5], 384, 384, 24
    $region13: #{tpu_custom_call.1} parent=1 // pred_fallthru
      _
    // Predicated region
    $region14: #{tpu_custom_call.1} parent=1 // pred_check
      _
    $region15: #{tpu_custom_call.1} parent=1 // pred_check_branch
      %39 = sbr.rel (0) target = $region17
    $region16: #{tpu_custom_call.1} parent=1 // pred_region
      _
    $region17: #{tpu_custom_call.1} parent=1 // pred_fallthru
      _
    // Predicated region
    $region18: #{tpu_custom_call.1} parent=1 // pred_check
      _
    $region19: #{tpu_custom_call.1} parent=1 // pred_check_branch
      %41 = sbr.rel (0) target = $region21
    $region20: #{tpu_custom_call.1} parent=1 // pred_region
      %s43 = ssub.s32 2048, 2048
      %44 = vsyncadd [#allocation8], %s43
      %s45 = sshll.u32 [#allocation7], 4
      %s46 = int_to_ptr.vmem [resolvable:$true] %s45
      %51 = dma.hbm_to_vmem [thread:$0]  %s4, 2048, %s46, [#allocation8], 128, 128, 8
    $region21: #{tpu_custom_call.1} parent=1 // pred_fallthru
      _
    // Predicated region
    $region22: #{tpu_custom_call.1} parent=1 // pred_check
      _
    $region23: #{tpu_custom_call.1} parent=1 // pred_check_branch
      %53 = sbr.rel (0) target = $region25
    $region24: #{tpu_custom_call.1} parent=1 // pred_region
      _
    $region25: #{tpu_custom_call.1} parent=1 // pred_fallthru
      _
    // Predicated region
    $region26: #{tpu_custom_call.1} parent=1 // pred_check
      _
    $region27: #{tpu_custom_call.1} parent=1 // pred_check_branch
      %55 = sbr.rel (0) target = $region29
    $region28: #{tpu_custom_call.1} parent=1 // pred_region
      %56 = dma.done [#allocation5], 6144
    $region29: #{tpu_custom_call.1} parent=1 // pred_fallthru
      _
    // Predicated region
    $region30: #{tpu_custom_call.1} parent=1 // pred_check
      _
    $region31: #{tpu_custom_call.1} parent=1 // pred_check_branch
      %58 = sbr.rel (0) target = $region33
    $region32: #{tpu_custom_call.1} parent=1 // pred_region
      %59 = dma.done [#allocation8], 2048
    $region33: #{tpu_custom_call.1} parent=1 // pred_fallthru
      _
    %s60 = sadd.s32 0, 0
    %s61 = smul.u32 8, %s60
    %p62 = scmp.lt.s32.totalorder %s61, 7
    %s63 = scalar_select %p62, %s61, 7
    %s64 = smul.addr %s63, 8
    %s65 = scalar_lea.vmem %s0, %s64
    %s66 = sadd.s32 0, 0
    %s67 = smul.u32 8, %s66
    %p68 = scmp.lt.s32.totalorder %s67, 7
    %s69 = scalar_select %p68, %s67, 7
    %s70 = smul.addr %s69, 8
    %s71 = scalar_lea.vmem %s0, %s70
    %s72 = sadd.s32 0, 0
    %s73 = smul.u32 8, %s72
    %p74 = scmp.eq.s32.totalorder 0, 0
    // Predicated region
    $region34: #{tpu_custom_call.1} parent=1 // pred_check
      %p75 = pneg %p74
    $region35: #{tpu_custom_call.1} parent=1 // pred_check_branch
      %77 = sbr.rel (%p75) target = $region37
    $region36: #{tpu_custom_call.1} parent=1 // pred_region
      %78 = vst [vmem:[#allocation2] sm:$0xff] 0.0
    $region37: #{tpu_custom_call.1} parent=1 // pred_fallthru
      _
    %v79 = vld [vmem:[%s71] sm:$0xff]
    %v80 = vld [vmem:[%s71 + $0x8] sm:$0xff]
    %v81 = vld [vmem:[%s71 + $0x10] sm:$0xff]
    %v82 = vld [vmem:[%s71 + $0x18] sm:$0xff]
    %v83 = vld [vmem:[%s71 + $0x20] sm:$0xff]
    %v84 = vld [vmem:[%s71 + $0x28] sm:$0xff]
    %v85 = vld [vmem:[%s71 + $0x30] sm:$0xff]
    %v86 = vld [vmem:[%s71 + $0x38] sm:$0xff]
    %v87 = vld [vmem:[%s1] sm:$0xff]
    %v88 = vld [vmem:[%s1 + $0x8] sm:$0xff]
    %v89 = vld [vmem:[%s1 + $0x10] sm:$0xff]
    %v90 = vld [vmem:[%s1 + $0x18] sm:$0x7]
    %v91 = vld [vmem:[%s1 + $0x20] sm:$0x7]
    %v92 = vld [vmem:[%s1 + $0x28] sm:$0x7]
    %vm93 = vcmask 89088
    %v95 = vsel %vm93, %v79, 0
    %v98 = vsel %vm93, %v80, 0
    %v101 = vsel %vm93, %v81, 0
    %v104 = vsel %vm93, %v82, 0
    %v107 = vsel %vm93, %v83, 0
    %v110 = vsel %vm93, %v84, 0
    %v113 = vsel %vm93, %v85, 0
    %v116 = vsel %vm93, %v86, 0
    %vm118 = vcmask 1042432
    %v120 = vsel %vm118, %v90, 0
    %v123 = vsel %vm118, %v91, 0
    %v126 = vsel %vm118, %v92, 0
    %128 = vmatprep.subr.mxu0 %v88
    %129 = vmatpush1.msra.mxu0 %v87
    %130 = vmatprep.subr.mxu0 %v123
    %131 = vmatpush1.msra.mxu0 %v120
    %132 = vmatprep.subr.mxu0 0.0
    %133 = vmatpush1.msra.mxu0 0.0
    %134 = vmatprep.subr.mxu0 0.0
    %135 = vmatpush1.msra.mxu0 0.0
    %136 = vmatprep.subr.mxu0 0.0
    %137 = vmatpush1.msra.mxu0 0.0
    %138 = vmatprep.subr.mxu0 0.0
    %139 = vmatpush1.msra.mxu0 0.0
    %140 = vmatprep.subr.mxu0 0.0
    %141 = vmatpush1.msra.mxu0 0.0
    %142 = vmatprep.subr.mxu0 0.0
    %143 = vmatpush1.msra.mxu0 0.0
    %144 = vmatprep.subr.mxu0 0.0
    %145 = vmatpush1.msra.mxu0 0.0
    %146 = vmatprep.subr.mxu0 0.0
    %147 = vmatpush1.msra.mxu0 0.0
    %148 = vmatprep.subr.mxu0 0.0
    %149 = vmatpush1.msra.mxu0 0.0
    %150 = vmatprep.subr.mxu0 0.0
    %151 = vmatpush1.msra.mxu0 0.0
    %152 = vmatprep.subr.mxu0 0.0
    %153 = vmatpush1.msra.mxu0 0.0
    %154 = vmatprep.subr.mxu0 0.0
    %155 = vmatpush1.msra.mxu0 0.0
    %156 = vmatprep.subr.mxu0 0.0
    %157 = vmatpush1.msra.mxu0 0.0
    %158 = vmatprep.subr.mxu0 0.0
    %159 = vmatpush1.msra.mxu0 0.0
    %160 = vmatprep.subr.mxu0 0.0
    %161 = vmatpush1.msra.mxu0 0.0
    %162 = vmatprep.subr.mxu0 0.0
    %163 = vmatpush1.msra.mxu0 0.0
    %164 = vmatprep.subr.mxu0 0.0
    %165 = vmatpush1.msra.mxu0 0.0
    %166 = vmatprep.subr.mxu0 0.0
    %167 = vmatpush1.msra.mxu0 0.0
    %168 = vmatprep.subr.mxu0 0.0
    %169 = vmatpush1.msra.mxu0 0.0
    %170 = vmatprep.subr.mxu0 0.0
    %171 = vmatpush1.msra.mxu0 0.0
    %172 = vmatprep.subr.mxu0 0.0
    %173 = vmatpush1.msra.mxu0 0.0
    %174 = vmatprep.subr.mxu0 0.0
    %175 = vmatpush1.msra.mxu0 0.0
    %176 = vmatprep.subr.mxu0 0.0
    %177 = vmatpush1.msra.mxu0 0.0
    %178 = vmatprep.subr.mxu0 0.0
    %179 = vmatpush1.msra.mxu0 0.0
    %180 = vmatprep.subr.mxu0 0.0
    %181 = vmatpush1.msra.mxu0 0.0
    %182 = vmatprep.subr.mxu0 0.0
    %183 = vmatpush1.msra.mxu0 0.0
    %184 = vmatprep.subr.mxu0 0.0
    %185 = vmatpush1.msra.mxu0 0.0
    %186 = vmatprep.subr.mxu0 0.0
    %187 = vmatpush1.msra.mxu0 0.0
    %188 = vmatprep.subr.mxu0 0.0
    %189 = vmatpush1.msra.mxu0 0.0
    %190 = vmatprep.subr.mxu0 0.0
    %191 = vmatpush1.msra.mxu0 0.0
    %192 = vmatprep.mubr.f32.mxu0 0.0
    %193 = vmatmul.mubr.f32.gmra.mrb[0].mxu0 %v95
    %v194 = vpop.f32.mrb[0].mxu0
    %v195 = vadd.f32 0.0, %v194
    %v196 = vpop.f32.mrb[0].mxu0
    %v197 = vadd.f32 0.0, %v196
    %198 = vmatprep.mubr.f32.mxu0 0.0
    %199 = vmatmul.mubr.f32.gmra.mrb[0].mxu0 %v98
    %v200 = vpop.f32.mrb[0].mxu0
    %v201 = vadd.f32 0.0, %v200
    %v202 = vpop.f32.mrb[0].mxu0
    %v203 = vadd.f32 0.0, %v202
    %204 = vmatprep.mubr.f32.mxu0 0.0
    %205 = vmatmul.mubr.f32.gmra.mrb[0].mxu0 %v101
    %v206 = vpop.f32.mrb[0].mxu0
    %v207 = vadd.f32 0.0, %v206
    %v208 = vpop.f32.mrb[0].mxu0
    %v209 = vadd.f32 0.0, %v208
    %210 = vmatprep.mubr.f32.mxu0 0.0
    %211 = vmatmul.mubr.f32.gmra.mrb[0].mxu0 %v104
    %v212 = vpop.f32.mrb[0].mxu0
    %v213 = vadd.f32 0.0, %v212
    %v214 = vpop.f32.mrb[0].mxu0
    %v215 = vadd.f32 0.0, %v214
    %216 = vmatprep.mubr.f32.mxu0 0.0
    %217 = vmatmul.mubr.f32.gmra.mrb[0].mxu0 %v107
    %v218 = vpop.f32.mrb[0].mxu0
    %v219 = vadd.f32 0.0, %v218
    %v220 = vpop.f32.mrb[0].mxu0
    %v221 = vadd.f32 0.0, %v220
    %222 = vmatprep.mubr.f32.mxu0 0.0
    %223 = vmatmul.mubr.f32.gmra.mrb[0].mxu0 %v110
    %v224 = vpop.f32.mrb[0].mxu0
    %v225 = vadd.f32 0.0, %v224
    %v226 = vpop.f32.mrb[0].mxu0
    %v227 = vadd.f32 0.0, %v226
    %228 = vmatprep.mubr.f32.mxu0 0.0
    %229 = vmatmul.mubr.f32.gmra.mrb[0].mxu0 %v113
    %v230 = vpop.f32.mrb[0].mxu0
    %v231 = vadd.f32 0.0, %v230
    %v232 = vpop.f32.mrb[0].mxu0
    %v233 = vadd.f32 0.0, %v232
    %234 = vmatprep.mubr.f32.mxu0 0.0
    %235 = vmatmul.mubr.f32.gmra.mrb[0].mxu0 %v116
    %v236 = vpop.f32.mrb[0].mxu0
    %v237 = vadd.f32 0.0, %v236
    %v238 = vpop.f32.mrb[0].mxu0
    %v239 = vadd.f32 0.0, %v238
    %240 = vdwg.mxu0
    %241 = vmatprep.subr.mxu0 0.0
    %242 = vmatpush1.msra.mxu0 %v89
    %243 = vmatprep.subr.mxu0 0.0
    %244 = vmatpush1.msra.mxu0 %v126
    %245 = vmatprep.subr.mxu0 0.0
    %246 = vmatpush1.msra.mxu0 0.0
    %247 = vmatprep.subr.mxu0 0.0
    %248 = vmatpush1.msra.mxu0 0.0
    %249 = vmatprep.subr.mxu0 0.0
    %250 = vmatpush1.msra.mxu0 0.0
    %251 = vmatprep.subr.mxu0 0.0
    %252 = vmatpush1.msra.mxu0 0.0
    %253 = vmatprep.subr.mxu0 0.0
    %254 = vmatpush1.msra.mxu0 0.0
    %255 = vmatprep.subr.mxu0 0.0
    %256 = vmatpush1.msra.mxu0 0.0
    %257 = vmatprep.subr.mxu0 0.0
    %258 = vmatpush1.msra.mxu0 0.0
    %259 = vmatprep.subr.mxu0 0.0
    %260 = vmatpush1.msra.mxu0 0.0
    %261 = vmatprep.subr.mxu0 0.0
    %262 = vmatpush1.msra.mxu0 0.0
    %263 = vmatprep.subr.mxu0 0.0
    %264 = vmatpush1.msra.mxu0 0.0
    %265 = vmatprep.subr.mxu0 0.0
    %266 = vmatpush1.msra.mxu0 0.0
    %267 = vmatprep.subr.mxu0 0.0
    %268 = vmatpush1.msra.mxu0 0.0
    %269 = vmatprep.subr.mxu0 0.0
    %270 = vmatpush1.msra.mxu0 0.0
    %271 = vmatprep.subr.mxu0 0.0
    %272 = vmatpush1.msra.mxu0 0.0
    %273 = vmatprep.subr.mxu0 0.0
    %274 = vmatpush1.msra.mxu0 0.0
    %275 = vmatprep.subr.mxu0 0.0
    %276 = vmatpush1.msra.mxu0 0.0
    %277 = vmatprep.subr.mxu0 0.0
    %278 = vmatpush1.msra.mxu0 0.0
    %279 = vmatprep.subr.mxu0 0.0
    %280 = vmatpush1.msra.mxu0 0.0
    %281 = vmatprep.subr.mxu0 0.0
    %282 = vmatpush1.msra.mxu0 0.0
    %283 = vmatprep.subr.mxu0 0.0
    %284 = vmatpush1.msra.mxu0 0.0
    %285 = vmatprep.subr.mxu0 0.0
    %286 = vmatpush1.msra.mxu0 0.0
    %287 = vmatprep.subr.mxu0 0.0
    %288 = vmatpush1.msra.mxu0 0.0
    %289 = vmatprep.subr.mxu0 0.0
    %290 = vmatpush1.msra.mxu0 0.0
    %291 = vmatprep.subr.mxu0 0.0
    %292 = vmatpush1.msra.mxu0 0.0
    %293 = vmatprep.subr.mxu0 0.0
    %294 = vmatpush1.msra.mxu0 0.0
    %295 = vmatprep.subr.mxu0 0.0
    %296 = vmatpush1.msra.mxu0 0.0
    %297 = vmatprep.subr.mxu0 0.0
    %298 = vmatpush1.msra.mxu0 0.0
    %299 = vmatprep.subr.mxu0 0.0
    %300 = vmatpush1.msra.mxu0 0.0
    %301 = vmatprep.subr.mxu0 0.0
    %302 = vmatpush1.msra.mxu0 0.0
    %303 = vmatprep.subr.mxu0 0.0
    %304 = vmatpush1.msra.mxu0 0.0
    %305 = vmatprep.mubr.f32.mxu0 0.0
    %306 = vmatmul.mubr.f32.gmra.mrb[0].mxu0 %v95
    %v307 = vpop.f32.mrb[0].mxu0
    %v308 = vadd.f32 0.0, %v307
    %v309 = vpop.f32.mrb[0].mxu0
    %310 = vmatprep.mubr.f32.mxu0 0.0
    %311 = vmatmul.mubr.f32.gmra.mrb[0].mxu0 %v98
    %v312 = vpop.f32.mrb[0].mxu0
    %v313 = vadd.f32 0.0, %v312
    %v314 = vpop.f32.mrb[0].mxu0
    %315 = vmatprep.mubr.f32.mxu0 0.0
    %316 = vmatmul.mubr.f32.gmra.mrb[0].mxu0 %v101
    %v317 = vpop.f32.mrb[0].mxu0
    %v318 = vadd.f32 0.0, %v317
    %v319 = vpop.f32.mrb[0].mxu0
    %320 = vmatprep.mubr.f32.mxu0 0.0
    %321 = vmatmul.mubr.f32.gmra.mrb[0].mxu0 %v104
    %v322 = vpop.f32.mrb[0].mxu0
    %v323 = vadd.f32 0.0, %v322
    %v324 = vpop.f32.mrb[0].mxu0
    %325 = vmatprep.mubr.f32.mxu0 0.0
    %326 = vmatmul.mubr.f32.gmra.mrb[0].mxu0 %v107
    %v327 = vpop.f32.mrb[0].mxu0
    %v328 = vadd.f32 0.0, %v327
    %v329 = vpop.f32.mrb[0].mxu0
    %330 = vmatprep.mubr.f32.mxu0 0.0
    %331 = vmatmul.mubr.f32.gmra.mrb[0].mxu0 %v110
    %v332 = vpop.f32.mrb[0].mxu0
    %v333 = vadd.f32 0.0, %v332
    %v334 = vpop.f32.mrb[0].mxu0
    %335 = vmatprep.mubr.f32.mxu0 0.0
    %336 = vmatmul.mubr.f32.gmra.mrb[0].mxu0 %v113
    %v337 = vpop.f32.mrb[0].mxu0
    %v338 = vadd.f32 0.0, %v337
    %v339 = vpop.f32.mrb[0].mxu0
    %340 = vmatprep.mubr.f32.mxu0 0.0
    %341 = vmatmul.mubr.f32.gmra.mrb[0].mxu0 %v116
    %v342 = vpop.f32.mrb[0].mxu0
    %v343 = vadd.f32 0.0, %v342
    %v344 = vpop.f32.mrb[0].mxu0
    %345 = vdwg.mxu0
    %346 = vst [vmem:[#allocation3] sm:$0xff] %v195
    %347 = vst [vmem:[#allocation3 + $0x8] sm:$0xff] %v197
    %348 = vst [vmem:[#allocation3 + $0x10] sm:$0xff] %v308
    %349 = vst [vmem:[#allocation3 + $0x18] sm:$0xff] %v201
    %350 = vst [vmem:[#allocation3 + $0x20] sm:$0xff] %v203
    %351 = vst [vmem:[#allocation3 + $0x28] sm:$0xff] %v313
    %352 = vst [vmem:[#allocation3 + $0x30] sm:$0xff] %v207
    %353 = vst [vmem:[#allocation3 + $0x38] sm:$0xff] %v209
    %354 = vst [vmem:[#allocation3 + $0x40] sm:$0xff] %v318
    %355 = vst [vmem:[#allocation3 + $0x48] sm:$0xff] %v213
    %356 = vst [vmem:[#allocation3 + $0x50] sm:$0xff] %v215
    %357 = vst [vmem:[#allocation3 + $0x58] sm:$0xff] %v323
    %358 = vst [vmem:[#allocation3 + $0x60] sm:$0xff] %v219
    %359 = vst [vmem:[#allocation3 + $0x68] sm:$0xff] %v221
    %360 = vst [vmem:[#allocation3 + $0x70] sm:$0xff] %v328
    %361 = vst [vmem:[#allocation3 + $0x78] sm:$0xff] %v225
    %362 = vst [vmem:[#allocation3 + $0x80] sm:$0xff] %v227
    %363 = vst [vmem:[#allocation3 + $0x88] sm:$0xff] %v333
    %364 = vst [vmem:[#allocation3 + $0x90] sm:$0xff] %v231
    %365 = vst [vmem:[#allocation3 + $0x98] sm:$0xff] %v233
    %366 = vst [vmem:[#allocation3 + $0xa0] sm:$0xff] %v338
    %367 = vst [vmem:[#allocation3 + $0xa8] sm:$0xff] %v237
    %368 = vst [vmem:[#allocation3 + $0xb0] sm:$0xff] %v239
    %369 = vst [vmem:[#allocation3 + $0xb8] sm:$0xff] %v343
    %v370 = vld [vmem:[%s3] sm:$0x1]
    %v372 = vlaneseq
    %v373 = vshrl.u32 %v372, 7
    %v374 = vsub.s32 0, %v373
    %v375 = vrot.slane %v370, %v374
    %v377 = vld [vmem:[#allocation2] sm:$0xff]
    %v378 = vld [vmem:[#allocation4] sm:$0xff]
    %v379 = vld [vmem:[#allocation4 + $0x18] sm:$0xff]
    %v380 = vld [vmem:[#allocation4 + $0x30] sm:$0xff]
    %v381 = vld [vmem:[#allocation4 + $0x48] sm:$0xff]
    %v382 = vld [vmem:[#allocation4 + $0x60] sm:$0xff]
    %v383 = vld [vmem:[#allocation4 + $0x78] sm:$0xff]
    %v384 = vld [vmem:[#allocation4 + $0x90] sm:$0xff]
    %v385 = vld [vmem:[#allocation4 + $0xa8] sm:$0xff]
    %v386 = vld [vmem:[#allocation4 + $0xc0] sm:$0xff]
    %v387 = vld [vmem:[#allocation4 + $0xd8] sm:$0xff]
    %v388 = vld [vmem:[#allocation4 + $0xf0] sm:$0xff]
    %v389 = vld [vmem:[#allocation4 + $0x108] sm:$0xff]
    %v390 = vld [vmem:[#allocation4 + $0x120] sm:$0xff]
    %v391 = vld [vmem:[#allocation4 + $0x138] sm:$0xff]
    %v392 = vld [vmem:[#allocation4 + $0x150] sm:$0xff]
    %v393 = vld [vmem:[#allocation4 + $0x168] sm:$0xff]
    %394 = vmatprep.subr.mxu0 0.0
    %395 = vmatpush1.msra.mxu0 %v378
    %396 = vmatprep.subr.mxu0 0.0
    %397 = vmatpush1.msra.mxu0 %v379
    %398 = vmatprep.subr.mxu0 0.0
    %399 = vmatpush1.msra.mxu0 %v380
    %400 = vmatprep.subr.mxu0 0.0
    %401 = vmatpush1.msra.mxu0 %v381
    %402 = vmatprep.subr.mxu0 0.0
    %403 = vmatpush1.msra.mxu0 %v382
    %404 = vmatprep.subr.mxu0 0.0
    %405 = vmatpush1.msra.mxu0 %v383
    %406 = vmatprep.subr.mxu0 0.0
    %407 = vmatpush1.msra.mxu0 %v384
    %408 = vmatprep.subr.mxu0 0.0
    %409 = vmatpush1.msra.mxu0 %v385
    %410 = vmatprep.subr.mxu0 0.0
    %411 = vmatpush1.msra.mxu0 %v386
    %412 = vmatprep.subr.mxu0 0.0
    %413 = vmatpush1.msra.mxu0 %v387
    %414 = vmatprep.subr.mxu0 0.0
    %415 = vmatpush1.msra.mxu0 %v388
    %416 = vmatprep.subr.mxu0 0.0
    %417 = vmatpush1.msra.mxu0 %v389
    %418 = vmatprep.subr.mxu0 0.0
    %419 = vmatpush1.msra.mxu0 %v390
    %420 = vmatprep.subr.mxu0 0.0
    %421 = vmatpush1.msra.mxu0 %v391
    %422 = vmatprep.subr.mxu0 0.0
    %423 = vmatpush1.msra.mxu0 %v392
    %424 = vmatprep.subr.mxu0 0.0
    %425 = vmatpush1.msra.mxu0 %v393
    %426 = vmatprep.subr.mxu0 0.0
    %427 = vmatpush1.msra.mxu0 0.0
    %428 = vmatprep.subr.mxu0 0.0
    %429 = vmatpush1.msra.mxu0 0.0
    %430 = vmatprep.subr.mxu0 0.0
    %431 = vmatpush1.msra.mxu0 0.0
    %432 = vmatprep.subr.mxu0 0.0
    %433 = vmatpush1.msra.mxu0 0.0
    %434 = vmatprep.subr.mxu0 0.0
    %435 = vmatpush1.msra.mxu0 0.0
    %436 = vmatprep.subr.mxu0 0.0
    %437 = vmatpush1.msra.mxu0 0.0
    %438 = vmatprep.subr.mxu0 0.0
    %439 = vmatpush1.msra.mxu0 0.0
    %440 = vmatprep.subr.mxu0 0.0
    %441 = vmatpush1.msra.mxu0 0.0
    %442 = vmatprep.subr.mxu0 0.0
    %443 = vmatpush1.msra.mxu0 0.0
    %444 = vmatprep.subr.mxu0 0.0
    %445 = vmatpush1.msra.mxu0 0.0
    %446 = vmatprep.subr.mxu0 0.0
    %447 = vmatpush1.msra.mxu0 0.0
    %448 = vmatprep.subr.mxu0 0.0
    %449 = vmatpush1.msra.mxu0 0.0
    %450 = vmatprep.subr.mxu0 0.0
    %451 = vmatpush1.msra.mxu0 0.0
    %452 = vmatprep.subr.mxu0 0.0
    %453 = vmatpush1.msra.mxu0 0.0
    %454 = vmatprep.subr.mxu0 0.0
    %455 = vmatpush1.msra.mxu0 0.0
    %456 = vmatprep.subr.mxu0 0.0
    %457 = vmatpush1.msra.mxu0 0.0
    %458 = vmatprep.mubr.f32.mxu0 0.0
    %459 = vmatmul.mubr.f32.gmra.mrb[0].mxu0 %v377
    %v460 = vpop.f32.mrb[0].mxu0
    %v461 = vadd.f32 0.0, %v460
    %v462 = vpop.f32.mrb[0].mxu0
    %463 = vdwg.mxu0
    %s464 = smul.u32 0, 3
    %s465 = smul.addr %s464, 8
    %s466 = scalar_lea.vmem [#allocation3], %s465
    %v467 = vld [vmem:[%s466] sm:$0xff]
    %v468 = vadd.f32 %v467, %v461
    %v469 = vxor.u32 %v468, 2147483648
    %v470 = vmul.f32 %v469, 1.442695
    %v471 = vpow.pop %v470
    %v472 = vadd.f32 %v471, 1.0
    %v473 = vrcp.pop %v472
    %v474 = vmul.f32 1.0, %v473
    %v475 = vld [vmem:[#allocation4 + $0x8] sm:$0xff]
    %v476 = vld [vmem:[#allocation4 + $0x20] sm:$0xff]
    %v477 = vld [vmem:[#allocation4 + $0x38] sm:$0xff]
    %v478 = vld [vmem:[#allocation4 + $0x50] sm:$0xff]
    %v479 = vld [vmem:[#allocation4 + $0x68] sm:$0xff]
    %v480 = vld [vmem:[#allocation4 + $0x80] sm:$0xff]
    %v481 = vld [vmem:[#allocation4 + $0x98] sm:$0xff]
    %v482 = vld [vmem:[#allocation4 + $0xb0] sm:$0xff]
    %v483 = vld [vmem:[#allocation4 + $0xc8] sm:$0xff]
    %v484 = vld [vmem:[#allocation4 + $0xe0] sm:$0xff]
    %v485 = vld [vmem:[#allocation4 + $0xf8] sm:$0xff]
    %v486 = vld [vmem:[#allocation4 + $0x110] sm:$0xff]
    %v487 = vld [vmem:[#allocation4 + $0x128] sm:$0xff]
    %v488 = vld [vmem:[#allocation4 + $0x140] sm:$0xff]
    %v489 = vld [vmem:[#allocation4 + $0x158] sm:$0xff]
    %v490 = vld [vmem:[#allocation4 + $0x170] sm:$0xff]
    %491 = vmatprep.subr.mxu0 0.0
    %492 = vmatpush1.msra.mxu0 %v475
    %493 = vmatprep.subr.mxu0 0.0
    %494 = vmatpush1.msra.mxu0 %v476
    %495 = vmatprep.subr.mxu0 0.0
    %496 = vmatpush1.msra.mxu0 %v477
    %497 = vmatprep.subr.mxu0 0.0
    %498 = vmatpush1.msra.mxu0 %v478
    %499 = vmatprep.subr.mxu0 0.0
    %500 = vmatpush1.msra.mxu0 %v479
    %501 = vmatprep.subr.mxu0 0.0
    %502 = vmatpush1.msra.mxu0 %v480
    %503 = vmatprep.subr.mxu0 0.0
    %504 = vmatpush1.msra.mxu0 %v481
    %505 = vmatprep.subr.mxu0 0.0
    %506 = vmatpush1.msra.mxu0 %v482
    %507 = vmatprep.subr.mxu0 0.0
    %508 = vmatpush1.msra.mxu0 %v483
    %509 = vmatprep.subr.mxu0 0.0
    %510 = vmatpush1.msra.mxu0 %v484
    %511 = vmatprep.subr.mxu0 0.0
    %512 = vmatpush1.msra.mxu0 %v485
    %513 = vmatprep.subr.mxu0 0.0
    %514 = vmatpush1.msra.mxu0 %v486
    %515 = vmatprep.subr.mxu0 0.0
    %516 = vmatpush1.msra.mxu0 %v487
    %517 = vmatprep.subr.mxu0 0.0
    %518 = vmatpush1.msra.mxu0 %v488
    %519 = vmatprep.subr.mxu0 0.0
    %520 = vmatpush1.msra.mxu0 %v489
    %521 = vmatprep.subr.mxu0 0.0
    %522 = vmatpush1.msra.mxu0 %v490
    %523 = vmatprep.subr.mxu0 0.0
    %524 = vmatpush1.msra.mxu0 0.0
    %525 = vmatprep.subr.mxu0 0.0
    %526 = vmatpush1.msra.mxu0 0.0
    %527 = vmatprep.subr.mxu0 0.0
    %528 = vmatpush1.msra.mxu0 0.0
    %529 = vmatprep.subr.mxu0 0.0
    %530 = vmatpush1.msra.mxu0 0.0
    %531 = vmatprep.subr.mxu0 0.0
    %532 = vmatpush1.msra.mxu0 0.0
    %533 = vmatprep.subr.mxu0 0.0
    %534 = vmatpush1.msra.mxu0 0.0
    %535 = vmatprep.subr.mxu0 0.0
    %536 = vmatpush1.msra.mxu0 0.0
    %537 = vmatprep.subr.mxu0 0.0
    %538 = vmatpush1.msra.mxu0 0.0
    %539 = vmatprep.subr.mxu0 0.0
    %540 = vmatpush1.msra.mxu0 0.0
    %541 = vmatprep.subr.mxu0 0.0
    %542 = vmatpush1.msra.mxu0 0.0
    %543 = vmatprep.subr.mxu0 0.0
    %544 = vmatpush1.msra.mxu0 0.0
    %545 = vmatprep.subr.mxu0 0.0
    %546 = vmatpush1.msra.mxu0 0.0
    %547 = vmatprep.subr.mxu0 0.0
    %548 = vmatpush1.msra.mxu0 0.0
    %549 = vmatprep.subr.mxu0 0.0
    %550 = vmatpush1.msra.mxu0 0.0
    %551 = vmatprep.subr.mxu0 0.0
    %552 = vmatpush1.msra.mxu0 0.0
    %553 = vmatprep.subr.mxu0 0.0
    %554 = vmatpush1.msra.mxu0 0.0
    %555 = vmatprep.mubr.f32.mxu0 0.0
    %556 = vmatmul.mubr.f32.gmra.mrb[0].mxu0 %v377
    %v557 = vpop.f32.mrb[0].mxu0
    %v558 = vadd.f32 0.0, %v557
    %v559 = vpop.f32.mrb[0].mxu0
    %560 = vdwg.mxu0
    %v561 = vld [vmem:[%s466 + $0x8] sm:$0xff]
    %v562 = vadd.f32 %v561, %v558
    %v563 = vxor.u32 %v562, 2147483648
    %v564 = vmul.f32 %v563, 1.442695
    %v565 = vpow.pop %v564
    %v566 = vadd.f32 %v565, 1.0
    %v567 = vrcp.pop %v566
    %v568 = vmul.f32 1.0, %v567
    %v569 = vld [vmem:[#allocation4 + $0x10] sm:$0xff]
    %v570 = vld [vmem:[#allocation4 + $0x28] sm:$0xff]
    %v571 = vld [vmem:[#allocation4 + $0x40] sm:$0xff]
    %v572 = vld [vmem:[#allocation4 + $0x58] sm:$0xff]
    %v573 = vld [vmem:[#allocation4 + $0x70] sm:$0xff]
    %v574 = vld [vmem:[#allocation4 + $0x88] sm:$0xff]
    %v575 = vld [vmem:[#allocation4 + $0xa0] sm:$0xff]
    %v576 = vld [vmem:[#allocation4 + $0xb8] sm:$0xff]
    %v577 = vld [vmem:[#allocation4 + $0xd0] sm:$0xff]
    %v578 = vld [vmem:[#allocation4 + $0xe8] sm:$0xff]
    %v579 = vld [vmem:[#allocation4 + $0x100] sm:$0xff]
    %v580 = vld [vmem:[#allocation4 + $0x118] sm:$0xff]
    %v581 = vld [vmem:[#allocation4 + $0x130] sm:$0xff]
    %v582 = vld [vmem:[#allocation4 + $0x148] sm:$0xff]
    %v583 = vld [vmem:[#allocation4 + $0x160] sm:$0xff]
    %v584 = vld [vmem:[#allocation4 + $0x178] sm:$0xff]
    %v585 = vld [vmem:[%s466 + $0x10] sm:$0xff]
    %586 = vmatprep.subr.mxu0 0.0
    %587 = vmatpush1.msra.mxu0 %v569
    %588 = vmatprep.subr.mxu0 0.0
    %589 = vmatpush1.msra.mxu0 %v570
    %590 = vmatprep.subr.mxu0 0.0
    %591 = vmatpush1.msra.mxu0 %v571
    %592 = vmatprep.subr.mxu0 0.0
    %593 = vmatpush1.msra.mxu0 %v572
    %594 = vmatprep.subr.mxu0 0.0
    %595 = vmatpush1.msra.mxu0 %v573
    %596 = vmatprep.subr.mxu0 0.0
    %597 = vmatpush1.msra.mxu0 %v574
    %598 = vmatprep.subr.mxu0 0.0
    %599 = vmatpush1.msra.mxu0 %v575
    %600 = vmatprep.subr.mxu0 0.0
    %601 = vmatpush1.msra.mxu0 %v576
    %602 = vmatprep.subr.mxu0 0.0
    %603 = vmatpush1.msra.mxu0 %v577
    %604 = vmatprep.subr.mxu0 0.0
    %605 = vmatpush1.msra.mxu0 %v578
    %606 = vmatprep.subr.mxu0 0.0
    %607 = vmatpush1.msra.mxu0 %v579
    %608 = vmatprep.subr.mxu0 0.0
    %609 = vmatpush1.msra.mxu0 %v580
    %610 = vmatprep.subr.mxu0 0.0
    %611 = vmatpush1.msra.mxu0 %v581
    %612 = vmatprep.subr.mxu0 0.0
    %613 = vmatpush1.msra.mxu0 %v582
    %614 = vmatprep.subr.mxu0 0.0
    %615 = vmatpush1.msra.mxu0 %v583
    %616 = vmatprep.subr.mxu0 0.0
    %617 = vmatpush1.msra.mxu0 %v584
    %618 = vmatprep.subr.mxu0 0.0
    %619 = vmatpush1.msra.mxu0 0.0
    %620 = vmatprep.subr.mxu0 0.0
    %621 = vmatpush1.msra.mxu0 0.0
    %622 = vmatprep.subr.mxu0 0.0
    %623 = vmatpush1.msra.mxu0 0.0
    %624 = vmatprep.subr.mxu0 0.0
    %625 = vmatpush1.msra.mxu0 0.0
    %626 = vmatprep.subr.mxu0 0.0
    %627 = vmatpush1.msra.mxu0 0.0
    %628 = vmatprep.subr.mxu0 0.0
    %629 = vmatpush1.msra.mxu0 0.0
    %630 = vmatprep.subr.mxu0 0.0
    %631 = vmatpush1.msra.mxu0 0.0
    %632 = vmatprep.subr.mxu0 0.0
    %633 = vmatpush1.msra.mxu0 0.0
    %634 = vmatprep.subr.mxu0 0.0
    %635 = vmatpush1.msra.mxu0 0.0
    %636 = vmatprep.subr.mxu0 0.0
    %637 = vmatpush1.msra.mxu0 0.0
    %638 = vmatprep.subr.mxu0 0.0
    %639 = vmatpush1.msra.mxu0 0.0
    %640 = vmatprep.subr.mxu0 0.0
    %641 = vmatpush1.msra.mxu0 0.0
    %642 = vmatprep.subr.mxu0 0.0
    %643 = vmatpush1.msra.mxu0 0.0
    %644 = vmatprep.subr.mxu0 0.0
    %645 = vmatpush1.msra.mxu0 0.0
    %646 = vmatprep.subr.mxu0 0.0
    %647 = vmatpush1.msra.mxu0 0.0
    %648 = vmatprep.subr.mxu0 0.0
    %649 = vmatpush1.msra.mxu0 0.0
    %650 = vmatprep.mubr.f32.mxu0 0.0
    %651 = vmatmul.mubr.f32.gmra.mrb[0].mxu0 %v377
    %v652 = vpop.f32.mrb[0].mxu0
    %v653 = vadd.f32 %v375, %v652
    %v654 = vpop.f32.mrb[0].mxu0
    %655 = vdwg.mxu0
    %v656 = vmul.f32 %v474, %v653
    %v657 = vadd.f32 %v585, %v656
    %v658 = vtanh.pop %v657
    %v659 = vsub.f32 %v377, %v658
    %v660 = vmul.f32 %v568, %v659
    %v661 = vadd.f32 %v658, %v660
    %662 = vmatprep.subr.mxu0 0.0
    %663 = vmatpush1.msra.mxu0 %v378
    %664 = vmatprep.subr.mxu0 0.0
    %665 = vmatpush1.msra.mxu0 %v379
    %666 = vmatprep.subr.mxu0 0.0
    %667 = vmatpush1.msra.mxu0 %v380
    %668 = vmatprep.subr.mxu0 0.0
    %669 = vmatpush1.msra.mxu0 %v381
    %670 = vmatprep.subr.mxu0 0.0
    %671 = vmatpush1.msra.mxu0 %v382
    %672 = vmatprep.subr.mxu0 0.0
    %673 = vmatpush1.msra.mxu0 %v383
    %674 = vmatprep.subr.mxu0 0.0
    %675 = vmatpush1.msra.mxu0 %v384
    %676 = vmatprep.subr.mxu0 0.0
    %677 = vmatpush1.msra.mxu0 %v385
    %678 = vmatprep.subr.mxu0 0.0
    %679 = vmatpush1.msra.mxu0 %v386
    %680 = vmatprep.subr.mxu0 0.0
    %681 = vmatpush1.msra.mxu0 %v387
    %682 = vmatprep.subr.mxu0 0.0
    %683 = vmatpush1.msra.mxu0 %v388
    %684 = vmatprep.subr.mxu0 0.0
    %685 = vmatpush1.msra.mxu0 %v389
    %686 = vmatprep.subr.mxu0 0.0
    %687 = vmatpush1.msra.mxu0 %v390
    %688 = vmatprep.subr.mxu0 0.0
    %689 = vmatpush1.msra.mxu0 %v391
    %690 = vmatprep.subr.mxu0 0.0
    %691 = vmatpush1.msra.mxu0 %v392
    %692 = vmatprep.subr.mxu0 0.0
    %693 = vmatpush1.msra.mxu0 %v393
    %694 = vmatprep.subr.mxu0 0.0
    %695 = vmatpush1.msra.mxu0 0.0
    %696 = vmatprep.subr.mxu0 0.0
    %697 = vmatpush1.msra.mxu0 0.0
    %698 = vmatprep.subr.mxu0 0.0
    %699 = vmatpush1.msra.mxu0 0.0
    %700 = vmatprep.subr.mxu0 0.0
    %701 = vmatpush1.msra.mxu0 0.0
    %702 = vmatprep.subr.mxu0 0.0
    %703 = vmatpush1.msra.mxu0 0.0
    %704 = vmatprep.subr.mxu0 0.0
    %705 = vmatpush1.msra.mxu0 0.0
    %706 = vmatprep.subr.mxu0 0.0
    %707 = vmatpush1.msra.mxu0 0.0
    %708 = vmatprep.subr.mxu0 0.0
    %709 = vmatpush1.msra.mxu0 0.0
    %710 = vmatprep.subr.mxu0 0.0
    %711 = vmatpush1.msra.mxu0 0.0
    %712 = vmatprep.subr.mxu0 0.0
    %713 = vmatpush1.msra.mxu0 0.0
    %714 = vmatprep.subr.mxu0 0.0
    %715 = vmatpush1.msra.mxu0 0.0
    %716 = vmatprep.subr.mxu0 0.0
    %717 = vmatpush1.msra.mxu0 0.0
    %718 = vmatprep.subr.mxu0 0.0
    %719 = vmatpush1.msra.mxu0 0.0
    %720 = vmatprep.subr.mxu0 0.0
    %721 = vmatpush1.msra.mxu0 0.0
    %722 = vmatprep.subr.mxu0 0.0
    %723 = vmatpush1.msra.mxu0 0.0
    %724 = vmatprep.subr.mxu0 0.0
    %725 = vmatpush1.msra.mxu0 0.0
    %726 = vmatprep.mubr.f32.mxu0 0.0
    %727 = vmatmul.mubr.f32.gmra.mrb[0].mxu0 %v661
    %v728 = vpop.f32.mrb[0].mxu0
    %v729 = vadd.f32 0.0, %v728
    %v730 = vpop.f32.mrb[0].mxu0
    %731 = vdwg.mxu0
    %s732 = smul.u32 1, 3
    %s733 = smul.addr %s732, 8
    %s734 = scalar_lea.vmem [#allocation3], %s733
    %v735 = vld [vmem:[%s734] sm:$0xff]
    %v736 = vadd.f32 %v735, %v729
    %v737 = vxor.u32 %v736, 2147483648
    %v738 = vmul.f32 %v737, 1.442695
    %v739 = vpow.pop %v738
    %v740 = vadd.f32 %v739, 1.0
    %v741 = vrcp.pop %v740
    %v742 = vmul.f32 1.0, %v741
    %743 = vmatprep.subr.mxu0 0.0
    %744 = vmatpush1.msra.mxu0 %v475
    %745 = vmatprep.subr.mxu0 0.0
    %746 = vmatpush1.msra.mxu0 %v476
    %747 = vmatprep.subr.mxu0 0.0
    %748 = vmatpush1.msra.mxu0 %v477
    %749 = vmatprep.subr.mxu0 0.0
    %750 = vmatpush1.msra.mxu0 %v478
    %751 = vmatprep.subr.mxu0 0.0
    %752 = vmatpush1.msra.mxu0 %v479
    %753 = vmatprep.subr.mxu0 0.0
    %754 = vmatpush1.msra.mxu0 %v480
    %755 = vmatprep.subr.mxu0 0.0
    %756 = vmatpush1.msra.mxu0 %v481
    %757 = vmatprep.subr.mxu0 0.0
    %758 = vmatpush1.msra.mxu0 %v482
    %759 = vmatprep.subr.mxu0 0.0
    %760 = vmatpush1.msra.mxu0 %v483
    %761 = vmatprep.subr.mxu0 0.0
    %762 = vmatpush1.msra.mxu0 %v484
    %763 = vmatprep.subr.mxu0 0.0
    %764 = vmatpush1.msra.mxu0 %v485
    %765 = vmatprep.subr.mxu0 0.0
    %766 = vmatpush1.msra.mxu0 %v486
    %767 = vmatprep.subr.mxu0 0.0
    %768 = vmatpush1.msra.mxu0 %v487
    %769 = vmatprep.subr.mxu0 0.0
    %770 = vmatpush1.msra.mxu0 %v488
    %771 = vmatprep.subr.mxu0 0.0
    %772 = vmatpush1.msra.mxu0 %v489
    %773 = vmatprep.subr.mxu0 0.0
    %774 = vmatpush1.msra.mxu0 %v490
    %775 = vmatprep.subr.mxu0 0.0
    %776 = vmatpush1.msra.mxu0 0.0
    %777 = vmatprep.subr.mxu0 0.0
    %778 = vmatpush1.msra.mxu0 0.0
    %779 = vmatprep.subr.mxu0 0.0
    %780 = vmatpush1.msra.mxu0 0.0
    %781 = vmatprep.subr.mxu0 0.0
    %782 = vmatpush1.msra.mxu0 0.0
    %783 = vmatprep.subr.mxu0 0.0
    %784 = vmatpush1.msra.mxu0 0.0
    %785 = vmatprep.subr.mxu0 0.0
    %786 = vmatpush1.msra.mxu0 0.0
    %787 = vmatprep.subr.mxu0 0.0
    %788 = vmatpush1.msra.mxu0 0.0
    %789 = vmatprep.subr.mxu0 0.0
    %790 = vmatpush1.msra.mxu0 0.0
    %791 = vmatprep.subr.mxu0 0.0
    %792 = vmatpush1.msra.mxu0 0.0
    %793 = vmatprep.subr.mxu0 0.0
    %794 = vmatpush1.msra.mxu0 0.0
    %795 = vmatprep.subr.mxu0 0.0
    %796 = vmatpush1.msra.mxu0 0.0
    %797 = vmatprep.subr.mxu0 0.0
    %798 = vmatpush1.msra.mxu0 0.0
    %799 = vmatprep.subr.mxu0 0.0
    %800 = vmatpush1.msra.mxu0 0.0
    %801 = vmatprep.subr.mxu0 0.0
    %802 = vmatpush1.msra.mxu0 0.0
    %803 = vmatprep.subr.mxu0 0.0
    %804 = vmatpush1.msra.mxu0 0.0
    %805 = vmatprep.subr.mxu0 0.0
    %806 = vmatpush1.msra.mxu0 0.0
    %807 = vmatprep.mubr.f32.mxu0 0.0
    %808 = vmatmul.mubr.f32.gmra.mrb[0].mxu0 %v661
    %v809 = vpop.f32.mrb[0].mxu0
    %v810 = vadd.f32 0.0, %v809
    %v811 = vpop.f32.mrb[0].mxu0
    %812 = vdwg.mxu0
    %v813 = vld [vmem:[%s734 + $0x8] sm:$0xff]
    %v814 = vadd.f32 %v813, %v810
    %v815 = vxor.u32 %v814, 2147483648
    %v816 = vmul.f32 %v815, 1.442695
    %v817 = vpow.pop %v816
    %v818 = vadd.f32 %v817, 1.0
    %v819 = vrcp.pop %v818
    %v820 = vmul.f32 1.0, %v819
    %v821 = vld [vmem:[%s734 + $0x10] sm:$0xff]
    %822 = vmatprep.subr.mxu0 0.0
    %823 = vmatpush1.msra.mxu0 %v569
    %824 = vmatprep.subr.mxu0 0.0
    %825 = vmatpush1.msra.mxu0 %v570
    %826 = vmatprep.subr.mxu0 0.0
    %827 = vmatpush1.msra.mxu0 %v571
    %828 = vmatprep.subr.mxu0 0.0
    %829 = vmatpush1.msra.mxu0 %v572
    %830 = vmatprep.subr.mxu0 0.0
    %831 = vmatpush1.msra.mxu0 %v573
    %832 = vmatprep.subr.mxu0 0.0
    %833 = vmatpush1.msra.mxu0 %v574
    %834 = vmatprep.subr.mxu0 0.0
    %835 = vmatpush1.msra.mxu0 %v575
    %836 = vmatprep.subr.mxu0 0.0
    %837 = vmatpush1.msra.mxu0 %v576
    %838 = vmatprep.subr.mxu0 0.0
    %839 = vmatpush1.msra.mxu0 %v577
    %840 = vmatprep.subr.mxu0 0.0
    %841 = vmatpush1.msra.mxu0 %v578
    %842 = vmatprep.subr.mxu0 0.0
    %843 = vmatpush1.msra.mxu0 %v579
    %844 = vmatprep.subr.mxu0 0.0
    %845 = vmatpush1.msra.mxu0 %v580
    %846 = vmatprep.subr.mxu0 0.0
    %847 = vmatpush1.msra.mxu0 %v581
    %848 = vmatprep.subr.mxu0 0.0
    %849 = vmatpush1.msra.mxu0 %v582
    %850 = vmatprep.subr.mxu0 0.0
    %851 = vmatpush1.msra.mxu0 %v583
    %852 = vmatprep.subr.mxu0 0.0
    %853 = vmatpush1.msra.mxu0 %v584
    %854 = vmatprep.subr.mxu0 0.0
    %855 = vmatpush1.msra.mxu0 0.0
    %856 = vmatprep.subr.mxu0 0.0
    %857 = vmatpush1.msra.mxu0 0.0
    %858 = vmatprep.subr.mxu0 0.0
    %859 = vmatpush1.msra.mxu0 0.0
    %860 = vmatprep.subr.mxu0 0.0
    %861 = vmatpush1.msra.mxu0 0.0
    %862 = vmatprep.subr.mxu0 0.0
    %863 = vmatpush1.msra.mxu0 0.0
    %864 = vmatprep.subr.mxu0 0.0
    %865 = vmatpush1.msra.mxu0 0.0
    %866 = vmatprep.subr.mxu0 0.0
    %867 = vmatpush1.msra.mxu0 0.0
    %868 = vmatprep.subr.mxu0 0.0
    %869 = vmatpush1.msra.mxu0 0.0
    %870 = vmatprep.subr.mxu0 0.0
    %871 = vmatpush1.msra.mxu0 0.0
    %872 = vmatprep.subr.mxu0 0.0
    %873 = vmatpush1.msra.mxu0 0.0
    %874 = vmatprep.subr.mxu0 0.0
    %875 = vmatpush1.msra.mxu0 0.0
    %876 = vmatprep.subr.mxu0 0.0
    %877 = vmatpush1.msra.mxu0 0.0
    %878 = vmatprep.subr.mxu0 0.0
    %879 = vmatpush1.msra.mxu0 0.0
    %880 = vmatprep.subr.mxu0 0.0
    %881 = vmatpush1.msra.mxu0 0.0
    %882 = vmatprep.subr.mxu0 0.0
    %883 = vmatpush1.msra.mxu0 0.0
    %884 = vmatprep.subr.mxu0 0.0
    %885 = vmatpush1.msra.mxu0 0.0
    %886 = vmatprep.mubr.f32.mxu0 0.0
    %887 = vmatmul.mubr.f32.gmra.mrb[0].mxu0 %v661
    %v888 = vpop.f32.mrb[0].mxu0
    %v889 = vadd.f32 %v375, %v888
    %v890 = vpop.f32.mrb[0].mxu0
    %891 = vdwg.mxu0
    %v892 = vmul.f32 %v742, %v889
    %v893 = vadd.f32 %v821, %v892
    %v894 = vtanh.pop %v893
    %v895 = vsub.f32 %v661, %v894
    %v896 = vmul.f32 %v820, %v895
    %v897 = vadd.f32 %v894, %v896
    %898 = vmatprep.subr.mxu0 0.0
    %899 = vmatpush1.msra.mxu0 %v378
    %900 = vmatprep.subr.mxu0 0.0
    %901 = vmatpush1.msra.mxu0 %v379
    %902 = vmatprep.subr.mxu0 0.0
    %903 = vmatpush1.msra.mxu0 %v380
    %904 = vmatprep.subr.mxu0 0.0
    %905 = vmatpush1.msra.mxu0 %v381
    %906 = vmatprep.subr.mxu0 0.0
    %907 = vmatpush1.msra.mxu0 %v382
    %908 = vmatprep.subr.mxu0 0.0
    %909 = vmatpush1.msra.mxu0 %v383
    %910 = vmatprep.subr.mxu0 0.0
    %911 = vmatpush1.msra.mxu0 %v384
    %912 = vmatprep.subr.mxu0 0.0
    %913 = vmatpush1.msra.mxu0 %v385
    %914 = vmatprep.subr.mxu0 0.0
    %915 = vmatpush1.msra.mxu0 %v386
    %916 = vmatprep.subr.mxu0 0.0
    %917 = vmatpush1.msra.mxu0 %v387
    %918 = vmatprep.subr.mxu0 0.0
    %919 = vmatpush1.msra.mxu0 %v388
    %920 = vmatprep.subr.mxu0 0.0
    %921 = vmatpush1.msra.mxu0 %v389
    %922 = vmatprep.subr.mxu0 0.0
    %923 = vmatpush1.msra.mxu0 %v390
    %924 = vmatprep.subr.mxu0 0.0
    %925 = vmatpush1.msra.mxu0 %v391
    %926 = vmatprep.subr.mxu0 0.0
    %927 = vmatpush1.msra.mxu0 %v392
    %928 = vmatprep.subr.mxu0 0.0
    %929 = vmatpush1.msra.mxu0 %v393
    %930 = vmatprep.subr.mxu0 0.0
    %931 = vmatpush1.msra.mxu0 0.0
    %932 = vmatprep.subr.mxu0 0.0
    %933 = vmatpush1.msra.mxu0 0.0
    %934 = vmatprep.subr.mxu0 0.0
    %935 = vmatpush1.msra.mxu0 0.0
    %936 = vmatprep.subr.mxu0 0.0
    %937 = vmatpush1.msra.mxu0 0.0
    %938 = vmatprep.subr.mxu0 0.0
    %939 = vmatpush1.msra.mxu0 0.0
    %940 = vmatprep.subr.mxu0 0.0
    %941 = vmatpush1.msra.mxu0 0.0
    %942 = vmatprep.subr.mxu0 0.0
    %943 = vmatpush1.msra.mxu0 0.0
    %944 = vmatprep.subr.mxu0 0.0
    %945 = vmatpush1.msra.mxu0 0.0
    %946 = vmatprep.subr.mxu0 0.0
    %947 = vmatpush1.msra.mxu0 0.0
    %948 = vmatprep.subr.mxu0 0.0
    %949 = vmatpush1.msra.mxu0 0.0
    %950 = vmatprep.subr.mxu0 0.0
    %951 = vmatpush1.msra.mxu0 0.0
    %952 = vmatprep.subr.mxu0 0.0
    %953 = vmatpush1.msra.mxu0 0.0
    %954 = vmatprep.subr.mxu0 0.0
    %955 = vmatpush1.msra.mxu0 0.0
    %956 = vmatprep.subr.mxu0 0.0
    %957 = vmatpush1.msra.mxu0 0.0
    %958 = vmatprep.subr.mxu0 0.0
    %959 = vmatpush1.msra.mxu0 0.0
    %960 = vmatprep.subr.mxu0 0.0
    %961 = vmatpush1.msra.mxu0 0.0
    %962 = vmatprep.mubr.f32.mxu0 0.0
    %963 = vmatmul.mubr.f32.gmra.mrb[0].mxu0 %v897
    %v964 = vpop.f32.mrb[0].mxu0
    %v965 = vadd.f32 0.0, %v964
    %v966 = vpop.f32.mrb[0].mxu0
    %967 = vdwg.mxu0
    %s968 = smul.u32 2, 3
    %s969 = smul.addr %s968, 8
    %s970 = scalar_lea.vmem [#allocation3], %s969
    %v971 = vld [vmem:[%s970] sm:$0xff]
    %v972 = vadd.f32 %v971, %v965
    %v973 = vxor.u32 %v972, 2147483648
    %v974 = vmul.f32 %v973, 1.442695
    %v975 = vpow.pop %v974
    %v976 = vadd.f32 %v975, 1.0
    %v977 = vrcp.pop %v976
    %v978 = vmul.f32 1.0, %v977
    %979 = vmatprep.subr.mxu0 0.0
    %980 = vmatpush1.msra.mxu0 %v475
    %981 = vmatprep.subr.mxu0 0.0
    %982 = vmatpush1.msra.mxu0 %v476
    %983 = vmatprep.subr.mxu0 0.0
    %984 = vmatpush1.msra.mxu0 %v477
    %985 = vmatprep.subr.mxu0 0.0
    %986 = vmatpush1.msra.mxu0 %v478
    %987 = vmatprep.subr.mxu0 0.0
    %988 = vmatpush1.msra.mxu0 %v479
    %989 = vmatprep.subr.mxu0 0.0
    %990 = vmatpush1.msra.mxu0 %v480
    %991 = vmatprep.subr.mxu0 0.0
    %992 = vmatpush1.msra.mxu0 %v481
    %993 = vmatprep.subr.mxu0 0.0
    %994 = vmatpush1.msra.mxu0 %v482
    %995 = vmatprep.subr.mxu0 0.0
    %996 = vmatpush1.msra.mxu0 %v483
    %997 = vmatprep.subr.mxu0 0.0
    %998 = vmatpush1.msra.mxu0 %v484
    %999 = vmatprep.subr.mxu0 0.0
    %1000 = vmatpush1.msra.mxu0 %v485
    %1001 = vmatprep.subr.mxu0 0.0
    %1002 = vmatpush1.msra.mxu0 %v486
    %1003 = vmatprep.subr.mxu0 0.0
    %1004 = vmatpush1.msra.mxu0 %v487
    %1005 = vmatprep.subr.mxu0 0.0
    %1006 = vmatpush1.msra.mxu0 %v488
    %1007 = vmatprep.subr.mxu0 0.0
    %1008 = vmatpush1.msra.mxu0 %v489
    %1009 = vmatprep.subr.mxu0 0.0
    %1010 = vmatpush1.msra.mxu0 %v490
    %1011 = vmatprep.subr.mxu0 0.0
    %1012 = vmatpush1.msra.mxu0 0.0
    %1013 = vmatprep.subr.mxu0 0.0
    %1014 = vmatpush1.msra.mxu0 0.0
    %1015 = vmatprep.subr.mxu0 0.0
    %1016 = vmatpush1.msra.mxu0 0.0
    %1017 = vmatprep.subr.mxu0 0.0
    %1018 = vmatpush1.msra.mxu0 0.0
    %1019 = vmatprep.subr.mxu0 0.0
    %1020 = vmatpush1.msra.mxu0 0.0
    %1021 = vmatprep.subr.mxu0 0.0
    %1022 = vmatpush1.msra.mxu0 0.0
    %1023 = vmatprep.subr.mxu0 0.0
    %1024 = vmatpush1.msra.mxu0 0.0
    %1025 = vmatprep.subr.mxu0 0.0
    %1026 = vmatpush1.msra.mxu0 0.0
    %1027 = vmatprep.subr.mxu0 0.0
    %1028 = vmatpush1.msra.mxu0 0.0
    %1029 = vmatprep.subr.mxu0 0.0
    %1030 = vmatpush1.msra.mxu0 0.0
    %1031 = vmatprep.subr.mxu0 0.0
    %1032 = vmatpush1.msra.mxu0 0.0
    %1033 = vmatprep.subr.mxu0 0.0
    %1034 = vmatpush1.msra.mxu0 0.0
    %1035 = vmatprep.subr.mxu0 0.0
    %1036 = vmatpush1.msra.mxu0 0.0
    %1037 = vmatprep.subr.mxu0 0.0
    %1038 = vmatpush1.msra.mxu0 0.0
    %1039 = vmatprep.subr.mxu0 0.0
    %1040 = vmatpush1.msra.mxu0 0.0
    %1041 = vmatprep.subr.mxu0 0.0
    %1042 = vmatpush1.msra.mxu0 0.0
    %1043 = vmatprep.mubr.f32.mxu0 0.0
    %1044 = vmatmul.mubr.f32.gmra.mrb[0].mxu0 %v897
    %v1045 = vpop.f32.mrb[0].mxu0
    %v1046 = vadd.f32 0.0, %v1045
    %v1047 = vpop.f32.mrb[0].mxu0
    %1048 = vdwg.mxu0
    %v1049 = vld [vmem:[%s970 + $0x8] sm:$0xff]
    %v1050 = vadd.f32 %v1049, %v1046
    %v1051 = vxor.u32 %v1050, 2147483648
    %v1052 = vmul.f32 %v1051, 1.442695
    %v1053 = vpow.pop %v1052
    %v1054 = vadd.f32 %v1053, 1.0
    %v1055 = vrcp.pop %v1054
    %v1056 = vmul.f32 1.0, %v1055
    %v1057 = vld [vmem:[%s970 + $0x10] sm:$0xff]
    %1058 = vmatprep.subr.mxu0 0.0
    %1059 = vmatpush1.msra.mxu0 %v569
    %1060 = vmatprep.subr.mxu0 0.0
    %1061 = vmatpush1.msra.mxu0 %v570
    %1062 = vmatprep.subr.mxu0 0.0
    %1063 = vmatpush1.msra.mxu0 %v571
    %1064 = vmatprep.subr.mxu0 0.0
    %1065 = vmatpush1.msra.mxu0 %v572
    %1066 = vmatprep.subr.mxu0 0.0
    %1067 = vmatpush1.msra.mxu0 %v573
    %1068 = vmatprep.subr.mxu0 0.0
    %1069 = vmatpush1.msra.mxu0 %v574
    %1070 = vmatprep.subr.mxu0 0.0
    %1071 = vmatpush1.msra.mxu0 %v575
    %1072 = vmatprep.subr.mxu0 0.0
    %1073 = vmatpush1.msra.mxu0 %v576
    %1074 = vmatprep.subr.mxu0 0.0
    %1075 = vmatpush1.msra.mxu0 %v577
    %1076 = vmatprep.subr.mxu0 0.0
    %1077 = vmatpush1.msra.mxu0 %v578
    %1078 = vmatprep.subr.mxu0 0.0
    %1079 = vmatpush1.msra.mxu0 %v579
    %1080 = vmatprep.subr.mxu0 0.0
    %1081 = vmatpush1.msra.mxu0 %v580
    %1082 = vmatprep.subr.mxu0 0.0
    %1083 = vmatpush1.msra.mxu0 %v581
    %1084 = vmatprep.subr.mxu0 0.0
    %1085 = vmatpush1.msra.mxu0 %v582
    %1086 = vmatprep.subr.mxu0 0.0
    %1087 = vmatpush1.msra.mxu0 %v583
    %1088 = vmatprep.subr.mxu0 0.0
    %1089 = vmatpush1.msra.mxu0 %v584
    %1090 = vmatprep.subr.mxu0 0.0
    %1091 = vmatpush1.msra.mxu0 0.0
    %1092 = vmatprep.subr.mxu0 0.0
    %1093 = vmatpush1.msra.mxu0 0.0
    %1094 = vmatprep.subr.mxu0 0.0
    %1095 = vmatpush1.msra.mxu0 0.0
    %1096 = vmatprep.subr.mxu0 0.0
    %1097 = vmatpush1.msra.mxu0 0.0
    %1098 = vmatprep.subr.mxu0 0.0
    %1099 = vmatpush1.msra.mxu0 0.0
    %1100 = vmatprep.subr.mxu0 0.0
    %1101 = vmatpush1.msra.mxu0 0.0
    %1102 = vmatprep.subr.mxu0 0.0
    %1103 = vmatpush1.msra.mxu0 0.0
    %1104 = vmatprep.subr.mxu0 0.0
    %1105 = vmatpush1.msra.mxu0 0.0
    %1106 = vmatprep.subr.mxu0 0.0
    %1107 = vmatpush1.msra.mxu0 0.0
    %1108 = vmatprep.subr.mxu0 0.0
    %1109 = vmatpush1.msra.mxu0 0.0
    %1110 = vmatprep.subr.mxu0 0.0
    %1111 = vmatpush1.msra.mxu0 0.0
    %1112 = vmatprep.subr.mxu0 0.0
    %1113 = vmatpush1.msra.mxu0 0.0
    %1114 = vmatprep.subr.mxu0 0.0
    %1115 = vmatpush1.msra.mxu0 0.0
    %1116 = vmatprep.subr.mxu0 0.0
    %1117 = vmatpush1.msra.mxu0 0.0
    %1118 = vmatprep.subr.mxu0 0.0
    %1119 = vmatpush1.msra.mxu0 0.0
    %1120 = vmatprep.subr.mxu0 0.0
    %1121 = vmatpush1.msra.mxu0 0.0
    %1122 = vmatprep.mubr.f32.mxu0 0.0
    %1123 = vmatmul.mubr.f32.gmra.mrb[0].mxu0 %v897
    %v1124 = vpop.f32.mrb[0].mxu0
    %v1125 = vadd.f32 %v375, %v1124
    %v1126 = vpop.f32.mrb[0].mxu0
    %1127 = vdwg.mxu0
    %v1128 = vmul.f32 %v978, %v1125
    %v1129 = vadd.f32 %v1057, %v1128
    %v1130 = vtanh.pop %v1129
    %v1131 = vsub.f32 %v897, %v1130
    %v1132 = vmul.f32 %v1056, %v1131
    %v1133 = vadd.f32 %v1130, %v1132
    %1134 = vmatprep.subr.mxu0 0.0
    %1135 = vmatpush1.msra.mxu0 %v378
    %1136 = vmatprep.subr.mxu0 0.0
    %1137 = vmatpush1.msra.mxu0 %v379
    %1138 = vmatprep.subr.mxu0 0.0
    %1139 = vmatpush1.msra.mxu0 %v380
    %1140 = vmatprep.subr.mxu0 0.0
    %1141 = vmatpush1.msra.mxu0 %v381
    %1142 = vmatprep.subr.mxu0 0.0
    %1143 = vmatpush1.msra.mxu0 %v382
    %1144 = vmatprep.subr.mxu0 0.0
    %1145 = vmatpush1.msra.mxu0 %v383
    %1146 = vmatprep.subr.mxu0 0.0
    %1147 = vmatpush1.msra.mxu0 %v384
    %1148 = vmatprep.subr.mxu0 0.0
    %1149 = vmatpush1.msra.mxu0 %v385
    %1150 = vmatprep.subr.mxu0 0.0
    %1151 = vmatpush1.msra.mxu0 %v386
    %1152 = vmatprep.subr.mxu0 0.0
    %1153 = vmatpush1.msra.mxu0 %v387
    %1154 = vmatprep.subr.mxu0 0.0
    %1155 = vmatpush1.msra.mxu0 %v388
    %1156 = vmatprep.subr.mxu0 0.0
    %1157 = vmatpush1.msra.mxu0 %v389
    %1158 = vmatprep.subr.mxu0 0.0
    %1159 = vmatpush1.msra.mxu0 %v390
    %1160 = vmatprep.subr.mxu0 0.0
    %1161 = vmatpush1.msra.mxu0 %v391
    %1162 = vmatprep.subr.mxu0 0.0
    %1163 = vmatpush1.msra.mxu0 %v392
    %1164 = vmatprep.subr.mxu0 0.0
    %1165 = vmatpush1.msra.mxu0 %v393
    %1166 = vmatprep.subr.mxu0 0.0
    %1167 = vmatpush1.msra.mxu0 0.0
    %1168 = vmatprep.subr.mxu0 0.0
    %1169 = vmatpush1.msra.mxu0 0.0
    %1170 = vmatprep.subr.mxu0 0.0
    %1171 = vmatpush1.msra.mxu0 0.0
    %1172 = vmatprep.subr.mxu0 0.0
    %1173 = vmatpush1.msra.mxu0 0.0
    %1174 = vmatprep.subr.mxu0 0.0
    %1175 = vmatpush1.msra.mxu0 0.0
    %1176 = vmatprep.subr.mxu0 0.0
    %1177 = vmatpush1.msra.mxu0 0.0
    %1178 = vmatprep.subr.mxu0 0.0
    %1179 = vmatpush1.msra.mxu0 0.0
    %1180 = vmatprep.subr.mxu0 0.0
    %1181 = vmatpush1.msra.mxu0 0.0
    %1182 = vmatprep.subr.mxu0 0.0
    %1183 = vmatpush1.msra.mxu0 0.0
    %1184 = vmatprep.subr.mxu0 0.0
    %1185 = vmatpush1.msra.mxu0 0.0
    %1186 = vmatprep.subr.mxu0 0.0
    %1187 = vmatpush1.msra.mxu0 0.0
    %1188 = vmatprep.subr.mxu0 0.0
    %1189 = vmatpush1.msra.mxu0 0.0
    %1190 = vmatprep.subr.mxu0 0.0
    %1191 = vmatpush1.msra.mxu0 0.0
    %1192 = vmatprep.subr.mxu0 0.0
    %1193 = vmatpush1.msra.mxu0 0.0
    %1194 = vmatprep.subr.mxu0 0.0
    %1195 = vmatpush1.msra.mxu0 0.0
    %1196 = vmatprep.subr.mxu0 0.0
    %1197 = vmatpush1.msra.mxu0 0.0
    %1198 = vmatprep.mubr.f32.mxu0 0.0
    %1199 = vmatmul.mubr.f32.gmra.mrb[0].mxu0 %v1133
    %v1200 = vpop.f32.mrb[0].mxu0
    %v1201 = vadd.f32 0.0, %v1200
    %v1202 = vpop.f32.mrb[0].mxu0
    %1203 = vdwg.mxu0
    %s1204 = smul.u32 3, 3
    %s1205 = smul.addr %s1204, 8
    %s1206 = scalar_lea.vmem [#allocation3], %s1205
    %v1207 = vld [vmem:[%s1206] sm:$0xff]
    %v1208 = vadd.f32 %v1207, %v1201
    %v1209 = vxor.u32 %v1208, 2147483648
    %v1210 = vmul.f32 %v1209, 1.442695
    %v1211 = vpow.pop %v1210
    %v1212 = vadd.f32 %v1211, 1.0
    %v1213 = vrcp.pop %v1212
    %v1214 = vmul.f32 1.0, %v1213
    %1215 = vmatprep.subr.mxu0 0.0
    %1216 = vmatpush1.msra.mxu0 %v475
    %1217 = vmatprep.subr.mxu0 0.0
    %1218 = vmatpush1.msra.mxu0 %v476
    %1219 = vmatprep.subr.mxu0 0.0
    %1220 = vmatpush1.msra.mxu0 %v477
    %1221 = vmatprep.subr.mxu0 0.0
    %1222 = vmatpush1.msra.mxu0 %v478
    %1223 = vmatprep.subr.mxu0 0.0
    %1224 = vmatpush1.msra.mxu0 %v479
    %1225 = vmatprep.subr.mxu0 0.0
    %1226 = vmatpush1.msra.mxu0 %v480
    %1227 = vmatprep.subr.mxu0 0.0
    %1228 = vmatpush1.msra.mxu0 %v481
    %1229 = vmatprep.subr.mxu0 0.0
    %1230 = vmatpush1.msra.mxu0 %v482
    %1231 = vmatprep.subr.mxu0 0.0
    %1232 = vmatpush1.msra.mxu0 %v483
    %1233 = vmatprep.subr.mxu0 0.0
    %1234 = vmatpush1.msra.mxu0 %v484
    %1235 = vmatprep.subr.mxu0 0.0
    %1236 = vmatpush1.msra.mxu0 %v485
    %1237 = vmatprep.subr.mxu0 0.0
    %1238 = vmatpush1.msra.mxu0 %v486
    %1239 = vmatprep.subr.mxu0 0.0
    %1240 = vmatpush1.msra.mxu0 %v487
    %1241 = vmatprep.subr.mxu0 0.0
    %1242 = vmatpush1.msra.mxu0 %v488
    %1243 = vmatprep.subr.mxu0 0.0
    %1244 = vmatpush1.msra.mxu0 %v489
    %1245 = vmatprep.subr.mxu0 0.0
    %1246 = vmatpush1.msra.mxu0 %v490
    %1247 = vmatprep.subr.mxu0 0.0
    %1248 = vmatpush1.msra.mxu0 0.0
    %1249 = vmatprep.subr.mxu0 0.0
    %1250 = vmatpush1.msra.mxu0 0.0
    %1251 = vmatprep.subr.mxu0 0.0
    %1252 = vmatpush1.msra.mxu0 0.0
    %1253 = vmatprep.subr.mxu0 0.0
    %1254 = vmatpush1.msra.mxu0 0.0
    %1255 = vmatprep.subr.mxu0 0.0
    %1256 = vmatpush1.msra.mxu0 0.0
    %1257 = vmatprep.subr.mxu0 0.0
    %1258 = vmatpush1.msra.mxu0 0.0
    %1259 = vmatprep.subr.mxu0 0.0
    %1260 = vmatpush1.msra.mxu0 0.0
    %1261 = vmatprep.subr.mxu0 0.0
    %1262 = vmatpush1.msra.mxu0 0.0
    %1263 = vmatprep.subr.mxu0 0.0
    %1264 = vmatpush1.msra.mxu0 0.0
    %1265 = vmatprep.subr.mxu0 0.0
    %1266 = vmatpush1.msra.mxu0 0.0
    %1267 = vmatprep.subr.mxu0 0.0
    %1268 = vmatpush1.msra.mxu0 0.0
    %1269 = vmatprep.subr.mxu0 0.0
    %1270 = vmatpush1.msra.mxu0 0.0
    %1271 = vmatprep.subr.mxu0 0.0
    %1272 = vmatpush1.msra.mxu0 0.0
    %1273 = vmatprep.subr.mxu0 0.0
    %1274 = vmatpush1.msra.mxu0 0.0
    %1275 = vmatprep.subr.mxu0 0.0
    %1276 = vmatpush1.msra.mxu0 0.0
    %1277 = vmatprep.subr.mxu0 0.0
    %1278 = vmatpush1.msra.mxu0 0.0
    %1279 = vmatprep.mubr.f32.mxu0 0.0
    %1280 = vmatmul.mubr.f32.gmra.mrb[0].mxu0 %v1133
    %v1281 = vpop.f32.mrb[0].mxu0
    %v1282 = vadd.f32 0.0, %v1281
    %v1283 = vpop.f32.mrb[0].mxu0
    %1284 = vdwg.mxu0
    %v1285 = vld [vmem:[%s1206 + $0x8] sm:$0xff]
    %v1286 = vadd.f32 %v1285, %v1282
    %v1287 = vxor.u32 %v1286, 2147483648
    %v1288 = vmul.f32 %v1287, 1.442695
    %v1289 = vpow.pop %v1288
    %v1290 = vadd.f32 %v1289, 1.0
    %v1291 = vrcp.pop %v1290
    %v1292 = vmul.f32 1.0, %v1291
    %v1293 = vld [vmem:[%s1206 + $0x10] sm:$0xff]
    %1294 = vmatprep.subr.mxu0 0.0
    %1295 = vmatpush1.msra.mxu0 %v569
    %1296 = vmatprep.subr.mxu0 0.0
    %1297 = vmatpush1.msra.mxu0 %v570
    %1298 = vmatprep.subr.mxu0 0.0
    %1299 = vmatpush1.msra.mxu0 %v571
    %1300 = vmatprep.subr.mxu0 0.0
    %1301 = vmatpush1.msra.mxu0 %v572
    %1302 = vmatprep.subr.mxu0 0.0
    %1303 = vmatpush1.msra.mxu0 %v573
    %1304 = vmatprep.subr.mxu0 0.0
    %1305 = vmatpush1.msra.mxu0 %v574
    %1306 = vmatprep.subr.mxu0 0.0
    %1307 = vmatpush1.msra.mxu0 %v575
    %1308 = vmatprep.subr.mxu0 0.0
    %1309 = vmatpush1.msra.mxu0 %v576
    %1310 = vmatprep.subr.mxu0 0.0
    %1311 = vmatpush1.msra.mxu0 %v577
    %1312 = vmatprep.subr.mxu0 0.0
    %1313 = vmatpush1.msra.mxu0 %v578
    %1314 = vmatprep.subr.mxu0 0.0
    %1315 = vmatpush1.msra.mxu0 %v579
    %1316 = vmatprep.subr.mxu0 0.0
    %1317 = vmatpush1.msra.mxu0 %v580
    %1318 = vmatprep.subr.mxu0 0.0
    %1319 = vmatpush1.msra.mxu0 %v581
    %1320 = vmatprep.subr.mxu0 0.0
    %1321 = vmatpush1.msra.mxu0 %v582
    %1322 = vmatprep.subr.mxu0 0.0
    %1323 = vmatpush1.msra.mxu0 %v583
    %1324 = vmatprep.subr.mxu0 0.0
    %1325 = vmatpush1.msra.mxu0 %v584
    %1326 = vmatprep.subr.mxu0 0.0
    %1327 = vmatpush1.msra.mxu0 0.0
    %1328 = vmatprep.subr.mxu0 0.0
    %1329 = vmatpush1.msra.mxu0 0.0
    %1330 = vmatprep.subr.mxu0 0.0
    %1331 = vmatpush1.msra.mxu0 0.0
    %1332 = vmatprep.subr.mxu0 0.0
    %1333 = vmatpush1.msra.mxu0 0.0
    %1334 = vmatprep.subr.mxu0 0.0
    %1335 = vmatpush1.msra.mxu0 0.0
    %1336 = vmatprep.subr.mxu0 0.0
    %1337 = vmatpush1.msra.mxu0 0.0
    %1338 = vmatprep.subr.mxu0 0.0
    %1339 = vmatpush1.msra.mxu0 0.0
    %1340 = vmatprep.subr.mxu0 0.0
    %1341 = vmatpush1.msra.mxu0 0.0
    %1342 = vmatprep.subr.mxu0 0.0
    %1343 = vmatpush1.msra.mxu0 0.0
    %1344 = vmatprep.subr.mxu0 0.0
    %1345 = vmatpush1.msra.mxu0 0.0
    %1346 = vmatprep.subr.mxu0 0.0
    %1347 = vmatpush1.msra.mxu0 0.0
    %1348 = vmatprep.subr.mxu0 0.0
    %1349 = vmatpush1.msra.mxu0 0.0
    %1350 = vmatprep.subr.mxu0 0.0
    %1351 = vmatpush1.msra.mxu0 0.0
    %1352 = vmatprep.subr.mxu0 0.0
    %1353 = vmatpush1.msra.mxu0 0.0
    %1354 = vmatprep.subr.mxu0 0.0
    %1355 = vmatpush1.msra.mxu0 0.0
    %1356 = vmatprep.subr.mxu0 0.0
    %1357 = vmatpush1.msra.mxu0 0.0
    %1358 = vmatprep.mubr.f32.mxu0 0.0
    %1359 = vmatmul.mubr.f32.gmra.mrb[0].mxu0 %v1133
    %v1360 = vpop.f32.mrb[0].mxu0
    %v1361 = vadd.f32 %v375, %v1360
    %v1362 = vpop.f32.mrb[0].mxu0
    %1363 = vdwg.mxu0
    %v1364 = vmul.f32 %v1214, %v1361
    %v1365 = vadd.f32 %v1293, %v1364
    %v1366 = vtanh.pop %v1365
    %v1367 = vsub.f32 %v1133, %v1366
    %v1368 = vmul.f32 %v1292, %v1367
    %v1369 = vadd.f32 %v1366, %v1368
    %1370 = vmatprep.subr.mxu0 0.0
    %1371 = vmatpush1.msra.mxu0 %v378
    %1372 = vmatprep.subr.mxu0 0.0
    %1373 = vmatpush1.msra.mxu0 %v379
    %1374 = vmatprep.subr.mxu0 0.0
    %1375 = vmatpush1.msra.mxu0 %v380
    %1376 = vmatprep.subr.mxu0 0.0
    %1377 = vmatpush1.msra.mxu0 %v381
    %1378 = vmatprep.subr.mxu0 0.0
    %1379 = vmatpush1.msra.mxu0 %v382
    %1380 = vmatprep.subr.mxu0 0.0
    %1381 = vmatpush1.msra.mxu0 %v383
    %1382 = vmatprep.subr.mxu0 0.0
    %1383 = vmatpush1.msra.mxu0 %v384
    %1384 = vmatprep.subr.mxu0 0.0
    %1385 = vmatpush1.msra.mxu0 %v385
    %1386 = vmatprep.subr.mxu0 0.0
    %1387 = vmatpush1.msra.mxu0 %v386
    %1388 = vmatprep.subr.mxu0 0.0
    %1389 = vmatpush1.msra.mxu0 %v387
    %1390 = vmatprep.subr.mxu0 0.0
    %1391 = vmatpush1.msra.mxu0 %v388
    %1392 = vmatprep.subr.mxu0 0.0
    %1393 = vmatpush1.msra.mxu0 %v389
    %1394 = vmatprep.subr.mxu0 0.0
    %1395 = vmatpush1.msra.mxu0 %v390
    %1396 = vmatprep.subr.mxu0 0.0
    %1397 = vmatpush1.msra.mxu0 %v391
    %1398 = vmatprep.subr.mxu0 0.0
    %1399 = vmatpush1.msra.mxu0 %v392
    %1400 = vmatprep.subr.mxu0 0.0
    %1401 = vmatpush1.msra.mxu0 %v393
    %1402 = vmatprep.subr.mxu0 0.0
    %1403 = vmatpush1.msra.mxu0 0.0
    %1404 = vmatprep.subr.mxu0 0.0
    %1405 = vmatpush1.msra.mxu0 0.0
    %1406 = vmatprep.subr.mxu0 0.0
    %1407 = vmatpush1.msra.mxu0 0.0
    %1408 = vmatprep.subr.mxu0 0.0
    %1409 = vmatpush1.msra.mxu0 0.0
    %1410 = vmatprep.subr.mxu0 0.0
    %1411 = vmatpush1.msra.mxu0 0.0
    %1412 = vmatprep.subr.mxu0 0.0
    %1413 = vmatpush1.msra.mxu0 0.0
    %1414 = vmatprep.subr.mxu0 0.0
    %1415 = vmatpush1.msra.mxu0 0.0
    %1416 = vmatprep.subr.mxu0 0.0
    %1417 = vmatpush1.msra.mxu0 0.0
    %1418 = vmatprep.subr.mxu0 0.0
    %1419 = vmatpush1.msra.mxu0 0.0
    %1420 = vmatprep.subr.mxu0 0.0
    %1421 = vmatpush1.msra.mxu0 0.0
    %1422 = vmatprep.subr.mxu0 0.0
    %1423 = vmatpush1.msra.mxu0 0.0
    %1424 = vmatprep.subr.mxu0 0.0
    %1425 = vmatpush1.msra.mxu0 0.0
    %1426 = vmatprep.subr.mxu0 0.0
    %1427 = vmatpush1.msra.mxu0 0.0
    %1428 = vmatprep.subr.mxu0 0.0
    %1429 = vmatpush1.msra.mxu0 0.0
    %1430 = vmatprep.subr.mxu0 0.0
    %1431 = vmatpush1.msra.mxu0 0.0
    %1432 = vmatprep.subr.mxu0 0.0
    %1433 = vmatpush1.msra.mxu0 0.0
    %1434 = vmatprep.mubr.f32.mxu0 0.0
    %1435 = vmatmul.mubr.f32.gmra.mrb[0].mxu0 %v1369
    %v1436 = vpop.f32.mrb[0].mxu0
    %v1437 = vadd.f32 0.0, %v1436
    %v1438 = vpop.f32.mrb[0].mxu0
    %1439 = vdwg.mxu0
    %s1440 = smul.u32 4, 3
    %s1441 = smul.addr %s1440, 8
    %s1442 = scalar_lea.vmem [#allocation3], %s1441
    %v1443 = vld [vmem:[%s1442] sm:$0xff]
    %v1444 = vadd.f32 %v1443, %v1437
    %v1445 = vxor.u32 %v1444, 2147483648
    %v1446 = vmul.f32 %v1445, 1.442695
    %v1447 = vpow.pop %v1446
    %v1448 = vadd.f32 %v1447, 1.0
    %v1449 = vrcp.pop %v1448
    %v1450 = vmul.f32 1.0, %v1449
    %1451 = vmatprep.subr.mxu0 0.0
    %1452 = vmatpush1.msra.mxu0 %v475
    %1453 = vmatprep.subr.mxu0 0.0
    %1454 = vmatpush1.msra.mxu0 %v476
    %1455 = vmatprep.subr.mxu0 0.0
    %1456 = vmatpush1.msra.mxu0 %v477
    %1457 = vmatprep.subr.mxu0 0.0
    %1458 = vmatpush1.msra.mxu0 %v478
    %1459 = vmatprep.subr.mxu0 0.0
    %1460 = vmatpush1.msra.mxu0 %v479
    %1461 = vmatprep.subr.mxu0 0.0
    %1462 = vmatpush1.msra.mxu0 %v480
    %1463 = vmatprep.subr.mxu0 0.0
    %1464 = vmatpush1.msra.mxu0 %v481
    %1465 = vmatprep.subr.mxu0 0.0
    %1466 = vmatpush1.msra.mxu0 %v482
    %1467 = vmatprep.subr.mxu0 0.0
    %1468 = vmatpush1.msra.mxu0 %v483
    %1469 = vmatprep.subr.mxu0 0.0
    %1470 = vmatpush1.msra.mxu0 %v484
    %1471 = vmatprep.subr.mxu0 0.0
    %1472 = vmatpush1.msra.mxu0 %v485
    %1473 = vmatprep.subr.mxu0 0.0
    %1474 = vmatpush1.msra.mxu0 %v486
    %1475 = vmatprep.subr.mxu0 0.0
    %1476 = vmatpush1.msra.mxu0 %v487
    %1477 = vmatprep.subr.mxu0 0.0
    %1478 = vmatpush1.msra.mxu0 %v488
    %1479 = vmatprep.subr.mxu0 0.0
    %1480 = vmatpush1.msra.mxu0 %v489
    %1481 = vmatprep.subr.mxu0 0.0
    %1482 = vmatpush1.msra.mxu0 %v490
    %1483 = vmatprep.subr.mxu0 0.0
    %1484 = vmatpush1.msra.mxu0 0.0
    %1485 = vmatprep.subr.mxu0 0.0
    %1486 = vmatpush1.msra.mxu0 0.0
    %1487 = vmatprep.subr.mxu0 0.0
    %1488 = vmatpush1.msra.mxu0 0.0
    %1489 = vmatprep.subr.mxu0 0.0
    %1490 = vmatpush1.msra.mxu0 0.0
    %1491 = vmatprep.subr.mxu0 0.0
    %1492 = vmatpush1.msra.mxu0 0.0
    %1493 = vmatprep.subr.mxu0 0.0
    %1494 = vmatpush1.msra.mxu0 0.0
    %1495 = vmatprep.subr.mxu0 0.0
    %1496 = vmatpush1.msra.mxu0 0.0
    %1497 = vmatprep.subr.mxu0 0.0
    %1498 = vmatpush1.msra.mxu0 0.0
    %1499 = vmatprep.subr.mxu0 0.0
    %1500 = vmatpush1.msra.mxu0 0.0
    %1501 = vmatprep.subr.mxu0 0.0
    %1502 = vmatpush1.msra.mxu0 0.0
    %1503 = vmatprep.subr.mxu0 0.0
    %1504 = vmatpush1.msra.mxu0 0.0
    %1505 = vmatprep.subr.mxu0 0.0
    %1506 = vmatpush1.msra.mxu0 0.0
    %1507 = vmatprep.subr.mxu0 0.0
    %1508 = vmatpush1.msra.mxu0 0.0
    %1509 = vmatprep.subr.mxu0 0.0
    %1510 = vmatpush1.msra.mxu0 0.0
    %1511 = vmatprep.subr.mxu0 0.0
    %1512 = vmatpush1.msra.mxu0 0.0
    %1513 = vmatprep.subr.mxu0 0.0
    %1514 = vmatpush1.msra.mxu0 0.0
    %1515 = vmatprep.mubr.f32.mxu0 0.0
    %1516 = vmatmul.mubr.f32.gmra.mrb[0].mxu0 %v1369
    %v1517 = vpop.f32.mrb[0].mxu0
    %v1518 = vadd.f32 0.0, %v1517
    %v1519 = vpop.f32.mrb[0].mxu0
    %1520 = vdwg.mxu0
    %v1521 = vld [vmem:[%s1442 + $0x8] sm:$0xff]
    %v1522 = vadd.f32 %v1521, %v1518
    %v1523 = vxor.u32 %v1522, 2147483648
    %v1524 = vmul.f32 %v1523, 1.442695
    %v1525 = vpow.pop %v1524
    %v1526 = vadd.f32 %v1525, 1.0
    %v1527 = vrcp.pop %v1526
    %v1528 = vmul.f32 1.0, %v1527
    %v1529 = vld [vmem:[%s1442 + $0x10] sm:$0xff]
    %1530 = vmatprep.subr.mxu0 0.0
    %1531 = vmatpush1.msra.mxu0 %v569
    %1532 = vmatprep.subr.mxu0 0.0
    %1533 = vmatpush1.msra.mxu0 %v570
    %1534 = vmatprep.subr.mxu0 0.0
    %1535 = vmatpush1.msra.mxu0 %v571
    %1536 = vmatprep.subr.mxu0 0.0
    %1537 = vmatpush1.msra.mxu0 %v572
    %1538 = vmatprep.subr.mxu0 0.0
    %1539 = vmatpush1.msra.mxu0 %v573
    %1540 = vmatprep.subr.mxu0 0.0
    %1541 = vmatpush1.msra.mxu0 %v574
    %1542 = vmatprep.subr.mxu0 0.0
    %1543 = vmatpush1.msra.mxu0 %v575
    %1544 = vmatprep.subr.mxu0 0.0
    %1545 = vmatpush1.msra.mxu0 %v576
    %1546 = vmatprep.subr.mxu0 0.0
    %1547 = vmatpush1.msra.mxu0 %v577
    %1548 = vmatprep.subr.mxu0 0.0
    %1549 = vmatpush1.msra.mxu0 %v578
    %1550 = vmatprep.subr.mxu0 0.0
    %1551 = vmatpush1.msra.mxu0 %v579
    %1552 = vmatprep.subr.mxu0 0.0
    %1553 = vmatpush1.msra.mxu0 %v580
    %1554 = vmatprep.subr.mxu0 0.0
    %1555 = vmatpush1.msra.mxu0 %v581
    %1556 = vmatprep.subr.mxu0 0.0
    %1557 = vmatpush1.msra.mxu0 %v582
    %1558 = vmatprep.subr.mxu0 0.0
    %1559 = vmatpush1.msra.mxu0 %v583
    %1560 = vmatprep.subr.mxu0 0.0
    %1561 = vmatpush1.msra.mxu0 %v584
    %1562 = vmatprep.subr.mxu0 0.0
    %1563 = vmatpush1.msra.mxu0 0.0
    %1564 = vmatprep.subr.mxu0 0.0
    %1565 = vmatpush1.msra.mxu0 0.0
    %1566 = vmatprep.subr.mxu0 0.0
    %1567 = vmatpush1.msra.mxu0 0.0
    %1568 = vmatprep.subr.mxu0 0.0
    %1569 = vmatpush1.msra.mxu0 0.0
    %1570 = vmatprep.subr.mxu0 0.0
    %1571 = vmatpush1.msra.mxu0 0.0
    %1572 = vmatprep.subr.mxu0 0.0
    %1573 = vmatpush1.msra.mxu0 0.0
    %1574 = vmatprep.subr.mxu0 0.0
    %1575 = vmatpush1.msra.mxu0 0.0
    %1576 = vmatprep.subr.mxu0 0.0
    %1577 = vmatpush1.msra.mxu0 0.0
    %1578 = vmatprep.subr.mxu0 0.0
    %1579 = vmatpush1.msra.mxu0 0.0
    %1580 = vmatprep.subr.mxu0 0.0
    %1581 = vmatpush1.msra.mxu0 0.0
    %1582 = vmatprep.subr.mxu0 0.0
    %1583 = vmatpush1.msra.mxu0 0.0
    %1584 = vmatprep.subr.mxu0 0.0
    %1585 = vmatpush1.msra.mxu0 0.0
    %1586 = vmatprep.subr.mxu0 0.0
    %1587 = vmatpush1.msra.mxu0 0.0
    %1588 = vmatprep.subr.mxu0 0.0
    %1589 = vmatpush1.msra.mxu0 0.0
    %1590 = vmatprep.subr.mxu0 0.0
    %1591 = vmatpush1.msra.mxu0 0.0
    %1592 = vmatprep.subr.mxu0 0.0
    %1593 = vmatpush1.msra.mxu0 0.0
    %1594 = vmatprep.mubr.f32.mxu0 0.0
    %1595 = vmatmul.mubr.f32.gmra.mrb[0].mxu0 %v1369
    %v1596 = vpop.f32.mrb[0].mxu0
    %v1597 = vadd.f32 %v375, %v1596
    %v1598 = vpop.f32.mrb[0].mxu0
    %1599 = vdwg.mxu0
    %v1600 = vmul.f32 %v1450, %v1597
    %v1601 = vadd.f32 %v1529, %v1600
    %v1602 = vtanh.pop %v1601
    %v1603 = vsub.f32 %v1369, %v1602
    %v1604 = vmul.f32 %v1528, %v1603
    %v1605 = vadd.f32 %v1602, %v1604
    %1606 = vmatprep.subr.mxu0 0.0
    %1607 = vmatpush1.msra.mxu0 %v378
    %1608 = vmatprep.subr.mxu0 0.0
    %1609 = vmatpush1.msra.mxu0 %v379
    %1610 = vmatprep.subr.mxu0 0.0
    %1611 = vmatpush1.msra.mxu0 %v380
    %1612 = vmatprep.subr.mxu0 0.0
    %1613 = vmatpush1.msra.mxu0 %v381
    %1614 = vmatprep.subr.mxu0 0.0
    %1615 = vmatpush1.msra.mxu0 %v382
    %1616 = vmatprep.subr.mxu0 0.0
    %1617 = vmatpush1.msra.mxu0 %v383
    %1618 = vmatprep.subr.mxu0 0.0
    %1619 = vmatpush1.msra.mxu0 %v384
    %1620 = vmatprep.subr.mxu0 0.0
    %1621 = vmatpush1.msra.mxu0 %v385
    %1622 = vmatprep.subr.mxu0 0.0
    %1623 = vmatpush1.msra.mxu0 %v386
    %1624 = vmatprep.subr.mxu0 0.0
    %1625 = vmatpush1.msra.mxu0 %v387
    %1626 = vmatprep.subr.mxu0 0.0
    %1627 = vmatpush1.msra.mxu0 %v388
    %1628 = vmatprep.subr.mxu0 0.0
    %1629 = vmatpush1.msra.mxu0 %v389
    %1630 = vmatprep.subr.mxu0 0.0
    %1631 = vmatpush1.msra.mxu0 %v390
    %1632 = vmatprep.subr.mxu0 0.0
    %1633 = vmatpush1.msra.mxu0 %v391
    %1634 = vmatprep.subr.mxu0 0.0
    %1635 = vmatpush1.msra.mxu0 %v392
    %1636 = vmatprep.subr.mxu0 0.0
    %1637 = vmatpush1.msra.mxu0 %v393
    %1638 = vmatprep.subr.mxu0 0.0
    %1639 = vmatpush1.msra.mxu0 0.0
    %1640 = vmatprep.subr.mxu0 0.0
    %1641 = vmatpush1.msra.mxu0 0.0
    %1642 = vmatprep.subr.mxu0 0.0
    %1643 = vmatpush1.msra.mxu0 0.0
    %1644 = vmatprep.subr.mxu0 0.0
    %1645 = vmatpush1.msra.mxu0 0.0
    %1646 = vmatprep.subr.mxu0 0.0
    %1647 = vmatpush1.msra.mxu0 0.0
    %1648 = vmatprep.subr.mxu0 0.0
    %1649 = vmatpush1.msra.mxu0 0.0
    %1650 = vmatprep.subr.mxu0 0.0
    %1651 = vmatpush1.msra.mxu0 0.0
    %1652 = vmatprep.subr.mxu0 0.0
    %1653 = vmatpush1.msra.mxu0 0.0
    %1654 = vmatprep.subr.mxu0 0.0
    %1655 = vmatpush1.msra.mxu0 0.0
    %1656 = vmatprep.subr.mxu0 0.0
    %1657 = vmatpush1.msra.mxu0 0.0
    %1658 = vmatprep.subr.mxu0 0.0
    %1659 = vmatpush1.msra.mxu0 0.0
    %1660 = vmatprep.subr.mxu0 0.0
    %1661 = vmatpush1.msra.mxu0 0.0
    %1662 = vmatprep.subr.mxu0 0.0
    %1663 = vmatpush1.msra.mxu0 0.0
    %1664 = vmatprep.subr.mxu0 0.0
    %1665 = vmatpush1.msra.mxu0 0.0
    %1666 = vmatprep.subr.mxu0 0.0
    %1667 = vmatpush1.msra.mxu0 0.0
    %1668 = vmatprep.subr.mxu0 0.0
    %1669 = vmatpush1.msra.mxu0 0.0
    %1670 = vmatprep.mubr.f32.mxu0 0.0
    %1671 = vmatmul.mubr.f32.gmra.mrb[0].mxu0 %v1605
    %v1672 = vpop.f32.mrb[0].mxu0
    %v1673 = vadd.f32 0.0, %v1672
    %v1674 = vpop.f32.mrb[0].mxu0
    %1675 = vdwg.mxu0
    %s1676 = smul.u32 5, 3
    %s1677 = smul.addr %s1676, 8
    %s1678 = scalar_lea.vmem [#allocation3], %s1677
    %v1679 = vld [vmem:[%s1678] sm:$0xff]
    %v1680 = vadd.f32 %v1679, %v1673
    %v1681 = vxor.u32 %v1680, 2147483648
    %v1682 = vmul.f32 %v1681, 1.442695
    %v1683 = vpow.pop %v1682
    %v1684 = vadd.f32 %v1683, 1.0
    %v1685 = vrcp.pop %v1684
    %v1686 = vmul.f32 1.0, %v1685
    %1687 = vmatprep.subr.mxu0 0.0
    %1688 = vmatpush1.msra.mxu0 %v475
    %1689 = vmatprep.subr.mxu0 0.0
    %1690 = vmatpush1.msra.mxu0 %v476
    %1691 = vmatprep.subr.mxu0 0.0
    %1692 = vmatpush1.msra.mxu0 %v477
    %1693 = vmatprep.subr.mxu0 0.0
    %1694 = vmatpush1.msra.mxu0 %v478
    %1695 = vmatprep.subr.mxu0 0.0
    %1696 = vmatpush1.msra.mxu0 %v479
    %1697 = vmatprep.subr.mxu0 0.0
    %1698 = vmatpush1.msra.mxu0 %v480
    %1699 = vmatprep.subr.mxu0 0.0
    %1700 = vmatpush1.msra.mxu0 %v481
    %1701 = vmatprep.subr.mxu0 0.0
    %1702 = vmatpush1.msra.mxu0 %v482
    %1703 = vmatprep.subr.mxu0 0.0
    %1704 = vmatpush1.msra.mxu0 %v483
    %1705 = vmatprep.subr.mxu0 0.0
    %1706 = vmatpush1.msra.mxu0 %v484
    %1707 = vmatprep.subr.mxu0 0.0
    %1708 = vmatpush1.msra.mxu0 %v485
    %1709 = vmatprep.subr.mxu0 0.0
    %1710 = vmatpush1.msra.mxu0 %v486
    %1711 = vmatprep.subr.mxu0 0.0
    %1712 = vmatpush1.msra.mxu0 %v487
    %1713 = vmatprep.subr.mxu0 0.0
    %1714 = vmatpush1.msra.mxu0 %v488
    %1715 = vmatprep.subr.mxu0 0.0
    %1716 = vmatpush1.msra.mxu0 %v489
    %1717 = vmatprep.subr.mxu0 0.0
    %1718 = vmatpush1.msra.mxu0 %v490
    %1719 = vmatprep.subr.mxu0 0.0
    %1720 = vmatpush1.msra.mxu0 0.0
    %1721 = vmatprep.subr.mxu0 0.0
    %1722 = vmatpush1.msra.mxu0 0.0
    %1723 = vmatprep.subr.mxu0 0.0
    %1724 = vmatpush1.msra.mxu0 0.0
    %1725 = vmatprep.subr.mxu0 0.0
    %1726 = vmatpush1.msra.mxu0 0.0
    %1727 = vmatprep.subr.mxu0 0.0
    %1728 = vmatpush1.msra.mxu0 0.0
    %1729 = vmatprep.subr.mxu0 0.0
    %1730 = vmatpush1.msra.mxu0 0.0
    %1731 = vmatprep.subr.mxu0 0.0
    %1732 = vmatpush1.msra.mxu0 0.0
    %1733 = vmatprep.subr.mxu0 0.0
    %1734 = vmatpush1.msra.mxu0 0.0
    %1735 = vmatprep.subr.mxu0 0.0
    %1736 = vmatpush1.msra.mxu0 0.0
    %1737 = vmatprep.subr.mxu0 0.0
    %1738 = vmatpush1.msra.mxu0 0.0
    %1739 = vmatprep.subr.mxu0 0.0
    %1740 = vmatpush1.msra.mxu0 0.0
    %1741 = vmatprep.subr.mxu0 0.0
    %1742 = vmatpush1.msra.mxu0 0.0
    %1743 = vmatprep.subr.mxu0 0.0
    %1744 = vmatpush1.msra.mxu0 0.0
    %1745 = vmatprep.subr.mxu0 0.0
    %1746 = vmatpush1.msra.mxu0 0.0
    %1747 = vmatprep.subr.mxu0 0.0
    %1748 = vmatpush1.msra.mxu0 0.0
    %1749 = vmatprep.subr.mxu0 0.0
    %1750 = vmatpush1.msra.mxu0 0.0
    %1751 = vmatprep.mubr.f32.mxu0 0.0
    %1752 = vmatmul.mubr.f32.gmra.mrb[0].mxu0 %v1605
    %v1753 = vpop.f32.mrb[0].mxu0
    %v1754 = vadd.f32 0.0, %v1753
    %v1755 = vpop.f32.mrb[0].mxu0
    %1756 = vdwg.mxu0
    %v1757 = vld [vmem:[%s1678 + $0x8] sm:$0xff]
    %v1758 = vadd.f32 %v1757, %v1754
    %v1759 = vxor.u32 %v1758, 2147483648
    %v1760 = vmul.f32 %v1759, 1.442695
    %v1761 = vpow.pop %v1760
    %v1762 = vadd.f32 %v1761, 1.0
    %v1763 = vrcp.pop %v1762
    %v1764 = vmul.f32 1.0, %v1763
    %v1765 = vld [vmem:[%s1678 + $0x10] sm:$0xff]
    %1766 = vmatprep.subr.mxu0 0.0
    %1767 = vmatpush1.msra.mxu0 %v569
    %1768 = vmatprep.subr.mxu0 0.0
    %1769 = vmatpush1.msra.mxu0 %v570
    %1770 = vmatprep.subr.mxu0 0.0
    %1771 = vmatpush1.msra.mxu0 %v571
    %1772 = vmatprep.subr.mxu0 0.0
    %1773 = vmatpush1.msra.mxu0 %v572
    %1774 = vmatprep.subr.mxu0 0.0
    %1775 = vmatpush1.msra.mxu0 %v573
    %1776 = vmatprep.subr.mxu0 0.0
    %1777 = vmatpush1.msra.mxu0 %v574
    %1778 = vmatprep.subr.mxu0 0.0
    %1779 = vmatpush1.msra.mxu0 %v575
    %1780 = vmatprep.subr.mxu0 0.0
    %1781 = vmatpush1.msra.mxu0 %v576
    %1782 = vmatprep.subr.mxu0 0.0
    %1783 = vmatpush1.msra.mxu0 %v577
    %1784 = vmatprep.subr.mxu0 0.0
    %1785 = vmatpush1.msra.mxu0 %v578
    %1786 = vmatprep.subr.mxu0 0.0
    %1787 = vmatpush1.msra.mxu0 %v579
    %1788 = vmatprep.subr.mxu0 0.0
    %1789 = vmatpush1.msra.mxu0 %v580
    %1790 = vmatprep.subr.mxu0 0.0
    %1791 = vmatpush1.msra.mxu0 %v581
    %1792 = vmatprep.subr.mxu0 0.0
    %1793 = vmatpush1.msra.mxu0 %v582
    %1794 = vmatprep.subr.mxu0 0.0
    %1795 = vmatpush1.msra.mxu0 %v583
    %1796 = vmatprep.subr.mxu0 0.0
    %1797 = vmatpush1.msra.mxu0 %v584
    %1798 = vmatprep.subr.mxu0 0.0
    %1799 = vmatpush1.msra.mxu0 0.0
    %1800 = vmatprep.subr.mxu0 0.0
    %1801 = vmatpush1.msra.mxu0 0.0
    %1802 = vmatprep.subr.mxu0 0.0
    %1803 = vmatpush1.msra.mxu0 0.0
    %1804 = vmatprep.subr.mxu0 0.0
    %1805 = vmatpush1.msra.mxu0 0.0
    %1806 = vmatprep.subr.mxu0 0.0
    %1807 = vmatpush1.msra.mxu0 0.0
    %1808 = vmatprep.subr.mxu0 0.0
    %1809 = vmatpush1.msra.mxu0 0.0
    %1810 = vmatprep.subr.mxu0 0.0
    %1811 = vmatpush1.msra.mxu0 0.0
    %1812 = vmatprep.subr.mxu0 0.0
    %1813 = vmatpush1.msra.mxu0 0.0
    %1814 = vmatprep.subr.mxu0 0.0
    %1815 = vmatpush1.msra.mxu0 0.0
    %1816 = vmatprep.subr.mxu0 0.0
    %1817 = vmatpush1.msra.mxu0 0.0
    %1818 = vmatprep.subr.mxu0 0.0
    %1819 = vmatpush1.msra.mxu0 0.0
    %1820 = vmatprep.subr.mxu0 0.0
    %1821 = vmatpush1.msra.mxu0 0.0
    %1822 = vmatprep.subr.mxu0 0.0
    %1823 = vmatpush1.msra.mxu0 0.0
    %1824 = vmatprep.subr.mxu0 0.0
    %1825 = vmatpush1.msra.mxu0 0.0
    %1826 = vmatprep.subr.mxu0 0.0
    %1827 = vmatpush1.msra.mxu0 0.0
    %1828 = vmatprep.subr.mxu0 0.0
    %1829 = vmatpush1.msra.mxu0 0.0
    %1830 = vmatprep.mubr.f32.mxu0 0.0
    %1831 = vmatmul.mubr.f32.gmra.mrb[0].mxu0 %v1605
    %v1832 = vpop.f32.mrb[0].mxu0
    %v1833 = vadd.f32 %v375, %v1832
    %v1834 = vpop.f32.mrb[0].mxu0
    %1835 = vdwg.mxu0
    %v1836 = vmul.f32 %v1686, %v1833
    %v1837 = vadd.f32 %v1765, %v1836
    %v1838 = vtanh.pop %v1837
    %v1839 = vsub.f32 %v1605, %v1838
    %v1840 = vmul.f32 %v1764, %v1839
    %v1841 = vadd.f32 %v1838, %v1840
    %1842 = vmatprep.subr.mxu0 0.0
    %1843 = vmatpush1.msra.mxu0 %v378
    %1844 = vmatprep.subr.mxu0 0.0
    %1845 = vmatpush1.msra.mxu0 %v379
    %1846 = vmatprep.subr.mxu0 0.0
    %1847 = vmatpush1.msra.mxu0 %v380
    %1848 = vmatprep.subr.mxu0 0.0
    %1849 = vmatpush1.msra.mxu0 %v381
    %1850 = vmatprep.subr.mxu0 0.0
    %1851 = vmatpush1.msra.mxu0 %v382
    %1852 = vmatprep.subr.mxu0 0.0
    %1853 = vmatpush1.msra.mxu0 %v383
    %1854 = vmatprep.subr.mxu0 0.0
    %1855 = vmatpush1.msra.mxu0 %v384
    %1856 = vmatprep.subr.mxu0 0.0
    %1857 = vmatpush1.msra.mxu0 %v385
    %1858 = vmatprep.subr.mxu0 0.0
    %1859 = vmatpush1.msra.mxu0 %v386
    %1860 = vmatprep.subr.mxu0 0.0
    %1861 = vmatpush1.msra.mxu0 %v387
    %1862 = vmatprep.subr.mxu0 0.0
    %1863 = vmatpush1.msra.mxu0 %v388
    %1864 = vmatprep.subr.mxu0 0.0
    %1865 = vmatpush1.msra.mxu0 %v389
    %1866 = vmatprep.subr.mxu0 0.0
    %1867 = vmatpush1.msra.mxu0 %v390
    %1868 = vmatprep.subr.mxu0 0.0
    %1869 = vmatpush1.msra.mxu0 %v391
    %1870 = vmatprep.subr.mxu0 0.0
    %1871 = vmatpush1.msra.mxu0 %v392
    %1872 = vmatprep.subr.mxu0 0.0
    %1873 = vmatpush1.msra.mxu0 %v393
    %1874 = vmatprep.subr.mxu0 0.0
    %1875 = vmatpush1.msra.mxu0 0.0
    %1876 = vmatprep.subr.mxu0 0.0
    %1877 = vmatpush1.msra.mxu0 0.0
    %1878 = vmatprep.subr.mxu0 0.0
    %1879 = vmatpush1.msra.mxu0 0.0
    %1880 = vmatprep.subr.mxu0 0.0
    %1881 = vmatpush1.msra.mxu0 0.0
    %1882 = vmatprep.subr.mxu0 0.0
    %1883 = vmatpush1.msra.mxu0 0.0
    %1884 = vmatprep.subr.mxu0 0.0
    %1885 = vmatpush1.msra.mxu0 0.0
    %1886 = vmatprep.subr.mxu0 0.0
    %1887 = vmatpush1.msra.mxu0 0.0
    %1888 = vmatprep.subr.mxu0 0.0
    %1889 = vmatpush1.msra.mxu0 0.0
    %1890 = vmatprep.subr.mxu0 0.0
    %1891 = vmatpush1.msra.mxu0 0.0
    %1892 = vmatprep.subr.mxu0 0.0
    %1893 = vmatpush1.msra.mxu0 0.0
    %1894 = vmatprep.subr.mxu0 0.0
    %1895 = vmatpush1.msra.mxu0 0.0
    %1896 = vmatprep.subr.mxu0 0.0
    %1897 = vmatpush1.msra.mxu0 0.0
    %1898 = vmatprep.subr.mxu0 0.0
    %1899 = vmatpush1.msra.mxu0 0.0
    %1900 = vmatprep.subr.mxu0 0.0
    %1901 = vmatpush1.msra.mxu0 0.0
    %1902 = vmatprep.subr.mxu0 0.0
    %1903 = vmatpush1.msra.mxu0 0.0
    %1904 = vmatprep.subr.mxu0 0.0
    %1905 = vmatpush1.msra.mxu0 0.0
    %1906 = vmatprep.mubr.f32.mxu0 0.0
    %1907 = vmatmul.mubr.f32.gmra.mrb[0].mxu0 %v1841
    %v1908 = vpop.f32.mrb[0].mxu0
    %v1909 = vadd.f32 0.0, %v1908
    %v1910 = vpop.f32.mrb[0].mxu0
    %1911 = vdwg.mxu0
    %s1912 = smul.u32 6, 3
    %s1913 = smul.addr %s1912, 8
    %s1914 = scalar_lea.vmem [#allocation3], %s1913
    %v1915 = vld [vmem:[%s1914] sm:$0xff]
    %v1916 = vadd.f32 %v1915, %v1909
    %v1917 = vxor.u32 %v1916, 2147483648
    %v1918 = vmul.f32 %v1917, 1.442695
    %v1919 = vpow.pop %v1918
    %v1920 = vadd.f32 %v1919, 1.0
    %v1921 = vrcp.pop %v1920
    %v1922 = vmul.f32 1.0, %v1921
    %1923 = vmatprep.subr.mxu0 0.0
    %1924 = vmatpush1.msra.mxu0 %v475
    %1925 = vmatprep.subr.mxu0 0.0
    %1926 = vmatpush1.msra.mxu0 %v476
    %1927 = vmatprep.subr.mxu0 0.0
    %1928 = vmatpush1.msra.mxu0 %v477
    %1929 = vmatprep.subr.mxu0 0.0
    %1930 = vmatpush1.msra.mxu0 %v478
    %1931 = vmatprep.subr.mxu0 0.0
    %1932 = vmatpush1.msra.mxu0 %v479
    %1933 = vmatprep.subr.mxu0 0.0
    %1934 = vmatpush1.msra.mxu0 %v480
    %1935 = vmatprep.subr.mxu0 0.0
    %1936 = vmatpush1.msra.mxu0 %v481
    %1937 = vmatprep.subr.mxu0 0.0
    %1938 = vmatpush1.msra.mxu0 %v482
    %1939 = vmatprep.subr.mxu0 0.0
    %1940 = vmatpush1.msra.mxu0 %v483
    %1941 = vmatprep.subr.mxu0 0.0
    %1942 = vmatpush1.msra.mxu0 %v484
    %1943 = vmatprep.subr.mxu0 0.0
    %1944 = vmatpush1.msra.mxu0 %v485
    %1945 = vmatprep.subr.mxu0 0.0
    %1946 = vmatpush1.msra.mxu0 %v486
    %1947 = vmatprep.subr.mxu0 0.0
    %1948 = vmatpush1.msra.mxu0 %v487
    %1949 = vmatprep.subr.mxu0 0.0
    %1950 = vmatpush1.msra.mxu0 %v488
    %1951 = vmatprep.subr.mxu0 0.0
    %1952 = vmatpush1.msra.mxu0 %v489
    %1953 = vmatprep.subr.mxu0 0.0
    %1954 = vmatpush1.msra.mxu0 %v490
    %1955 = vmatprep.subr.mxu0 0.0
    %1956 = vmatpush1.msra.mxu0 0.0
    %1957 = vmatprep.subr.mxu0 0.0
    %1958 = vmatpush1.msra.mxu0 0.0
    %1959 = vmatprep.subr.mxu0 0.0
    %1960 = vmatpush1.msra.mxu0 0.0
    %1961 = vmatprep.subr.mxu0 0.0
    %1962 = vmatpush1.msra.mxu0 0.0
    %1963 = vmatprep.subr.mxu0 0.0
    %1964 = vmatpush1.msra.mxu0 0.0
    %1965 = vmatprep.subr.mxu0 0.0
    %1966 = vmatpush1.msra.mxu0 0.0
    %1967 = vmatprep.subr.mxu0 0.0
    %1968 = vmatpush1.msra.mxu0 0.0
    %1969 = vmatprep.subr.mxu0 0.0
    %1970 = vmatpush1.msra.mxu0 0.0
    %1971 = vmatprep.subr.mxu0 0.0
    %1972 = vmatpush1.msra.mxu0 0.0
    %1973 = vmatprep.subr.mxu0 0.0
    %1974 = vmatpush1.msra.mxu0 0.0
    %1975 = vmatprep.subr.mxu0 0.0
    %1976 = vmatpush1.msra.mxu0 0.0
    %1977 = vmatprep.subr.mxu0 0.0
    %1978 = vmatpush1.msra.mxu0 0.0
    %1979 = vmatprep.subr.mxu0 0.0
    %1980 = vmatpush1.msra.mxu0 0.0
    %1981 = vmatprep.subr.mxu0 0.0
    %1982 = vmatpush1.msra.mxu0 0.0
    %1983 = vmatprep.subr.mxu0 0.0
    %1984 = vmatpush1.msra.mxu0 0.0
    %1985 = vmatprep.subr.mxu0 0.0
    %1986 = vmatpush1.msra.mxu0 0.0
    %1987 = vmatprep.mubr.f32.mxu0 0.0
    %1988 = vmatmul.mubr.f32.gmra.mrb[0].mxu0 %v1841
    %v1989 = vpop.f32.mrb[0].mxu0
    %v1990 = vadd.f32 0.0, %v1989
    %v1991 = vpop.f32.mrb[0].mxu0
    %1992 = vdwg.mxu0
    %v1993 = vld [vmem:[%s1914 + $0x8] sm:$0xff]
    %v1994 = vadd.f32 %v1993, %v1990
    %v1995 = vxor.u32 %v1994, 2147483648
    %v1996 = vmul.f32 %v1995, 1.442695
    %v1997 = vpow.pop %v1996
    %v1998 = vadd.f32 %v1997, 1.0
    %v1999 = vrcp.pop %v1998
    %v2000 = vmul.f32 1.0, %v1999
    %v2001 = vld [vmem:[%s1914 + $0x10] sm:$0xff]
    %2002 = vmatprep.subr.mxu0 0.0
    %2003 = vmatpush1.msra.mxu0 %v569
    %2004 = vmatprep.subr.mxu0 0.0
    %2005 = vmatpush1.msra.mxu0 %v570
    %2006 = vmatprep.subr.mxu0 0.0
    %2007 = vmatpush1.msra.mxu0 %v571
    %2008 = vmatprep.subr.mxu0 0.0
    %2009 = vmatpush1.msra.mxu0 %v572
    %2010 = vmatprep.subr.mxu0 0.0
    %2011 = vmatpush1.msra.mxu0 %v573
    %2012 = vmatprep.subr.mxu0 0.0
    %2013 = vmatpush1.msra.mxu0 %v574
    %2014 = vmatprep.subr.mxu0 0.0
    %2015 = vmatpush1.msra.mxu0 %v575
    %2016 = vmatprep.subr.mxu0 0.0
    %2017 = vmatpush1.msra.mxu0 %v576
    %2018 = vmatprep.subr.mxu0 0.0
    %2019 = vmatpush1.msra.mxu0 %v577
    %2020 = vmatprep.subr.mxu0 0.0
    %2021 = vmatpush1.msra.mxu0 %v578
    %2022 = vmatprep.subr.mxu0 0.0
    %2023 = vmatpush1.msra.mxu0 %v579
    %2024 = vmatprep.subr.mxu0 0.0
    %2025 = vmatpush1.msra.mxu0 %v580
    %2026 = vmatprep.subr.mxu0 0.0
    %2027 = vmatpush1.msra.mxu0 %v581
    %2028 = vmatprep.subr.mxu0 0.0
    %2029 = vmatpush1.msra.mxu0 %v582
    %2030 = vmatprep.subr.mxu0 0.0
    %2031 = vmatpush1.msra.mxu0 %v583
    %2032 = vmatprep.subr.mxu0 0.0
    %2033 = vmatpush1.msra.mxu0 %v584
    %2034 = vmatprep.subr.mxu0 0.0
    %2035 = vmatpush1.msra.mxu0 0.0
    %2036 = vmatprep.subr.mxu0 0.0
    %2037 = vmatpush1.msra.mxu0 0.0
    %2038 = vmatprep.subr.mxu0 0.0
    %2039 = vmatpush1.msra.mxu0 0.0
    %2040 = vmatprep.subr.mxu0 0.0
    %2041 = vmatpush1.msra.mxu0 0.0
    %2042 = vmatprep.subr.mxu0 0.0
    %2043 = vmatpush1.msra.mxu0 0.0
    %2044 = vmatprep.subr.mxu0 0.0
    %2045 = vmatpush1.msra.mxu0 0.0
    %2046 = vmatprep.subr.mxu0 0.0
    %2047 = vmatpush1.msra.mxu0 0.0
    %2048 = vmatprep.subr.mxu0 0.0
    %2049 = vmatpush1.msra.mxu0 0.0
    %2050 = vmatprep.subr.mxu0 0.0
    %2051 = vmatpush1.msra.mxu0 0.0
    %2052 = vmatprep.subr.mxu0 0.0
    %2053 = vmatpush1.msra.mxu0 0.0
    %2054 = vmatprep.subr.mxu0 0.0
    %2055 = vmatpush1.msra.mxu0 0.0
    %2056 = vmatprep.subr.mxu0 0.0
    %2057 = vmatpush1.msra.mxu0 0.0
    %2058 = vmatprep.subr.mxu0 0.0
    %2059 = vmatpush1.msra.mxu0 0.0
    %2060 = vmatprep.subr.mxu0 0.0
    %2061 = vmatpush1.msra.mxu0 0.0
    %2062 = vmatprep.subr.mxu0 0.0
    %2063 = vmatpush1.msra.mxu0 0.0
    %2064 = vmatprep.subr.mxu0 0.0
    %2065 = vmatpush1.msra.mxu0 0.0
    %2066 = vmatprep.mubr.f32.mxu0 0.0
    %2067 = vmatmul.mubr.f32.gmra.mrb[0].mxu0 %v1841
    %v2068 = vpop.f32.mrb[0].mxu0
    %v2069 = vadd.f32 %v375, %v2068
    %v2070 = vpop.f32.mrb[0].mxu0
    %2071 = vdwg.mxu0
    %v2072 = vmul.f32 %v1922, %v2069
    %v2073 = vadd.f32 %v2001, %v2072
    %v2074 = vtanh.pop %v2073
    %v2075 = vsub.f32 %v1841, %v2074
    %v2076 = vmul.f32 %v2000, %v2075
    %v2077 = vadd.f32 %v2074, %v2076
    %2078 = vmatprep.subr.mxu0 0.0
    %2079 = vmatpush1.msra.mxu0 %v378
    %2080 = vmatprep.subr.mxu0 0.0
    %2081 = vmatpush1.msra.mxu0 %v379
    %2082 = vmatprep.subr.mxu0 0.0
    %2083 = vmatpush1.msra.mxu0 %v380
    %2084 = vmatprep.subr.mxu0 0.0
    %2085 = vmatpush1.msra.mxu0 %v381
    %2086 = vmatprep.subr.mxu0 0.0
    %2087 = vmatpush1.msra.mxu0 %v382
    %2088 = vmatprep.subr.mxu0 0.0
    %2089 = vmatpush1.msra.mxu0 %v383
    %2090 = vmatprep.subr.mxu0 0.0
    %2091 = vmatpush1.msra.mxu0 %v384
    %2092 = vmatprep.subr.mxu0 0.0
    %2093 = vmatpush1.msra.mxu0 %v385
    %2094 = vmatprep.subr.mxu0 0.0
    %2095 = vmatpush1.msra.mxu0 %v386
    %2096 = vmatprep.subr.mxu0 0.0
    %2097 = vmatpush1.msra.mxu0 %v387
    %2098 = vmatprep.subr.mxu0 0.0
    %2099 = vmatpush1.msra.mxu0 %v388
    %2100 = vmatprep.subr.mxu0 0.0
    %2101 = vmatpush1.msra.mxu0 %v389
    %2102 = vmatprep.subr.mxu0 0.0
    %2103 = vmatpush1.msra.mxu0 %v390
    %2104 = vmatprep.subr.mxu0 0.0
    %2105 = vmatpush1.msra.mxu0 %v391
    %2106 = vmatprep.subr.mxu0 0.0
    %2107 = vmatpush1.msra.mxu0 %v392
    %2108 = vmatprep.subr.mxu0 0.0
    %2109 = vmatpush1.msra.mxu0 %v393
    %2110 = vmatprep.subr.mxu0 0.0
    %2111 = vmatpush1.msra.mxu0 0.0
    %2112 = vmatprep.subr.mxu0 0.0
    %2113 = vmatpush1.msra.mxu0 0.0
    %2114 = vmatprep.subr.mxu0 0.0
    %2115 = vmatpush1.msra.mxu0 0.0
    %2116 = vmatprep.subr.mxu0 0.0
    %2117 = vmatpush1.msra.mxu0 0.0
    %2118 = vmatprep.subr.mxu0 0.0
    %2119 = vmatpush1.msra.mxu0 0.0
    %2120 = vmatprep.subr.mxu0 0.0
    %2121 = vmatpush1.msra.mxu0 0.0
    %2122 = vmatprep.subr.mxu0 0.0
    %2123 = vmatpush1.msra.mxu0 0.0
    %2124 = vmatprep.subr.mxu0 0.0
    %2125 = vmatpush1.msra.mxu0 0.0
    %2126 = vmatprep.subr.mxu0 0.0
    %2127 = vmatpush1.msra.mxu0 0.0
    %2128 = vmatprep.subr.mxu0 0.0
    %2129 = vmatpush1.msra.mxu0 0.0
    %2130 = vmatprep.subr.mxu0 0.0
    %2131 = vmatpush1.msra.mxu0 0.0
    %2132 = vmatprep.subr.mxu0 0.0
    %2133 = vmatpush1.msra.mxu0 0.0
    %2134 = vmatprep.subr.mxu0 0.0
    %2135 = vmatpush1.msra.mxu0 0.0
    %2136 = vmatprep.subr.mxu0 0.0
    %2137 = vmatpush1.msra.mxu0 0.0
    %2138 = vmatprep.subr.mxu0 0.0
    %2139 = vmatpush1.msra.mxu0 0.0
    %2140 = vmatprep.subr.mxu0 0.0
    %2141 = vmatpush1.msra.mxu0 0.0
    %2142 = vmatprep.mubr.f32.mxu0 0.0
    %2143 = vmatmul.mubr.f32.gmra.mrb[0].mxu0 %v2077
    %v2144 = vpop.f32.mrb[0].mxu0
    %v2145 = vadd.f32 0.0, %v2144
    %v2146 = vpop.f32.mrb[0].mxu0
    %2147 = vdwg.mxu0
    %s2148 = smul.u32 7, 3
    %s2149 = smul.addr %s2148, 8
    %s2150 = scalar_lea.vmem [#allocation3], %s2149
    %v2151 = vld [vmem:[%s2150] sm:$0xff]
    %v2152 = vadd.f32 %v2151, %v2145
    %v2153 = vxor.u32 %v2152, 2147483648
    %v2154 = vmul.f32 %v2153, 1.442695
    %v2155 = vpow.pop %v2154
    %v2156 = vadd.f32 %v2155, 1.0
    %v2157 = vrcp.pop %v2156
    %v2158 = vmul.f32 1.0, %v2157
    %2159 = vmatprep.subr.mxu0 0.0
    %2160 = vmatpush1.msra.mxu0 %v475
    %2161 = vmatprep.subr.mxu0 0.0
    %2162 = vmatpush1.msra.mxu0 %v476
    %2163 = vmatprep.subr.mxu0 0.0
    %2164 = vmatpush1.msra.mxu0 %v477
    %2165 = vmatprep.subr.mxu0 0.0
    %2166 = vmatpush1.msra.mxu0 %v478
    %2167 = vmatprep.subr.mxu0 0.0
    %2168 = vmatpush1.msra.mxu0 %v479
    %2169 = vmatprep.subr.mxu0 0.0
    %2170 = vmatpush1.msra.mxu0 %v480
    %2171 = vmatprep.subr.mxu0 0.0
    %2172 = vmatpush1.msra.mxu0 %v481
    %2173 = vmatprep.subr.mxu0 0.0
    %2174 = vmatpush1.msra.mxu0 %v482
    %2175 = vmatprep.subr.mxu0 0.0
    %2176 = vmatpush1.msra.mxu0 %v483
    %2177 = vmatprep.subr.mxu0 0.0
    %2178 = vmatpush1.msra.mxu0 %v484
    %2179 = vmatprep.subr.mxu0 0.0
    %2180 = vmatpush1.msra.mxu0 %v485
    %2181 = vmatprep.subr.mxu0 0.0
    %2182 = vmatpush1.msra.mxu0 %v486
    %2183 = vmatprep.subr.mxu0 0.0
    %2184 = vmatpush1.msra.mxu0 %v487
    %2185 = vmatprep.subr.mxu0 0.0
    %2186 = vmatpush1.msra.mxu0 %v488
    %2187 = vmatprep.subr.mxu0 0.0
    %2188 = vmatpush1.msra.mxu0 %v489
    %2189 = vmatprep.subr.mxu0 0.0
    %2190 = vmatpush1.msra.mxu0 %v490
    %2191 = vmatprep.subr.mxu0 0.0
    %2192 = vmatpush1.msra.mxu0 0.0
    %2193 = vmatprep.subr.mxu0 0.0
    %2194 = vmatpush1.msra.mxu0 0.0
    %2195 = vmatprep.subr.mxu0 0.0
    %2196 = vmatpush1.msra.mxu0 0.0
    %2197 = vmatprep.subr.mxu0 0.0
    %2198 = vmatpush1.msra.mxu0 0.0
    %2199 = vmatprep.subr.mxu0 0.0
    %2200 = vmatpush1.msra.mxu0 0.0
    %2201 = vmatprep.subr.mxu0 0.0
    %2202 = vmatpush1.msra.mxu0 0.0
    %2203 = vmatprep.subr.mxu0 0.0
    %2204 = vmatpush1.msra.mxu0 0.0
    %2205 = vmatprep.subr.mxu0 0.0
    %2206 = vmatpush1.msra.mxu0 0.0
    %2207 = vmatprep.subr.mxu0 0.0
    %2208 = vmatpush1.msra.mxu0 0.0
    %2209 = vmatprep.subr.mxu0 0.0
    %2210 = vmatpush1.msra.mxu0 0.0
    %2211 = vmatprep.subr.mxu0 0.0
    %2212 = vmatpush1.msra.mxu0 0.0
    %2213 = vmatprep.subr.mxu0 0.0
    %2214 = vmatpush1.msra.mxu0 0.0
    %2215 = vmatprep.subr.mxu0 0.0
    %2216 = vmatpush1.msra.mxu0 0.0
    %2217 = vmatprep.subr.mxu0 0.0
    %2218 = vmatpush1.msra.mxu0 0.0
    %2219 = vmatprep.subr.mxu0 0.0
    %2220 = vmatpush1.msra.mxu0 0.0
    %2221 = vmatprep.subr.mxu0 0.0
    %2222 = vmatpush1.msra.mxu0 0.0
    %2223 = vmatprep.mubr.f32.mxu0 0.0
    %2224 = vmatmul.mubr.f32.gmra.mrb[0].mxu0 %v2077
    %v2225 = vpop.f32.mrb[0].mxu0
    %v2226 = vadd.f32 0.0, %v2225
    %v2227 = vpop.f32.mrb[0].mxu0
    %2228 = vdwg.mxu0
    %v2229 = vld [vmem:[%s2150 + $0x8] sm:$0xff]
    %v2230 = vadd.f32 %v2229, %v2226
    %v2231 = vxor.u32 %v2230, 2147483648
    %v2232 = vmul.f32 %v2231, 1.442695
    %v2233 = vpow.pop %v2232
    %v2234 = vadd.f32 %v2233, 1.0
    %v2235 = vrcp.pop %v2234
    %v2236 = vmul.f32 1.0, %v2235
    %v2237 = vld [vmem:[%s2150 + $0x10] sm:$0xff]
    %2238 = vmatprep.subr.mxu0 0.0
    %2239 = vmatpush1.msra.mxu0 %v569
    %2240 = vmatprep.subr.mxu0 0.0
    %2241 = vmatpush1.msra.mxu0 %v570
    %2242 = vmatprep.subr.mxu0 0.0
    %2243 = vmatpush1.msra.mxu0 %v571
    %2244 = vmatprep.subr.mxu0 0.0
    %2245 = vmatpush1.msra.mxu0 %v572
    %2246 = vmatprep.subr.mxu0 0.0
    %2247 = vmatpush1.msra.mxu0 %v573
    %2248 = vmatprep.subr.mxu0 0.0
    %2249 = vmatpush1.msra.mxu0 %v574
    %2250 = vmatprep.subr.mxu0 0.0
    %2251 = vmatpush1.msra.mxu0 %v575
    %2252 = vmatprep.subr.mxu0 0.0
    %2253 = vmatpush1.msra.mxu0 %v576
    %2254 = vmatprep.subr.mxu0 0.0
    %2255 = vmatpush1.msra.mxu0 %v577
    %2256 = vmatprep.subr.mxu0 0.0
    %2257 = vmatpush1.msra.mxu0 %v578
    %2258 = vmatprep.subr.mxu0 0.0
    %2259 = vmatpush1.msra.mxu0 %v579
    %2260 = vmatprep.subr.mxu0 0.0
    %2261 = vmatpush1.msra.mxu0 %v580
    %2262 = vmatprep.subr.mxu0 0.0
    %2263 = vmatpush1.msra.mxu0 %v581
    %2264 = vmatprep.subr.mxu0 0.0
    %2265 = vmatpush1.msra.mxu0 %v582
    %2266 = vmatprep.subr.mxu0 0.0
    %2267 = vmatpush1.msra.mxu0 %v583
    %2268 = vmatprep.subr.mxu0 0.0
    %2269 = vmatpush1.msra.mxu0 %v584
    %2270 = vmatprep.subr.mxu0 0.0
    %2271 = vmatpush1.msra.mxu0 0.0
    %2272 = vmatprep.subr.mxu0 0.0
    %2273 = vmatpush1.msra.mxu0 0.0
    %2274 = vmatprep.subr.mxu0 0.0
    %2275 = vmatpush1.msra.mxu0 0.0
    %2276 = vmatprep.subr.mxu0 0.0
    %2277 = vmatpush1.msra.mxu0 0.0
    %2278 = vmatprep.subr.mxu0 0.0
    %2279 = vmatpush1.msra.mxu0 0.0
    %2280 = vmatprep.subr.mxu0 0.0
    %2281 = vmatpush1.msra.mxu0 0.0
    %2282 = vmatprep.subr.mxu0 0.0
    %2283 = vmatpush1.msra.mxu0 0.0
    %2284 = vmatprep.subr.mxu0 0.0
    %2285 = vmatpush1.msra.mxu0 0.0
    %2286 = vmatprep.subr.mxu0 0.0
    %2287 = vmatpush1.msra.mxu0 0.0
    %2288 = vmatprep.subr.mxu0 0.0
    %2289 = vmatpush1.msra.mxu0 0.0
    %2290 = vmatprep.subr.mxu0 0.0
    %2291 = vmatpush1.msra.mxu0 0.0
    %2292 = vmatprep.subr.mxu0 0.0
    %2293 = vmatpush1.msra.mxu0 0.0
    %2294 = vmatprep.subr.mxu0 0.0
    %2295 = vmatpush1.msra.mxu0 0.0
    %2296 = vmatprep.subr.mxu0 0.0
    %2297 = vmatpush1.msra.mxu0 0.0
    %2298 = vmatprep.subr.mxu0 0.0
    %2299 = vmatpush1.msra.mxu0 0.0
    %2300 = vmatprep.subr.mxu0 0.0
    %2301 = vmatpush1.msra.mxu0 0.0
    %2302 = vmatprep.mubr.f32.mxu0 0.0
    %2303 = vmatmul.mubr.f32.gmra.mrb[0].mxu0 %v2077
    %v2304 = vpop.f32.mrb[0].mxu0
    %v2305 = vadd.f32 %v375, %v2304
    %v2306 = vpop.f32.mrb[0].mxu0
    %2307 = vdwg.mxu0
    %v2308 = vmul.f32 %v2158, %v2305
    %v2309 = vadd.f32 %v2237, %v2308
    %v2310 = vtanh.pop %v2309
    %v2311 = vsub.f32 %v2077, %v2310
    %v2312 = vmul.f32 %v2236, %v2311
    %v2313 = vadd.f32 %v2310, %v2312
    %2314 = vst [vmem:[#allocation2] sm:$0xff] %v2313
    // Predicated region
    $region38: #{tpu_custom_call.1} parent=1 // pred_check
      %p2315 = pneg %p74
    $region39: #{tpu_custom_call.1} parent=1 // pred_check_branch
      %2317 = sbr.rel (%p2315) target = $region41
    $region40: #{tpu_custom_call.1} parent=1 // pred_region
      %v2318 = vld [vmem:[#allocation7] sm:$0xff]
      %v2319 = vld [vmem:[#allocation7 + $0x8] sm:$0xff]
      %v2320 = vld [vmem:[#allocation7 + $0x10] sm:$0xff]
      %v2321 = vld [vmem:[#allocation7 + $0x18] sm:$0xff]
      %v2322 = vld [vmem:[#allocation7 + $0x20] sm:$0xff]
      %v2323 = vld [vmem:[#allocation7 + $0x28] sm:$0xff]
      %v2324 = vld [vmem:[#allocation7 + $0x30] sm:$0xff]
      %v2325 = vld [vmem:[#allocation7 + $0x38] sm:$0xff]
      %v2326 = vld [vmem:[#allocation7 + $0x40] sm:$0xff]
      %v2327 = vld [vmem:[#allocation7 + $0x48] sm:$0xff]
      %v2328 = vld [vmem:[#allocation7 + $0x50] sm:$0xff]
      %v2329 = vld [vmem:[#allocation7 + $0x58] sm:$0xff]
      %v2330 = vld [vmem:[#allocation7 + $0x60] sm:$0xff]
      %v2331 = vld [vmem:[#allocation7 + $0x68] sm:$0xff]
      %v2332 = vld [vmem:[#allocation7 + $0x70] sm:$0xff]
      %v2333 = vld [vmem:[#allocation7 + $0x78] sm:$0xff]
      %v2334 = vld [vmem:[%s5] sm:$0x1]
      %v2336 = vlaneseq
      %v2337 = vshrl.u32 %v2336, 7
      %v2338 = vsub.s32 0, %v2337
      %v2339 = vrot.slane %v2334, %v2338
      %2341 = vmatprep.subr.mxu0 0.0
      %2342 = vmatpush1.msra.mxu0 %v2318
      %2343 = vmatprep.subr.mxu0 0.0
      %2344 = vmatpush1.msra.mxu0 %v2319
      %2345 = vmatprep.subr.mxu0 0.0
      %2346 = vmatpush1.msra.mxu0 %v2320
      %2347 = vmatprep.subr.mxu0 0.0
      %2348 = vmatpush1.msra.mxu0 %v2321
      %2349 = vmatprep.subr.mxu0 0.0
      %2350 = vmatpush1.msra.mxu0 %v2322
      %2351 = vmatprep.subr.mxu0 0.0
      %2352 = vmatpush1.msra.mxu0 %v2323
      %2353 = vmatprep.subr.mxu0 0.0
      %2354 = vmatpush1.msra.mxu0 %v2324
      %2355 = vmatprep.subr.mxu0 0.0
      %2356 = vmatpush1.msra.mxu0 %v2325
      %2357 = vmatprep.subr.mxu0 0.0
      %2358 = vmatpush1.msra.mxu0 %v2326
      %2359 = vmatprep.subr.mxu0 0.0
      %2360 = vmatpush1.msra.mxu0 %v2327
      %2361 = vmatprep.subr.mxu0 0.0
      %2362 = vmatpush1.msra.mxu0 %v2328
      %2363 = vmatprep.subr.mxu0 0.0
      %2364 = vmatpush1.msra.mxu0 %v2329
      %2365 = vmatprep.subr.mxu0 0.0
      %2366 = vmatpush1.msra.mxu0 %v2330
      %2367 = vmatprep.subr.mxu0 0.0
      %2368 = vmatpush1.msra.mxu0 %v2331
      %2369 = vmatprep.subr.mxu0 0.0
      %2370 = vmatpush1.msra.mxu0 %v2332
      %2371 = vmatprep.subr.mxu0 0.0
      %2372 = vmatpush1.msra.mxu0 %v2333
      %2373 = vmatprep.subr.mxu0 0.0
      %2374 = vmatpush1.msra.mxu0 0.0
      %2375 = vmatprep.subr.mxu0 0.0
      %2376 = vmatpush1.msra.mxu0 0.0
      %2377 = vmatprep.subr.mxu0 0.0
      %2378 = vmatpush1.msra.mxu0 0.0
      %2379 = vmatprep.subr.mxu0 0.0
      %2380 = vmatpush1.msra.mxu0 0.0
      %2381 = vmatprep.subr.mxu0 0.0
      %2382 = vmatpush1.msra.mxu0 0.0
      %2383 = vmatprep.subr.mxu0 0.0
      %2384 = vmatpush1.msra.mxu0 0.0
      %2385 = vmatprep.subr.mxu0 0.0
      %2386 = vmatpush1.msra.mxu0 0.0
      %2387 = vmatprep.subr.mxu0 0.0
      %2388 = vmatpush1.msra.mxu0 0.0
      %2389 = vmatprep.subr.mxu0 0.0
      %2390 = vmatpush1.msra.mxu0 0.0
      %2391 = vmatprep.subr.mxu0 0.0
      %2392 = vmatpush1.msra.mxu0 0.0
      %2393 = vmatprep.subr.mxu0 0.0
      %2394 = vmatpush1.msra.mxu0 0.0
      %2395 = vmatprep.subr.mxu0 0.0
      %2396 = vmatpush1.msra.mxu0 0.0
      %2397 = vmatprep.subr.mxu0 0.0
      %2398 = vmatpush1.msra.mxu0 0.0
      %2399 = vmatprep.subr.mxu0 0.0
      %2400 = vmatpush1.msra.mxu0 0.0
      %2401 = vmatprep.subr.mxu0 0.0
      %2402 = vmatpush1.msra.mxu0 0.0
      %2403 = vmatprep.subr.mxu0 0.0
      %2404 = vmatpush1.msra.mxu0 0.0
      %2405 = vmatprep.mubr.f32.mxu0 0.0
      %2406 = vmatmul.mubr.f32.gmra.mrb[0].mxu0 %v2313
      %v2407 = vpop.f32.mrb[0].mxu0
      %v2408 = vadd.f32 %v2339, %v2407
      %v2409 = vpop.f32.mrb[0].mxu0
      %2410 = vdwg.mxu0
      %2411 = vst [vmem:[#allocation9] sm:$0xff] %v2408
    $region41: #{tpu_custom_call.1} parent=1 // pred_fallthru
      _
    // Predicated region
    $region42: #{tpu_custom_call.1} parent=1 // pred_check
      _
    $region43: #{tpu_custom_call.1} parent=1 // pred_check_branch
      %2413 = sbr.rel (0) target = $region45
    $region44: #{tpu_custom_call.1} parent=1 // pred_region
      %s2415 = ssub.s32 128, 128
      %2416 = vsyncadd [#allocation6], %s2415
      %s2418 = sshll.u32 [#allocation9], 4
      %s2419 = int_to_ptr.vmem [resolvable:$true] %s2418
      %2421 = dma.vmem_to_hbm [thread:$0]  %s2419, 128, %s6, [#allocation6]
    $region45: #{tpu_custom_call.1} parent=1 // pred_fallthru
      _
    // Predicated region
    $region46: #{tpu_custom_call.1} parent=1 // pred_check
      _
    $region47: #{tpu_custom_call.1} parent=1 // pred_check_branch
      %2423 = sbr.rel (0) target = $region49
    $region48: #{tpu_custom_call.1} parent=1 // pred_region
      %2424 = dma.done [#allocation6], 128
    $region49: #{tpu_custom_call.1} parent=1 // pred_fallthru
      _
    %2425 = vsyncpa [#allocation5], 1
    %2426 = vsyncpa [#allocation8], 1
    %2427 = vsyncpa [#allocation6], 1

</llo_original>
